<compile_context>
chip_gen: v5e
topology: v5e:2x2
jax: 0.10.0
libtpu: 0.0.40
codegen_flags: <defaults>
</compile_context>

<pallas_src>
import functools
import math

import jax
import jax.numpy as jnp
from jax.experimental import pallas as pl
from jax.experimental.pallas import tpu as pltpu

_EPS = 1e-5                    # nn.LayerNorm default
_MM_DTYPE = jnp.bfloat16       # MXU operand dtype; accumulation stays f32


# ----------------------------------------------------------------------------
# Per-generation tile preferences + tiling helpers
# ----------------------------------------------------------------------------
def _generation_prefs():
    """v5e (4x128 MXU, 16 MiB scoped default) -> smaller N/K tiles; v6e/v7x -> 512."""
    try:
        kind = jax.devices()[0].device_kind.lower()
    except Exception:
        kind = ""
    if ("v5 lite" in kind) or ("v5e" in kind) or ("v5lite" in kind):
        return {"tm": 128, "tn": 256, "tk": 256}
    return {"tm": 256, "tn": 512, "tk": 512}


_PREFS = _generation_prefs()


def _tile_rows(m, pref):
    """Second-minor (sublane) tile: multiple of 8 dividing m, <= pref (else full)."""
    if m <= 8 or m % 8 != 0:
        return m
    t = max(8, min(m, (pref // 8) * 8))
    while m % t != 0:
        t -= 8
    return t


def _tile_lanes(n, pref):
    """Minor (lane) tile: multiple of 128 dividing n, <= pref (else full dim)."""
    if n <= 128 or n % 128 != 0:
        return n
    t = max(128, min(n, (pref // 128) * 128))
    while n % t != 0:
        t -= 128
    return t


def _vmem_limit(block_bytes):
    """Scoped-VMEM limit: ~2x (double-buffered) block footprint + headroom,
    capped to v7x physical VMEM (64 MiB)."""
    return int(min(64 << 20, max(16 << 20, 2 * block_bytes + (4 << 20))))


# ----------------------------------------------------------------------------
# Kernels
# ----------------------------------------------------------------------------
def _ln_matmul_kernel(x_ref, g_ref, b_ref, w_ref, bias_ref, o_ref, xn_ref, *,
                      ln, relu):
    """o = [ReLU]( [LN](x) @ W + bias ).  The LN'd / bf16-cast x block is cached in
    VMEM scratch at j==0 and reused for every N tile (N axis is 'arbitrary')."""
    @pl.when(pl.program_id(1) == 0)
    def _():
        x = x_ref[...]
        if ln:
            mu = jnp.mean(x, axis=-1, keepdims=True)
            var = jnp.mean((x - mu) ** 2, axis=-1, keepdims=True)
            x = (x - mu) * jax.lax.rsqrt(var + _EPS) * g_ref[...] + b_ref[...]
        xn_ref[...] = x.astype(_MM_DTYPE)

    y = jnp.dot(xn_ref[...], w_ref[...], preferred_element_type=jnp.float32)
    y = y + bias_ref[...]
    if relu:
        y = jnp.maximum(y, 0.0)
    o_ref[...] = y.astype(o_ref.dtype)


def _matmul_res_kernel(x_ref, w_ref, bias_ref, res_ref, o_ref, acc_ref):
    """o = res + x @ W + bias, K tiled (trailing 'arbitrary' axis, f32 accumulator)."""
    kk = pl.program_id(2)

    @pl.when(kk == 0)
    def _():
        acc_ref[...] = jnp.zeros_like(acc_ref)

    acc_ref[...] += jnp.dot(x_ref[...].astype(_MM_DTYPE), w_ref[...],
                            preferred_element_type=jnp.float32)

    @pl.when(kk == pl.num_programs(2) - 1)
    def _():
        o_ref[...] = (acc_ref[...] + bias_ref[...] + res_ref[...]).astype(o_ref.dtype)


def _matmul_ln_res_kernel(x_ref, w_ref, bias_ref, g_ref, b_ref, res_ref, o_ref,
                          acc_ref):
    """o = res + LN(x @ W + bias).  K tiled with f32 accumulator; N stays the full
    model dim (LN needs the whole row); LN + residual in the finalize step."""
    kk = pl.program_id(1)

    @pl.when(kk == 0)
    def _():
        acc_ref[...] = jnp.zeros_like(acc_ref)

    acc_ref[...] += jnp.dot(x_ref[...].astype(_MM_DTYPE), w_ref[...],
                            preferred_element_type=jnp.float32)

    @pl.when(kk == pl.num_programs(1) - 1)
    def _():
        y = acc_ref[...] + bias_ref[...]
        mu = jnp.mean(y, axis=-1, keepdims=True)
        var = jnp.mean((y - mu) ** 2, axis=-1, keepdims=True)
        yn = (y - mu) * jax.lax.rsqrt(var + _EPS) * g_ref[...] + b_ref[...]
        o_ref[...] = (res_ref[...] + yn).astype(o_ref.dtype)


def _attn_kernel(q_ref, kv_ref, m_ref, o_ref, *, heads, dh, scale):
    """q:(tq,D) bf16, kv:(Sk,2D) bf16 packed [K|V], mask:(tq,Sk) int8 -> o:(tq,D) bf16.
    Heads stay merged along lanes; each head's context is written directly into its
    lane slice of o_ref (no concat, bounded live ranges)."""
    d = heads * dh
    keep = m_ref[...] != 0                                    # (tq, Sk) bool
    for h in range(heads):                                    # static unroll
        lo = h * dh
        qh = q_ref[:, lo:lo + dh]
        kh = kv_ref[:, lo:lo + dh]
        vh = kv_ref[:, d + lo:d + lo + dh]
        s = jax.lax.dot_general(qh, kh, (((1,), (1,)), ((), ())),
                                preferred_element_type=jnp.float32)
        s = jnp.where(keep, s * scale, -1e9)
        s = s - jnp.max(s, axis=-1, keepdims=True)
        p = jnp.exp(s)
        p = p * pl.reciprocal(jnp.sum(p, axis=-1, keepdims=True), approx=True)
        ctx = jnp.dot(p.astype(_MM_DTYPE), vh, preferred_element_type=jnp.float32)
        o_ref[:, lo:lo + dh] = ctx.astype(o_ref.dtype)


# ----------------------------------------------------------------------------
# pallas_call wrappers
# ----------------------------------------------------------------------------
def fused_ln_matmul(x2d, w, bias, gamma=None, beta=None, *, relu=False,
                    out_dtype=_MM_DTYPE):
    """[LN o] Linear [o ReLU] over an [M, K] slab; M/N tiled, K whole, bf16 output."""
    M, K = x2d.shape
    N = w.shape[1]
    ln = gamma is not None
    if gamma is None:
        gamma = jnp.ones((K,), jnp.float32)
        beta = jnp.zeros((K,), jnp.float32)
    tm = _tile_rows(M, _PREFS["tm"])
    tn = _tile_lanes(N, _PREFS["tn"])
    blk_bytes = (tm * K * x2d.dtype.itemsize + 2 * K * 4 + K * tn * 2 + tn * 4
                 + tm * tn * jnp.dtype(out_dtype).itemsize + tm * K * 2)
    return pl.pallas_call(
        functools.partial(_ln_matmul_kernel, ln=ln, relu=relu),
        out_shape=jax.ShapeDtypeStruct((M, N), out_dtype),
        grid=(M // tm, N // tn),
        in_specs=[
            pl.BlockSpec((tm, K), lambda i, j: (i, 0)),
            pl.BlockSpec((1, K), lambda i, j: (0, 0)),
            pl.BlockSpec((1, K), lambda i, j: (0, 0)),
            pl.BlockSpec((K, tn), lambda i, j: (0, j)),
            pl.BlockSpec((1, tn), lambda i, j: (0, j)),
        ],
        out_specs=pl.BlockSpec((tm, tn), lambda i, j: (i, j)),
        scratch_shapes=[pltpu.VMEM((tm, K), _MM_DTYPE)],
        compiler_params=pltpu.CompilerParams(
            dimension_semantics=("parallel", "arbitrary"),
            vmem_limit_bytes=_vmem_limit(blk_bytes)),
    )(x2d, gamma.reshape(1, K), beta.reshape(1, K), w, bias.reshape(1, N))


def fused_matmul_residual(x2d, w, bias, res2d):
    """res + Linear(x); K tiled with an f32 VMEM accumulator; f32 output (carrier)."""
    M, K = x2d.shape
    N = w.shape[1]
    tm = _tile_rows(M, _PREFS["tm"])
    tn = _tile_lanes(N, _PREFS["tn"])
    tk = _tile_lanes(K, _PREFS["tk"])
    blk_bytes = (tm * tk * x2d.dtype.itemsize + tk * tn * 2 + tn * 4
                 + tm * tn * 4 * 3)
    return pl.pallas_call(
        _matmul_res_kernel,
        out_shape=jax.ShapeDtypeStruct((M, N), jnp.float32),
        grid=(M // tm, N // tn, K // tk),
        in_specs=[
            pl.BlockSpec((tm, tk), lambda i, j, kk: (i, kk)),
            pl.BlockSpec((tk, tn), lambda i, j, kk: (kk, j)),
            pl.BlockSpec((1, tn), lambda i, j, kk: (0, j)),
            pl.BlockSpec((tm, tn), lambda i, j, kk: (i, j)),
        ],
        out_specs=pl.BlockSpec((tm, tn), lambda i, j, kk: (i, j)),
        scratch_shapes=[pltpu.VMEM((tm, tn), jnp.float32)],
        compiler_params=pltpu.CompilerParams(
            dimension_semantics=("parallel", "parallel", "arbitrary"),
            vmem_limit_bytes=_vmem_limit(blk_bytes)),
    )(x2d, w, bias.reshape(1, N), res2d)


def fused_matmul_ln_residual(x2d, w, bias, gamma, beta, res2d):
    """res + LN(Linear(x)); K tiled (f32 accumulator); N is the full model dim."""
    M, K = x2d.shape
    N = w.shape[1]
    tm = _tile_rows(M, _PREFS["tm"])
    tk = _tile_lanes(K, _PREFS["tk"])
    blk_bytes = (tm * tk * x2d.dtype.itemsize + tk * N * 2 + 3 * N * 4
                 + tm * N * 4 * 3)
    return pl.pallas_call(
        _matmul_ln_res_kernel,
        out_shape=jax.ShapeDtypeStruct((M, N), jnp.float32),
        grid=(M // tm, K // tk),
        in_specs=[
            pl.BlockSpec((tm, tk), lambda i, kk: (i, kk)),
            pl.BlockSpec((tk, N), lambda i, kk: (kk, 0)),
            pl.BlockSpec((1, N), lambda i, kk: (0, 0)),
            pl.BlockSpec((1, N), lambda i, kk: (0, 0)),
            pl.BlockSpec((1, N), lambda i, kk: (0, 0)),
            pl.BlockSpec((tm, N), lambda i, kk: (i, 0)),
        ],
        out_specs=pl.BlockSpec((tm, N), lambda i, kk: (i, 0)),
        scratch_shapes=[pltpu.VMEM((tm, N), jnp.float32)],
        compiler_params=pltpu.CompilerParams(
            dimension_semantics=("parallel", "arbitrary"),
            vmem_limit_bytes=_vmem_limit(blk_bytes)),
    )(x2d, w, bias.reshape(1, N), gamma.reshape(1, N), beta.reshape(1, N), res2d)


def pallas_attention(q, kv, mask_i8, heads, scale):
    """q: [B, Sq, D] bf16, kv: [B, Sk, 2D] bf16 (packed K|V), mask: [B, Sq, Sk] int8
    -> [B, Sq, D] bf16.  Grid = (B, Sq tiles), both parallel (v7x megacore)."""
    B, Sq, D = q.shape
    Sk, two_d = kv.shape[1], kv.shape[2]
    dh = D // heads
    tq = _tile_rows(Sq, _PREFS["tm"])
    blk_bytes = (tq * D * 2 + Sk * two_d * 2 + tq * Sk + tq * D * 2
                 + 2 * tq * Sk * 4)   # + margin for per-head f32 score tiles
    return pl.pallas_call(
        functools.partial(_attn_kernel, heads=heads, dh=dh, scale=scale),
        out_shape=jax.ShapeDtypeStruct((B, Sq, D), _MM_DTYPE),
        grid=(B, Sq // tq),
        in_specs=[
            pl.BlockSpec((None, tq, D), lambda b, qi: (b, qi, 0)),
            pl.BlockSpec((None, Sk, two_d), lambda b, qi: (b, 0, 0)),
            pl.BlockSpec((None, tq, Sk), lambda b, qi: (b, qi, 0)),
        ],
        out_specs=pl.BlockSpec((None, tq, D), lambda b, qi: (b, qi, 0)),
        compiler_params=pltpu.CompilerParams(
            dimension_semantics=("parallel", "parallel"),
            vmem_limit_bytes=_vmem_limit(blk_bytes)),
    )(q, kv, mask_i8)


# ----------------------------------------------------------------------------
# LayerDecoder forward (10 fused pallas_calls; no standalone LN / add / transpose)
# ----------------------------------------------------------------------------
def layer_decoder_forward(params, trg, encoder_output, trg_mask, src_mask, heads):
    B, Sq, D = trg.shape
    Sk = encoder_output.shape[1]
    dh = D // heads
    scale = 1.0 / math.sqrt(dh)
    p = params

    trg2d = trg.reshape(B * Sq, D)
    enc2d = encoder_output.reshape(B * Sk, D)
    tmask = (trg_mask.reshape(B, Sq, Sq) > 0).astype(jnp.int8)   # 4x less mask DMA
    smask = (src_mask.reshape(B, Sq, Sk) > 0).astype(jnp.int8)

    # --- self-attention block:  norm -> Q and packed KV,  attention,
    #     out-proj + norm1 + residual(trg)
    q1 = fused_ln_matmul(trg2d, p["mham"]["w_q"], p["mham"]["b_q"],
                         p["norm"]["gamma"], p["norm"]["beta"])
    kv1 = fused_ln_matmul(trg2d, p["mham"]["w_kv"], p["mham"]["b_kv"],
                          p["norm"]["gamma"], p["norm"]["beta"])
    ctx1 = pallas_attention(q1.reshape(B, Sq, D), kv1.reshape(B, Sq, 2 * D),
                            tmask, heads, scale)
    ua2d = fused_matmul_ln_residual(ctx1.reshape(B * Sq, D),
                                    p["mham"]["wo"], p["mham"]["bo"],
                                    p["norm1"]["gamma"], p["norm1"]["beta"], trg2d)

    # --- cross-attention block:  norm2 -> Q,  packed KV on encoder (no norm),
    #     attention,  out-proj + residual(ua)
    q2 = fused_ln_matmul(ua2d, p["mha"]["w_q"], p["mha"]["b_q"],
                         p["norm2"]["gamma"], p["norm2"]["beta"])
    kv2 = fused_ln_matmul(enc2d, p["mha"]["w_kv"], p["mha"]["b_kv"])   # no LN
    ctx2 = pallas_attention(q2.reshape(B, Sq, D), kv2.reshape(B, Sk, 2 * D),
                            smask, heads, scale)
    ma2d = fused_matmul_residual(ctx2.reshape(B * Sq, D),
                                 p["mha"]["wo"], p["mha"]["bo"], ua2d)

    # --- feed-forward block:  norm3 + w1 + ReLU (bf16 hidden),  w2 + residual(ma)
    h = fused_ln_matmul(ma2d, p["ff"]["w1"], p["ff"]["b1"],
                        p["norm3"]["gamma"], p["norm3"]["beta"], relu=True)
    out2d = fused_matmul_residual(h, p["ff"]["w2"], p["ff"]["b2"], ma2d)
    return out2d.reshape(B, Sq, D)


# ----------------------------------------------------------------------------
# Deterministic parameter init (weights bf16; biases / LN params f32)
# ----------------------------------------------------------------------------
def init_params(key, dmodel, dff, w_dtype=_MM_DTYPE):
    def lin(k, fan_in, fan_out):
        kw, kb = jax.random.split(k)
        lim = 1.0 / math.sqrt(fan_in)
        w = jax.random.uniform(kw, (fan_in, fan_out), jnp.float32, -lim, lim)
        b = jax.random.uniform(kb, (fan_out,), jnp.float32, -lim, lim)
        return w, b

    keys = jax.random.split(key, 10)
    wq, bq = lin(keys[0], dmodel, dmodel)
    wk, bk = lin(keys[1], dmodel, dmodel)
    wv, bv = lin(keys[2], dmodel, dmodel)
    wo, bo = lin(keys[3], dmodel, dmodel)
    wq2, bq2 = lin(keys[4], dmodel, dmodel)
    wk2, bk2 = lin(keys[5], dmodel, dmodel)
    wv2, bv2 = lin(keys[6], dmodel, dmodel)
    wo2, bo2 = lin(keys[7], dmodel, dmodel)
    w1, b1 = lin(keys[8], dmodel, dff)
    w2, b2 = lin(keys[9], dff, dmodel)

    def ln_p():
        return dict(gamma=jnp.ones((dmodel,), jnp.float32),
                    beta=jnp.zeros((dmodel,), jnp.float32))

    return dict(
        mham=dict(w_q=wq.astype(w_dtype), b_q=bq,
                  w_kv=jnp.concatenate([wk, wv], axis=1).astype(w_dtype),
                  b_kv=jnp.concatenate([bk, bv]),
                  wo=wo.astype(w_dtype), bo=bo),
        mha=dict(w_q=wq2.astype(w_dtype), b_q=bq2,
                 w_kv=jnp.concatenate([wk2, wv2], axis=1).astype(w_dtype),
                 b_kv=jnp.concatenate([bk2, bv2]),
                 wo=wo2.astype(w_dtype), bo=bo2),
        norm=ln_p(), norm1=ln_p(), norm2=ln_p(), norm3=ln_p(),
        # norm4 exists in the PyTorch module but is never used in forward().
        ff=dict(w1=w1.astype(w_dtype), b1=b1, w2=w2.astype(w_dtype), b2=b2),
    )


# ----------------------------------------------------------------------------
# Pure-JAX reference mirroring the kernel numerics (bf16 intermediates, f32 carriers)
# ----------------------------------------------------------------------------
def _ref_forward(params, trg, enc, trg_mask, src_mask, heads):
    f32, bf16 = jnp.float32, _MM_DTYPE
    B, Sq, D = trg.shape
    Sk = enc.shape[1]
    dh = D // heads
    scale = 1.0 / math.sqrt(dh)
    tmask = trg_mask.reshape(B, Sq, Sq)
    smask = src_mask.reshape(B, Sq, Sk)
    p = params

    def ln(pp, x):
        m = jnp.mean(x, -1, keepdims=True)
        v = jnp.mean((x - m) ** 2, -1, keepdims=True)
        return (x - m) * jax.lax.rsqrt(v + _EPS) * pp["gamma"] + pp["beta"]

    def proj(x, w, b, ln_p=None, relu=False):
        xx = ln(ln_p, x) if ln_p is not None else x
        y = jnp.dot(xx.astype(bf16), w, preferred_element_type=f32) + b
        if relu:
            y = jnp.maximum(y, 0.0)
        return y.astype(bf16)

    def attn(q, kv, mask):
        S_k = kv.shape[1]
        qh = q.reshape(B, Sq, heads, dh).transpose(0, 2, 1, 3)
        kh = kv[..., :D].reshape(B, S_k, heads, dh).transpose(0, 2, 1, 3)
        vh = kv[..., D:].reshape(B, S_k, heads, dh).transpose(0, 2, 1, 3)
        s = jnp.einsum("bhqd,bhkd->bhqk", qh, kh, preferred_element_type=f32)
        s = jnp.where(mask[:, None] > 0, s * scale, -1e9)
        s = s - jnp.max(s, -1, keepdims=True)
        a = jnp.exp(s)
        a = a / jnp.sum(a, -1, keepdims=True)
        c = jnp.einsum("bhqk,bhkd->bhqd", a.astype(bf16), vh,
                       preferred_element_type=f32)
        return c.transpose(0, 2, 1, 3).reshape(B, Sq, D).astype(bf16)

    q1 = proj(trg, p["mham"]["w_q"], p["mham"]["b_q"], p["norm"])
    kv1 = proj(trg, p["mham"]["w_kv"], p["mham"]["b_kv"], p["norm"])
    x = jnp.dot(attn(q1, kv1, tmask), p["mham"]["wo"],
                preferred_element_type=f32) + p["mham"]["bo"]
    ua = trg + ln(p["norm1"], x)

    q2 = proj(ua, p["mha"]["w_q"], p["mha"]["b_q"], p["norm2"])
    kv2 = proj(enc, p["mha"]["w_kv"], p["mha"]["b_kv"])
    ma = ua + (jnp.dot(attn(q2, kv2, smask), p["mha"]["wo"],
                       preferred_element_type=f32) + p["mha"]["bo"])

    h = proj(ma, p["ff"]["w1"], p["ff"]["b1"], p["norm3"], relu=True)
    return ma + (jnp.dot(h, p["ff"]["w2"], preferred_element_type=f32) + p["ff"]["b2"])


# ----------------------------------------------------------------------------
if __name__ == "__main__":
    heads, dmodel, dff = 4, 128, 2048
    B, S_trg, S_src = 2, 8, 8

    key = jax.random.PRNGKey(0)
    k_p, k_t, k_e = jax.random.split(key, 3)
    params = init_params(k_p, dmodel, dff)

    trg = jax.random.normal(k_t, (B, S_trg, dmodel), jnp.float32)
    encoder_output = jax.random.normal(k_e, (B, S_src, dmodel), jnp.float32)
    trg_mask = jnp.broadcast_to(
        jnp.tril(jnp.ones((S_trg, S_trg), jnp.float32)), (B, 1, S_trg, S_trg))
    src_mask = jnp.ones((B, 1, S_trg, S_src), jnp.float32)

    fwd = jax.jit(functools.partial(layer_decoder_forward, heads=heads))
    out = jax.block_until_ready(fwd(params, trg, encoder_output, trg_mask, src_mask))

    ref = _ref_forward(params, trg, encoder_output, trg_mask, src_mask, heads)
    assert out.shape == (B, S_trg, dmodel)
    max_err = float(jnp.max(jnp.abs(out - ref)))
    assert jnp.allclose(out, ref, atol=3e-2, rtol=3e-2), f"mismatch vs ref: {max_err}"

    print("KERNEL_OK")
</pallas_src>

<mosaic_0001>
module attributes {stable_mosaic.version = 11 : i64} {
  func.func @_ln_matmul_kernel(%arg0: i32, %arg1: i32, %arg2: memref<16x128xf32, #tpu.memory_space<vmem>>, %arg3: memref<1x128xf32, #tpu.memory_space<vmem>>, %arg4: memref<1x128xf32, #tpu.memory_space<vmem>>, %arg5: memref<128x128xbf16, #tpu.memory_space<vmem>>, %arg6: memref<1x128xf32, #tpu.memory_space<vmem>>, %arg7: memref<16x128xbf16, #tpu.memory_space<vmem>>, %arg8: memref<16x128xbf16, #tpu.memory_space<vmem>>) attributes {dimension_semantics = [#tpu.dimension_semantics<parallel>, #tpu.dimension_semantics<arbitrary>], iteration_bounds = array<i64: 1, 1>, scalar_prefetch = 0 : i64, scratch_operands = 1 : i64, tpu.core_type = #tpu.core_type<tc>, window_params = [{transform_indices = @transform_0, window_bounds = array<i64: 16, 128>}, {pipeline_mode = #tpu.pipeline_mode<synchronous>, transform_indices = @transform_1, window_bounds = array<i64: 1, 128>}, {pipeline_mode = #tpu.pipeline_mode<synchronous>, transform_indices = @transform_2, window_bounds = array<i64: 1, 128>}, {transform_indices = @transform_3, window_bounds = array<i64: 128, 128>}, {transform_indices = @transform_4, window_bounds = array<i64: 1, 128>}, {transform_indices = @transform_5, window_bounds = array<i64: 16, 128>}]} {
    %c0_i32 = arith.constant 0 : i32
    %0 = arith.cmpi eq, %arg1, %c0_i32 : i32
    %1 = arith.extui %0 : i1 to i32
    %c0_i32_0 = arith.constant 0 : i32
    %2 = arith.cmpi ne, %1, %c0_i32_0 : i32
    scf.if %2 {
      %c0_8 = arith.constant 0 : index
      %c0_9 = arith.constant 0 : index
      %11 = vector.load %arg2[%c0_8, %c0_9] : memref<16x128xf32, #tpu.memory_space<vmem>>, vector<16x128xf32>
      %cst_10 = arith.constant dense<0.000000e+00> : vector<16xf32>
      %12 = vector.multi_reduction <add>, %11, %cst_10 [1] : vector<16x128xf32> to vector<16xf32>
      %13 = vector.shape_cast %12 : vector<16xf32> to vector<16x1xf32>
      %cst_11 = arith.constant 1.280000e+02 : f32
      %14 = vector.broadcast %cst_11 : f32 to vector<16x1xf32>
      %15 = arith.divf %13, %14 : vector<16x1xf32>
      %16 = vector.broadcast %15 : vector<16x1xf32> to vector<16x128xf32>
      %17 = arith.subf %11, %16 : vector<16x128xf32>
      %18 = arith.mulf %17, %17 : vector<16x128xf32>
      %cst_12 = arith.constant dense<0.000000e+00> : vector<16xf32>
      %19 = vector.multi_reduction <add>, %18, %cst_12 [1] : vector<16x128xf32> to vector<16xf32>
      %20 = vector.shape_cast %19 : vector<16xf32> to vector<16x1xf32>
      %cst_13 = arith.constant 1.280000e+02 : f32
      %21 = vector.broadcast %cst_13 : f32 to vector<16x1xf32>
      %22 = arith.divf %20, %21 : vector<16x1xf32>
      %23 = vector.broadcast %15 : vector<16x1xf32> to vector<16x128xf32>
      %24 = arith.subf %11, %23 : vector<16x128xf32>
      %cst_14 = arith.constant 9.99999974E-6 : f32
      %25 = vector.broadcast %cst_14 : f32 to vector<16x1xf32>
      %26 = arith.addf %22, %25 : vector<16x1xf32>
      %27 = math.rsqrt %26 : vector<16x1xf32>
      %28 = vector.broadcast %27 : vector<16x1xf32> to vector<16x128xf32>
      %29 = arith.mulf %24, %28 : vector<16x128xf32>
      %c0_15 = arith.constant 0 : index
      %c0_16 = arith.constant 0 : index
      %30 = vector.load %arg3[%c0_15, %c0_16] : memref<1x128xf32, #tpu.memory_space<vmem>>, vector<1x128xf32>
      %31 = vector.broadcast %30 : vector<1x128xf32> to vector<16x128xf32>
      %32 = arith.mulf %29, %31 : vector<16x128xf32>
      %c0_17 = arith.constant 0 : index
      %c0_18 = arith.constant 0 : index
      %33 = vector.load %arg4[%c0_17, %c0_18] : memref<1x128xf32, #tpu.memory_space<vmem>>, vector<1x128xf32>
      %34 = vector.broadcast %33 : vector<1x128xf32> to vector<16x128xf32>
      %35 = arith.addf %32, %34 : vector<16x128xf32>
      %36 = arith.truncf %35 : vector<16x128xf32> to vector<16x128xbf16>
      %c0_19 = arith.constant 0 : index
      %c0_20 = arith.constant 0 : index
      %37 = vector.load %arg8[%c0_19, %c0_20] : memref<16x128xbf16, #tpu.memory_space<vmem>>, vector<16x128xbf16>
      tpu.vector_store %arg8[%c0_19, %c0_20], %36 {strides = array<i32>} : memref<16x128xbf16, #tpu.memory_space<vmem>>, vector<16x128xbf16>,
    } else {
    }
    %c0 = arith.constant 0 : index
    %c0_1 = arith.constant 0 : index
    %3 = vector.load %arg8[%c0, %c0_1] : memref<16x128xbf16, #tpu.memory_space<vmem>>, vector<16x128xbf16>
    %c0_2 = arith.constant 0 : index
    %c0_3 = arith.constant 0 : index
    %4 = vector.load %arg5[%c0_2, %c0_3] : memref<128x128xbf16, #tpu.memory_space<vmem>>, vector<128x128xbf16>
    %cst = arith.constant dense<0.000000e+00> : vector<16x128xf32>
    %5 = tpu.matmul %3, %4, %cst {dimension_numbers = #tpu.dot_dimension_numbers<[1], [0], [0], [1], [0, 0, 1, 1], [], []>} : vector<16x128xbf16>, vector<128x128xbf16>, vector<16x128xf32> -> vector<16x128xf32>
    %c0_4 = arith.constant 0 : index
    %c0_5 = arith.constant 0 : index
    %6 = vector.load %arg6[%c0_4, %c0_5] : memref<1x128xf32, #tpu.memory_space<vmem>>, vector<1x128xf32>
    %7 = vector.broadcast %6 : vector<1x128xf32> to vector<16x128xf32>
    %8 = arith.addf %5, %7 : vector<16x128xf32>
    %9 = arith.truncf %8 : vector<16x128xf32> to vector<16x128xbf16>
    %c0_6 = arith.constant 0 : index
    %c0_7 = arith.constant 0 : index
    %10 = vector.load %arg7[%c0_6, %c0_7] : memref<16x128xbf16, #tpu.memory_space<vmem>>, vector<16x128xbf16>
    tpu.vector_store %arg7[%c0_6, %c0_7], %9 {strides = array<i32>} : memref<16x128xbf16, #tpu.memory_space<vmem>>, vector<16x128xbf16>,
    return
  }
  func.func @transform_0(%arg0: i32, %arg1: i32) -> (i32, i32) {
    %c0_i32 = arith.constant 0 : i32
    %c0_i32_0 = arith.constant 0 : i32
    return %arg0, %c0_i32 : i32, i32
  }
  func.func @transform_1(%arg0: i32, %arg1: i32) -> (i32, i32) {
    %c0_i32 = arith.constant 0 : i32
    %c0_i32_0 = arith.constant 0 : i32
    %c0_i32_1 = arith.constant 0 : i32
    return %c0_i32, %c0_i32_0 : i32, i32
  }
  func.func @transform_2(%arg0: i32, %arg1: i32) -> (i32, i32) {
    %c0_i32 = arith.constant 0 : i32
    %c0_i32_0 = arith.constant 0 : i32
    %c0_i32_1 = arith.constant 0 : i32
    return %c0_i32, %c0_i32_0 : i32, i32
  }
  func.func @transform_3(%arg0: i32, %arg1: i32) -> (i32, i32) {
    %c0_i32 = arith.constant 0 : i32
    %c0_i32_0 = arith.constant 0 : i32
    return %c0_i32, %arg1 : i32, i32
  }
  func.func @transform_4(%arg0: i32, %arg1: i32) -> (i32, i32) {
    %c0_i32 = arith.constant 0 : i32
    %c0_i32_0 = arith.constant 0 : i32
    return %c0_i32, %arg1 : i32, i32
  }
  func.func @transform_5(%arg0: i32, %arg1: i32) -> (i32, i32) {
    %c0_i32 = arith.constant 0 : i32
    return %arg0, %arg1 : i32, i32
  }
}

module attributes {stable_mosaic.version = 11 : i64} {
  func.func @_ln_matmul_kernel(%arg0: i32, %arg1: i32, %arg2: memref<16x128xf32, #tpu.memory_space<vmem>>, %arg3: memref<1x128xf32, #tpu.memory_space<vmem>>, %arg4: memref<1x128xf32, #tpu.memory_space<vmem>>, %arg5: memref<128x256xbf16, #tpu.memory_space<vmem>>, %arg6: memref<1x256xf32, #tpu.memory_space<vmem>>, %arg7: memref<16x256xbf16, #tpu.memory_space<vmem>>, %arg8: memref<16x128xbf16, #tpu.memory_space<vmem>>) attributes {dimension_semantics = [#tpu.dimension_semantics<parallel>, #tpu.dimension_semantics<arbitrary>], iteration_bounds = array<i64: 1, 1>, scalar_prefetch = 0 : i64, scratch_operands = 1 : i64, tpu.core_type = #tpu.core_type<tc>, window_params = [{transform_indices = @transform_0, window_bounds = array<i64: 16, 128>}, {pipeline_mode = #tpu.pipeline_mode<synchronous>, transform_indices = @transform_1, window_bounds = array<i64: 1, 128>}, {pipeline_mode = #tpu.pipeline_mode<synchronous>, transform_indices = @transform_2, window_bounds = array<i64: 1, 128>}, {transform_indices = @transform_3, window_bounds = array<i64: 128, 256>}, {transform_indices = @transform_4, window_bounds = array<i64: 1, 256>}, {transform_indices = @transform_5, window_bounds = array<i64: 16, 256>}]} {
    %c0_i32 = arith.constant 0 : i32
    %0 = arith.cmpi eq, %arg1, %c0_i32 : i32
    %1 = arith.extui %0 : i1 to i32
    %c0_i32_0 = arith.constant 0 : i32
    %2 = arith.cmpi ne, %1, %c0_i32_0 : i32
    scf.if %2 {
      %c0_8 = arith.constant 0 : index
      %c0_9 = arith.constant 0 : index
      %11 = vector.load %arg2[%c0_8, %c0_9] : memref<16x128xf32, #tpu.memory_space<vmem>>, vector<16x128xf32>
      %12 = arith.truncf %11 : vector<16x128xf32> to vector<16x128xbf16>
      %c0_10 = arith.constant 0 : index
      %c0_11 = arith.constant 0 : index
      %13 = vector.load %arg8[%c0_10, %c0_11] : memref<16x128xbf16, #tpu.memory_space<vmem>>, vector<16x128xbf16>
      tpu.vector_store %arg8[%c0_10, %c0_11], %12 {strides = array<i32>} : memref<16x128xbf16, #tpu.memory_space<vmem>>, vector<16x128xbf16>,
    } else {
    }
    %c0 = arith.constant 0 : index
    %c0_1 = arith.constant 0 : index
    %3 = vector.load %arg8[%c0, %c0_1] : memref<16x128xbf16, #tpu.memory_space<vmem>>, vector<16x128xbf16>
    %c0_2 = arith.constant 0 : index
    %c0_3 = arith.constant 0 : index
    %4 = vector.load %arg5[%c0_2, %c0_3] : memref<128x256xbf16, #tpu.memory_space<vmem>>, vector<128x256xbf16>
    %cst = arith.constant dense<0.000000e+00> : vector<16x256xf32>
    %5 = tpu.matmul %3, %4, %cst {dimension_numbers = #tpu.dot_dimension_numbers<[1], [0], [0], [1], [0, 0, 1, 1], [], []>} : vector<16x128xbf16>, vector<128x256xbf16>, vector<16x256xf32> -> vector<16x256xf32>
    %c0_4 = arith.constant 0 : index
    %c0_5 = arith.constant 0 : index
    %6 = vector.load %arg6[%c0_4, %c0_5] : memref<1x256xf32, #tpu.memory_space<vmem>>, vector<1x256xf32>
    %7 = vector.broadcast %6 : vector<1x256xf32> to vector<16x256xf32>
    %8 = arith.addf %5, %7 : vector<16x256xf32>
    %9 = arith.truncf %8 : vector<16x256xf32> to vector<16x256xbf16>
    %c0_6 = arith.constant 0 : index
    %c0_7 = arith.constant 0 : index
    %10 = vector.load %arg7[%c0_6, %c0_7] : memref<16x256xbf16, #tpu.memory_space<vmem>>, vector<16x256xbf16>
    tpu.vector_store %arg7[%c0_6, %c0_7], %9 {strides = array<i32>} : memref<16x256xbf16, #tpu.memory_space<vmem>>, vector<16x256xbf16>,
    return
  }
  func.func @transform_0(%arg0: i32, %arg1: i32) -> (i32, i32) {
    %c0_i32 = arith.constant 0 : i32
    %c0_i32_0 = arith.constant 0 : i32
    return %arg0, %c0_i32 : i32, i32
  }
  func.func @transform_1(%arg0: i32, %arg1: i32) -> (i32, i32) {
    %c0_i32 = arith.constant 0 : i32
    %c0_i32_0 = arith.constant 0 : i32
    %c0_i32_1 = arith.constant 0 : i32
    return %c0_i32, %c0_i32_0 : i32, i32
  }
  func.func @transform_2(%arg0: i32, %arg1: i32) -> (i32, i32) {
    %c0_i32 = arith.constant 0 : i32
    %c0_i32_0 = arith.constant 0 : i32
    %c0_i32_1 = arith.constant 0 : i32
    return %c0_i32, %c0_i32_0 : i32, i32
  }
  func.func @transform_3(%arg0: i32, %arg1: i32) -> (i32, i32) {
    %c0_i32 = arith.constant 0 : i32
    %c0_i32_0 = arith.constant 0 : i32
    return %c0_i32, %arg1 : i32, i32
  }
  func.func @transform_4(%arg0: i32, %arg1: i32) -> (i32, i32) {
    %c0_i32 = arith.constant 0 : i32
    %c0_i32_0 = arith.constant 0 : i32
    return %c0_i32, %arg1 : i32, i32
  }
  func.func @transform_5(%arg0: i32, %arg1: i32) -> (i32, i32) {
    %c0_i32 = arith.constant 0 : i32
    return %arg0, %arg1 : i32, i32
  }
}

module attributes {stable_mosaic.version = 11 : i64} {
  func.func @_ln_matmul_kernel(%arg0: i32, %arg1: i32, %arg2: memref<16x128xf32, #tpu.memory_space<vmem>>, %arg3: memref<1x128xf32, #tpu.memory_space<vmem>>, %arg4: memref<1x128xf32, #tpu.memory_space<vmem>>, %arg5: memref<128x256xbf16, #tpu.memory_space<vmem>>, %arg6: memref<1x256xf32, #tpu.memory_space<vmem>>, %arg7: memref<16x256xbf16, #tpu.memory_space<vmem>>, %arg8: memref<16x128xbf16, #tpu.memory_space<vmem>>) attributes {dimension_semantics = [#tpu.dimension_semantics<parallel>, #tpu.dimension_semantics<arbitrary>], iteration_bounds = array<i64: 1, 1>, scalar_prefetch = 0 : i64, scratch_operands = 1 : i64, tpu.core_type = #tpu.core_type<tc>, window_params = [{transform_indices = @transform_0, window_bounds = array<i64: 16, 128>}, {pipeline_mode = #tpu.pipeline_mode<synchronous>, transform_indices = @transform_1, window_bounds = array<i64: 1, 128>}, {pipeline_mode = #tpu.pipeline_mode<synchronous>, transform_indices = @transform_2, window_bounds = array<i64: 1, 128>}, {transform_indices = @transform_3, window_bounds = array<i64: 128, 256>}, {transform_indices = @transform_4, window_bounds = array<i64: 1, 256>}, {transform_indices = @transform_5, window_bounds = array<i64: 16, 256>}]} {
    %c0_i32 = arith.constant 0 : i32
    %0 = arith.cmpi eq, %arg1, %c0_i32 : i32
    %1 = arith.extui %0 : i1 to i32
    %c0_i32_0 = arith.constant 0 : i32
    %2 = arith.cmpi ne, %1, %c0_i32_0 : i32
    scf.if %2 {
      %c0_8 = arith.constant 0 : index
      %c0_9 = arith.constant 0 : index
      %11 = vector.load %arg2[%c0_8, %c0_9] : memref<16x128xf32, #tpu.memory_space<vmem>>, vector<16x128xf32>
      %cst_10 = arith.constant dense<0.000000e+00> : vector<16xf32>
      %12 = vector.multi_reduction <add>, %11, %cst_10 [1] : vector<16x128xf32> to vector<16xf32>
      %13 = vector.shape_cast %12 : vector<16xf32> to vector<16x1xf32>
      %cst_11 = arith.constant 1.280000e+02 : f32
      %14 = vector.broadcast %cst_11 : f32 to vector<16x1xf32>
      %15 = arith.divf %13, %14 : vector<16x1xf32>
      %16 = vector.broadcast %15 : vector<16x1xf32> to vector<16x128xf32>
      %17 = arith.subf %11, %16 : vector<16x128xf32>
      %18 = arith.mulf %17, %17 : vector<16x128xf32>
      %cst_12 = arith.constant dense<0.000000e+00> : vector<16xf32>
      %19 = vector.multi_reduction <add>, %18, %cst_12 [1] : vector<16x128xf32> to vector<16xf32>
      %20 = vector.shape_cast %19 : vector<16xf32> to vector<16x1xf32>
      %cst_13 = arith.constant 1.280000e+02 : f32
      %21 = vector.broadcast %cst_13 : f32 to vector<16x1xf32>
      %22 = arith.divf %20, %21 : vector<16x1xf32>
      %23 = vector.broadcast %15 : vector<16x1xf32> to vector<16x128xf32>
      %24 = arith.subf %11, %23 : vector<16x128xf32>
      %cst_14 = arith.constant 9.99999974E-6 : f32
      %25 = vector.broadcast %cst_14 : f32 to vector<16x1xf32>
      %26 = arith.addf %22, %25 : vector<16x1xf32>
      %27 = math.rsqrt %26 : vector<16x1xf32>
      %28 = vector.broadcast %27 : vector<16x1xf32> to vector<16x128xf32>
      %29 = arith.mulf %24, %28 : vector<16x128xf32>
      %c0_15 = arith.constant 0 : index
      %c0_16 = arith.constant 0 : index
      %30 = vector.load %arg3[%c0_15, %c0_16] : memref<1x128xf32, #tpu.memory_space<vmem>>, vector<1x128xf32>
      %31 = vector.broadcast %30 : vector<1x128xf32> to vector<16x128xf32>
      %32 = arith.mulf %29, %31 : vector<16x128xf32>
      %c0_17 = arith.constant 0 : index
      %c0_18 = arith.constant 0 : index
      %33 = vector.load %arg4[%c0_17, %c0_18] : memref<1x128xf32, #tpu.memory_space<vmem>>, vector<1x128xf32>
      %34 = vector.broadcast %33 : vector<1x128xf32> to vector<16x128xf32>
      %35 = arith.addf %32, %34 : vector<16x128xf32>
      %36 = arith.truncf %35 : vector<16x128xf32> to vector<16x128xbf16>
      %c0_19 = arith.constant 0 : index
      %c0_20 = arith.constant 0 : index
      %37 = vector.load %arg8[%c0_19, %c0_20] : memref<16x128xbf16, #tpu.memory_space<vmem>>, vector<16x128xbf16>
      tpu.vector_store %arg8[%c0_19, %c0_20], %36 {strides = array<i32>} : memref<16x128xbf16, #tpu.memory_space<vmem>>, vector<16x128xbf16>,
    } else {
    }
    %c0 = arith.constant 0 : index
    %c0_1 = arith.constant 0 : index
    %3 = vector.load %arg8[%c0, %c0_1] : memref<16x128xbf16, #tpu.memory_space<vmem>>, vector<16x128xbf16>
    %c0_2 = arith.constant 0 : index
    %c0_3 = arith.constant 0 : index
    %4 = vector.load %arg5[%c0_2, %c0_3] : memref<128x256xbf16, #tpu.memory_space<vmem>>, vector<128x256xbf16>
    %cst = arith.constant dense<0.000000e+00> : vector<16x256xf32>
    %5 = tpu.matmul %3, %4, %cst {dimension_numbers = #tpu.dot_dimension_numbers<[1], [0], [0], [1], [0, 0, 1, 1], [], []>} : vector<16x128xbf16>, vector<128x256xbf16>, vector<16x256xf32> -> vector<16x256xf32>
    %c0_4 = arith.constant 0 : index
    %c0_5 = arith.constant 0 : index
    %6 = vector.load %arg6[%c0_4, %c0_5] : memref<1x256xf32, #tpu.memory_space<vmem>>, vector<1x256xf32>
    %7 = vector.broadcast %6 : vector<1x256xf32> to vector<16x256xf32>
    %8 = arith.addf %5, %7 : vector<16x256xf32>
    %9 = arith.truncf %8 : vector<16x256xf32> to vector<16x256xbf16>
    %c0_6 = arith.constant 0 : index
    %c0_7 = arith.constant 0 : index
    %10 = vector.load %arg7[%c0_6, %c0_7] : memref<16x256xbf16, #tpu.memory_space<vmem>>, vector<16x256xbf16>
    tpu.vector_store %arg7[%c0_6, %c0_7], %9 {strides = array<i32>} : memref<16x256xbf16, #tpu.memory_space<vmem>>, vector<16x256xbf16>,
    return
  }
  func.func @transform_0(%arg0: i32, %arg1: i32) -> (i32, i32) {
    %c0_i32 = arith.constant 0 : i32
    %c0_i32_0 = arith.constant 0 : i32
    return %arg0, %c0_i32 : i32, i32
  }
  func.func @transform_1(%arg0: i32, %arg1: i32) -> (i32, i32) {
    %c0_i32 = arith.constant 0 : i32
    %c0_i32_0 = arith.constant 0 : i32
    %c0_i32_1 = arith.constant 0 : i32
    return %c0_i32, %c0_i32_0 : i32, i32
  }
  func.func @transform_2(%arg0: i32, %arg1: i32) -> (i32, i32) {
    %c0_i32 = arith.constant 0 : i32
    %c0_i32_0 = arith.constant 0 : i32
    %c0_i32_1 = arith.constant 0 : i32
    return %c0_i32, %c0_i32_0 : i32, i32
  }
  func.func @transform_3(%arg0: i32, %arg1: i32) -> (i32, i32) {
    %c0_i32 = arith.constant 0 : i32
    %c0_i32_0 = arith.constant 0 : i32
    return %c0_i32, %arg1 : i32, i32
  }
  func.func @transform_4(%arg0: i32, %arg1: i32) -> (i32, i32) {
    %c0_i32 = arith.constant 0 : i32
    %c0_i32_0 = arith.constant 0 : i32
    return %c0_i32, %arg1 : i32, i32
  }
  func.func @transform_5(%arg0: i32, %arg1: i32) -> (i32, i32) {
    %c0_i32 = arith.constant 0 : i32
    return %arg0, %arg1 : i32, i32
  }
}

module attributes {stable_mosaic.version = 11 : i64} {
  func.func @_attn_kernel(%arg0: i32, %arg1: i32, %arg2: memref<1x8x128xbf16, #tpu.memory_space<vmem>>, %arg3: memref<1x8x256xbf16, #tpu.memory_space<vmem>>, %arg4: memref<1x8x8xi8, #tpu.memory_space<vmem>>, %arg5: memref<1x8x128xbf16, #tpu.memory_space<vmem>>) attributes {dimension_semantics = [#tpu.dimension_semantics<parallel>, #tpu.dimension_semantics<parallel>], iteration_bounds = array<i64: 2, 1>, scalar_prefetch = 0 : i64, scratch_operands = 0 : i64, tpu.core_type = #tpu.core_type<tc>, window_params = [{transform_indices = @transform_0, window_bounds = array<i64: 1, 8, 128>}, {transform_indices = @transform_1, window_bounds = array<i64: 1, 8, 256>}, {transform_indices = @transform_2, window_bounds = array<i64: 1, 8, 8>}, {transform_indices = @transform_3, window_bounds = array<i64: 1, 8, 128>}]} {
    %c0 = arith.constant 0 : index
    %c0_0 = arith.constant 0 : index
    %c0_1 = arith.constant 0 : index
    %0 = vector.load %arg4[%c0, %c0_0, %c0_1] : memref<1x8x8xi8, #tpu.memory_space<vmem>>, vector<1x8x8xi8>
    %1 = vector.shape_cast %0 : vector<1x8x8xi8> to vector<8x8xi8>
    %c0_i8 = arith.constant 0 : i8
    %2 = vector.broadcast %c0_i8 : i8 to vector<8x8xi8>
    %3 = arith.cmpi ne, %1, %2 : vector<8x8xi8>
    %c0_2 = arith.constant 0 : index
    %c0_3 = arith.constant 0 : index
    %c0_4 = arith.constant 0 : index
    %4 = vector.load %arg2[%c0_2, %c0_3, %c0_4] : memref<1x8x128xbf16, #tpu.memory_space<vmem>>, vector<1x8x32xbf16>
    %5 = vector.shape_cast %4 : vector<1x8x32xbf16> to vector<8x32xbf16>
    %c0_5 = arith.constant 0 : index
    %c0_6 = arith.constant 0 : index
    %c0_7 = arith.constant 0 : index
    %6 = vector.load %arg3[%c0_5, %c0_6, %c0_7] : memref<1x8x256xbf16, #tpu.memory_space<vmem>>, vector<1x8x32xbf16>
    %7 = vector.shape_cast %6 : vector<1x8x32xbf16> to vector<8x32xbf16>
    %c0_8 = arith.constant 0 : index
    %c0_9 = arith.constant 0 : index
    %c128 = arith.constant 128 : index
    %8 = vector.load %arg3[%c0_8, %c0_9, %c128] : memref<1x8x256xbf16, #tpu.memory_space<vmem>>, vector<1x8x32xbf16>
    %9 = vector.shape_cast %8 : vector<1x8x32xbf16> to vector<8x32xbf16>
    %cst = arith.constant dense<0.000000e+00> : vector<8x8xf32>
    %10 = tpu.matmul %5, %7, %cst {dimension_numbers = #tpu.dot_dimension_numbers<[1], [1], [0], [0], [0, 0, 1, 0], [], []>} : vector<8x32xbf16>, vector<8x32xbf16>, vector<8x8xf32> -> vector<8x8xf32>
    %cst_10 = arith.constant 0.176776692 : f32
    %11 = vector.broadcast %cst_10 : f32 to vector<8x8xf32>
    %12 = arith.mulf %10, %11 : vector<8x8xf32>
    %cst_11 = arith.constant -1.000000e+09 : f32
    %13 = vector.broadcast %cst_11 : f32 to vector<8x8xf32>
    %14 = arith.select %3, %12, %13 : vector<8x8xi1>, vector<8x8xf32>
    %cst_12 = arith.constant dense<0xFF800000> : vector<8xf32>
    %15 = vector.multi_reduction <maximumf>, %14, %cst_12 [1] : vector<8x8xf32> to vector<8xf32>
    %16 = vector.shape_cast %15 : vector<8xf32> to vector<8x1xf32>
    %17 = vector.broadcast %16 : vector<8x1xf32> to vector<8x8xf32>
    %18 = arith.subf %14, %17 : vector<8x8xf32>
    %19 = math.exp %18 : vector<8x8xf32>
    %cst_13 = arith.constant dense<0.000000e+00> : vector<8xf32>
    %20 = vector.multi_reduction <add>, %19, %cst_13 [1] : vector<8x8xf32> to vector<8xf32>
    %21 = vector.shape_cast %20 : vector<8xf32> to vector<8x1xf32>
    %22 = tpu.reciprocal %21 {approx = true} : vector<8x1xf32> -> vector<8x1xf32>
    %23 = vector.broadcast %22 : vector<8x1xf32> to vector<8x8xf32>
    %24 = arith.mulf %19, %23 : vector<8x8xf32>
    %25 = arith.truncf %24 : vector<8x8xf32> to vector<8x8xbf16>
    %cst_14 = arith.constant dense<0.000000e+00> : vector<8x32xf32>
    %26 = tpu.matmul %25, %9, %cst_14 {dimension_numbers = #tpu.dot_dimension_numbers<[1], [0], [0], [1], [0, 0, 1, 1], [], []>} : vector<8x8xbf16>, vector<8x32xbf16>, vector<8x32xf32> -> vector<8x32xf32>
    %27 = arith.truncf %26 : vector<8x32xf32> to vector<8x32xbf16>
    %c0_15 = arith.constant 0 : index
    %c0_16 = arith.constant 0 : index
    %c0_17 = arith.constant 0 : index
    %28 = vector.load %arg5[%c0_15, %c0_16, %c0_17] : memref<1x8x128xbf16, #tpu.memory_space<vmem>>, vector<1x8x32xbf16>
    %29 = vector.shape_cast %28 : vector<1x8x32xbf16> to vector<8x32xbf16>
    %30 = vector.shape_cast %27 : vector<8x32xbf16> to vector<1x8x32xbf16>
    tpu.vector_store %arg5[%c0_15, %c0_16, %c0_17], %30 {strides = array<i32>} : memref<1x8x128xbf16, #tpu.memory_space<vmem>>, vector<1x8x32xbf16>,
    %c0_18 = arith.constant 0 : index
    %c0_19 = arith.constant 0 : index
    %c32 = arith.constant 32 : index
    %31 = vector.load %arg2[%c0_18, %c0_19, %c32] : memref<1x8x128xbf16, #tpu.memory_space<vmem>>, vector<1x8x32xbf16>
    %32 = vector.shape_cast %31 : vector<1x8x32xbf16> to vector<8x32xbf16>
    %c0_20 = arith.constant 0 : index
    %c0_21 = arith.constant 0 : index
    %c32_22 = arith.constant 32 : index
    %33 = vector.load %arg3[%c0_20, %c0_21, %c32_22] : memref<1x8x256xbf16, #tpu.memory_space<vmem>>, vector<1x8x32xbf16>
    %34 = vector.shape_cast %33 : vector<1x8x32xbf16> to vector<8x32xbf16>
    %c0_23 = arith.constant 0 : index
    %c0_24 = arith.constant 0 : index
    %c160 = arith.constant 160 : index
    %35 = vector.load %arg3[%c0_23, %c0_24, %c160] : memref<1x8x256xbf16, #tpu.memory_space<vmem>>, vector<1x8x32xbf16>
    %36 = vector.shape_cast %35 : vector<1x8x32xbf16> to vector<8x32xbf16>
    %cst_25 = arith.constant dense<0.000000e+00> : vector<8x8xf32>
    %37 = tpu.matmul %32, %34, %cst_25 {dimension_numbers = #tpu.dot_dimension_numbers<[1], [1], [0], [0], [0, 0, 1, 0], [], []>} : vector<8x32xbf16>, vector<8x32xbf16>, vector<8x8xf32> -> vector<8x8xf32>
    %cst_26 = arith.constant 0.176776692 : f32
    %38 = vector.broadcast %cst_26 : f32 to vector<8x8xf32>
    %39 = arith.mulf %37, %38 : vector<8x8xf32>
    %cst_27 = arith.constant -1.000000e+09 : f32
    %40 = vector.broadcast %cst_27 : f32 to vector<8x8xf32>
    %41 = arith.select %3, %39, %40 : vector<8x8xi1>, vector<8x8xf32>
    %cst_28 = arith.constant dense<0xFF800000> : vector<8xf32>
    %42 = vector.multi_reduction <maximumf>, %41, %cst_28 [1] : vector<8x8xf32> to vector<8xf32>
    %43 = vector.shape_cast %42 : vector<8xf32> to vector<8x1xf32>
    %44 = vector.broadcast %43 : vector<8x1xf32> to vector<8x8xf32>
    %45 = arith.subf %41, %44 : vector<8x8xf32>
    %46 = math.exp %45 : vector<8x8xf32>
    %cst_29 = arith.constant dense<0.000000e+00> : vector<8xf32>
    %47 = vector.multi_reduction <add>, %46, %cst_29 [1] : vector<8x8xf32> to vector<8xf32>
    %48 = vector.shape_cast %47 : vector<8xf32> to vector<8x1xf32>
    %49 = tpu.reciprocal %48 {approx = true} : vector<8x1xf32> -> vector<8x1xf32>
    %50 = vector.broadcast %49 : vector<8x1xf32> to vector<8x8xf32>
    %51 = arith.mulf %46, %50 : vector<8x8xf32>
    %52 = arith.truncf %51 : vector<8x8xf32> to vector<8x8xbf16>
    %cst_30 = arith.constant dense<0.000000e+00> : vector<8x32xf32>
    %53 = tpu.matmul %52, %36, %cst_30 {dimension_numbers = #tpu.dot_dimension_numbers<[1], [0], [0], [1], [0, 0, 1, 1], [], []>} : vector<8x8xbf16>, vector<8x32xbf16>, vector<8x32xf32> -> vector<8x32xf32>
    %54 = arith.truncf %53 : vector<8x32xf32> to vector<8x32xbf16>
    %c0_31 = arith.constant 0 : index
    %c0_32 = arith.constant 0 : index
    %c32_33 = arith.constant 32 : index
    %55 = vector.load %arg5[%c0_31, %c0_32, %c32_33] : memref<1x8x128xbf16, #tpu.memory_space<vmem>>, vector<1x8x32xbf16>
    %56 = vector.shape_cast %55 : vector<1x8x32xbf16> to vector<8x32xbf16>
    %57 = vector.shape_cast %54 : vector<8x32xbf16> to vector<1x8x32xbf16>
    tpu.vector_store %arg5[%c0_31, %c0_32, %c32_33], %57 {strides = array<i32>} : memref<1x8x128xbf16, #tpu.memory_space<vmem>>, vector<1x8x32xbf16>,
    %c0_34 = arith.constant 0 : index
    %c0_35 = arith.constant 0 : index
    %c64 = arith.constant 64 : index
    %58 = vector.load %arg2[%c0_34, %c0_35, %c64] : memref<1x8x128xbf16, #tpu.memory_space<vmem>>, vector<1x8x32xbf16>
    %59 = vector.shape_cast %58 : vector<1x8x32xbf16> to vector<8x32xbf16>
    %c0_36 = arith.constant 0 : index
    %c0_37 = arith.constant 0 : index
    %c64_38 = arith.constant 64 : index
    %60 = vector.load %arg3[%c0_36, %c0_37, %c64_38] : memref<1x8x256xbf16, #tpu.memory_space<vmem>>, vector<1x8x32xbf16>
    %61 = vector.shape_cast %60 : vector<1x8x32xbf16> to vector<8x32xbf16>
    %c0_39 = arith.constant 0 : index
    %c0_40 = arith.constant 0 : index
    %c192 = arith.constant 192 : index
    %62 = vector.load %arg3[%c0_39, %c0_40, %c192] : memref<1x8x256xbf16, #tpu.memory_space<vmem>>, vector<1x8x32xbf16>
    %63 = vector.shape_cast %62 : vector<1x8x32xbf16> to vector<8x32xbf16>
    %cst_41 = arith.constant dense<0.000000e+00> : vector<8x8xf32>
    %64 = tpu.matmul %59, %61, %cst_41 {dimension_numbers = #tpu.dot_dimension_numbers<[1], [1], [0], [0], [0, 0, 1, 0], [], []>} : vector<8x32xbf16>, vector<8x32xbf16>, vector<8x8xf32> -> vector<8x8xf32>
    %cst_42 = arith.constant 0.176776692 : f32
    %65 = vector.broadcast %cst_42 : f32 to vector<8x8xf32>
    %66 = arith.mulf %64, %65 : vector<8x8xf32>
    %cst_43 = arith.constant -1.000000e+09 : f32
    %67 = vector.broadcast %cst_43 : f32 to vector<8x8xf32>
    %68 = arith.select %3, %66, %67 : vector<8x8xi1>, vector<8x8xf32>
    %cst_44 = arith.constant dense<0xFF800000> : vector<8xf32>
    %69 = vector.multi_reduction <maximumf>, %68, %cst_44 [1] : vector<8x8xf32> to vector<8xf32>
    %70 = vector.shape_cast %69 : vector<8xf32> to vector<8x1xf32>
    %71 = vector.broadcast %70 : vector<8x1xf32> to vector<8x8xf32>
    %72 = arith.subf %68, %71 : vector<8x8xf32>
    %73 = math.exp %72 : vector<8x8xf32>
    %cst_45 = arith.constant dense<0.000000e+00> : vector<8xf32>
    %74 = vector.multi_reduction <add>, %73, %cst_45 [1] : vector<8x8xf32> to vector<8xf32>
    %75 = vector.shape_cast %74 : vector<8xf32> to vector<8x1xf32>
    %76 = tpu.reciprocal %75 {approx = true} : vector<8x1xf32> -> vector<8x1xf32>
    %77 = vector.broadcast %76 : vector<8x1xf32> to vector<8x8xf32>
    %78 = arith.mulf %73, %77 : vector<8x8xf32>
    %79 = arith.truncf %78 : vector<8x8xf32> to vector<8x8xbf16>
    %cst_46 = arith.constant dense<0.000000e+00> : vector<8x32xf32>
    %80 = tpu.matmul %79, %63, %cst_46 {dimension_numbers = #tpu.dot_dimension_numbers<[1], [0], [0], [1], [0, 0, 1, 1], [], []>} : vector<8x8xbf16>, vector<8x32xbf16>, vector<8x32xf32> -> vector<8x32xf32>
    %81 = arith.truncf %80 : vector<8x32xf32> to vector<8x32xbf16>
    %c0_47 = arith.constant 0 : index
    %c0_48 = arith.constant 0 : index
    %c64_49 = arith.constant 64 : index
    %82 = vector.load %arg5[%c0_47, %c0_48, %c64_49] : memref<1x8x128xbf16, #tpu.memory_space<vmem>>, vector<1x8x32xbf16>
    %83 = vector.shape_cast %82 : vector<1x8x32xbf16> to vector<8x32xbf16>
    %84 = vector.shape_cast %81 : vector<8x32xbf16> to vector<1x8x32xbf16>
    tpu.vector_store %arg5[%c0_47, %c0_48, %c64_49], %84 {strides = array<i32>} : memref<1x8x128xbf16, #tpu.memory_space<vmem>>, vector<1x8x32xbf16>,
    %c0_50 = arith.constant 0 : index
    %c0_51 = arith.constant 0 : index
    %c96 = arith.constant 96 : index
    %85 = vector.load %arg2[%c0_50, %c0_51, %c96] : memref<1x8x128xbf16, #tpu.memory_space<vmem>>, vector<1x8x32xbf16>
    %86 = vector.shape_cast %85 : vector<1x8x32xbf16> to vector<8x32xbf16>
    %c0_52 = arith.constant 0 : index
    %c0_53 = arith.constant 0 : index
    %c96_54 = arith.constant 96 : index
    %87 = vector.load %arg3[%c0_52, %c0_53, %c96_54] : memref<1x8x256xbf16, #tpu.memory_space<vmem>>, vector<1x8x32xbf16>
    %88 = vector.shape_cast %87 : vector<1x8x32xbf16> to vector<8x32xbf16>
    %c0_55 = arith.constant 0 : index
    %c0_56 = arith.constant 0 : index
    %c224 = arith.constant 224 : index
    %89 = vector.load %arg3[%c0_55, %c0_56, %c224] : memref<1x8x256xbf16, #tpu.memory_space<vmem>>, vector<1x8x32xbf16>
    %90 = vector.shape_cast %89 : vector<1x8x32xbf16> to vector<8x32xbf16>
    %cst_57 = arith.constant dense<0.000000e+00> : vector<8x8xf32>
    %91 = tpu.matmul %86, %88, %cst_57 {dimension_numbers = #tpu.dot_dimension_numbers<[1], [1], [0], [0], [0, 0, 1, 0], [], []>} : vector<8x32xbf16>, vector<8x32xbf16>, vector<8x8xf32> -> vector<8x8xf32>
    %cst_58 = arith.constant 0.176776692 : f32
    %92 = vector.broadcast %cst_58 : f32 to vector<8x8xf32>
    %93 = arith.mulf %91, %92 : vector<8x8xf32>
    %cst_59 = arith.constant -1.000000e+09 : f32
    %94 = vector.broadcast %cst_59 : f32 to vector<8x8xf32>
    %95 = arith.select %3, %93, %94 : vector<8x8xi1>, vector<8x8xf32>
    %cst_60 = arith.constant dense<0xFF800000> : vector<8xf32>
    %96 = vector.multi_reduction <maximumf>, %95, %cst_60 [1] : vector<8x8xf32> to vector<8xf32>
    %97 = vector.shape_cast %96 : vector<8xf32> to vector<8x1xf32>
    %98 = vector.broadcast %97 : vector<8x1xf32> to vector<8x8xf32>
    %99 = arith.subf %95, %98 : vector<8x8xf32>
    %100 = math.exp %99 : vector<8x8xf32>
    %cst_61 = arith.constant dense<0.000000e+00> : vector<8xf32>
    %101 = vector.multi_reduction <add>, %100, %cst_61 [1] : vector<8x8xf32> to vector<8xf32>
    %102 = vector.shape_cast %101 : vector<8xf32> to vector<8x1xf32>
    %103 = tpu.reciprocal %102 {approx = true} : vector<8x1xf32> -> vector<8x1xf32>
    %104 = vector.broadcast %103 : vector<8x1xf32> to vector<8x8xf32>
    %105 = arith.mulf %100, %104 : vector<8x8xf32>
    %106 = arith.truncf %105 : vector<8x8xf32> to vector<8x8xbf16>
    %cst_62 = arith.constant dense<0.000000e+00> : vector<8x32xf32>
    %107 = tpu.matmul %106, %90, %cst_62 {dimension_numbers = #tpu.dot_dimension_numbers<[1], [0], [0], [1], [0, 0, 1, 1], [], []>} : vector<8x8xbf16>, vector<8x32xbf16>, vector<8x32xf32> -> vector<8x32xf32>
    %108 = arith.truncf %107 : vector<8x32xf32> to vector<8x32xbf16>
    %c0_63 = arith.constant 0 : index
    %c0_64 = arith.constant 0 : index
    %c96_65 = arith.constant 96 : index
    %109 = vector.load %arg5[%c0_63, %c0_64, %c96_65] : memref<1x8x128xbf16, #tpu.memory_space<vmem>>, vector<1x8x32xbf16>
    %110 = vector.shape_cast %109 : vector<1x8x32xbf16> to vector<8x32xbf16>
    %111 = vector.shape_cast %108 : vector<8x32xbf16> to vector<1x8x32xbf16>
    tpu.vector_store %arg5[%c0_63, %c0_64, %c96_65], %111 {strides = array<i32>} : memref<1x8x128xbf16, #tpu.memory_space<vmem>>, vector<1x8x32xbf16>,
    return
  }
  func.func @transform_0(%arg0: i32, %arg1: i32) -> (i32, i32, i32) {
    %c0_i32 = arith.constant 0 : i32
    %c0_i32_0 = arith.constant 0 : i32
    return %arg0, %arg1, %c0_i32 : i32, i32, i32
  }
  func.func @transform_1(%arg0: i32, %arg1: i32) -> (i32, i32, i32) {
    %c0_i32 = arith.constant 0 : i32
    %c0_i32_0 = arith.constant 0 : i32
    %c0_i32_1 = arith.constant 0 : i32
    return %arg0, %c0_i32, %c0_i32_0 : i32, i32, i32
  }
  func.func @transform_2(%arg0: i32, %arg1: i32) -> (i32, i32, i32) {
    %c0_i32 = arith.constant 0 : i32
    %c0_i32_0 = arith.constant 0 : i32
    return %arg0, %arg1, %c0_i32 : i32, i32, i32
  }
  func.func @transform_3(%arg0: i32, %arg1: i32) -> (i32, i32, i32) {
    %c0_i32 = arith.constant 0 : i32
    %c0_i32_0 = arith.constant 0 : i32
    return %arg0, %arg1, %c0_i32 : i32, i32, i32
  }
}

module attributes {stable_mosaic.version = 11 : i64} {
  func.func @_ln_matmul_kernel(%arg0: i32, %arg1: i32, %arg2: memref<16x128xf32, #tpu.memory_space<vmem>>, %arg3: memref<1x128xf32, #tpu.memory_space<vmem>>, %arg4: memref<1x128xf32, #tpu.memory_space<vmem>>, %arg5: memref<128x128xbf16, #tpu.memory_space<vmem>>, %arg6: memref<1x128xf32, #tpu.memory_space<vmem>>, %arg7: memref<16x128xbf16, #tpu.memory_space<vmem>>, %arg8: memref<16x128xbf16, #tpu.memory_space<vmem>>) attributes {dimension_semantics = [#tpu.dimension_semantics<parallel>, #tpu.dimension_semantics<arbitrary>], iteration_bounds = array<i64: 1, 1>, scalar_prefetch = 0 : i64, scratch_operands = 1 : i64, tpu.core_type = #tpu.core_type<tc>, window_params = [{transform_indices = @transform_0, window_bounds = array<i64: 16, 128>}, {pipeline_mode = #tpu.pipeline_mode<synchronous>, transform_indices = @transform_1, window_bounds = array<i64: 1, 128>}, {pipeline_mode = #tpu.pipeline_mode<synchronous>, transform_indices = @transform_2, window_bounds = array<i64: 1, 128>}, {transform_indices = @transform_3, window_bounds = array<i64: 128, 128>}, {transform_indices = @transform_4, window_bounds = array<i64: 1, 128>}, {transform_indices = @transform_5, window_bounds = array<i64: 16, 128>}]} {
    %c0_i32 = arith.constant 0 : i32
    %0 = arith.cmpi eq, %arg1, %c0_i32 : i32
    %1 = arith.extui %0 : i1 to i32
    %c0_i32_0 = arith.constant 0 : i32
    %2 = arith.cmpi ne, %1, %c0_i32_0 : i32
    scf.if %2 {
      %c0_8 = arith.constant 0 : index
      %c0_9 = arith.constant 0 : index
      %11 = vector.load %arg2[%c0_8, %c0_9] : memref<16x128xf32, #tpu.memory_space<vmem>>, vector<16x128xf32>
      %cst_10 = arith.constant dense<0.000000e+00> : vector<16xf32>
      %12 = vector.multi_reduction <add>, %11, %cst_10 [1] : vector<16x128xf32> to vector<16xf32>
      %13 = vector.shape_cast %12 : vector<16xf32> to vector<16x1xf32>
      %cst_11 = arith.constant 1.280000e+02 : f32
      %14 = vector.broadcast %cst_11 : f32 to vector<16x1xf32>
      %15 = arith.divf %13, %14 : vector<16x1xf32>
      %16 = vector.broadcast %15 : vector<16x1xf32> to vector<16x128xf32>
      %17 = arith.subf %11, %16 : vector<16x128xf32>
      %18 = arith.mulf %17, %17 : vector<16x128xf32>
      %cst_12 = arith.constant dense<0.000000e+00> : vector<16xf32>
      %19 = vector.multi_reduction <add>, %18, %cst_12 [1] : vector<16x128xf32> to vector<16xf32>
      %20 = vector.shape_cast %19 : vector<16xf32> to vector<16x1xf32>
      %cst_13 = arith.constant 1.280000e+02 : f32
      %21 = vector.broadcast %cst_13 : f32 to vector<16x1xf32>
      %22 = arith.divf %20, %21 : vector<16x1xf32>
      %23 = vector.broadcast %15 : vector<16x1xf32> to vector<16x128xf32>
      %24 = arith.subf %11, %23 : vector<16x128xf32>
      %cst_14 = arith.constant 9.99999974E-6 : f32
      %25 = vector.broadcast %cst_14 : f32 to vector<16x1xf32>
      %26 = arith.addf %22, %25 : vector<16x1xf32>
      %27 = math.rsqrt %26 : vector<16x1xf32>
      %28 = vector.broadcast %27 : vector<16x1xf32> to vector<16x128xf32>
      %29 = arith.mulf %24, %28 : vector<16x128xf32>
      %c0_15 = arith.constant 0 : index
      %c0_16 = arith.constant 0 : index
      %30 = vector.load %arg3[%c0_15, %c0_16] : memref<1x128xf32, #tpu.memory_space<vmem>>, vector<1x128xf32>
      %31 = vector.broadcast %30 : vector<1x128xf32> to vector<16x128xf32>
      %32 = arith.mulf %29, %31 : vector<16x128xf32>
      %c0_17 = arith.constant 0 : index
      %c0_18 = arith.constant 0 : index
      %33 = vector.load %arg4[%c0_17, %c0_18] : memref<1x128xf32, #tpu.memory_space<vmem>>, vector<1x128xf32>
      %34 = vector.broadcast %33 : vector<1x128xf32> to vector<16x128xf32>
      %35 = arith.addf %32, %34 : vector<16x128xf32>
      %36 = arith.truncf %35 : vector<16x128xf32> to vector<16x128xbf16>
      %c0_19 = arith.constant 0 : index
      %c0_20 = arith.constant 0 : index
      %37 = vector.load %arg8[%c0_19, %c0_20] : memref<16x128xbf16, #tpu.memory_space<vmem>>, vector<16x128xbf16>
      tpu.vector_store %arg8[%c0_19, %c0_20], %36 {strides = array<i32>} : memref<16x128xbf16, #tpu.memory_space<vmem>>, vector<16x128xbf16>,
    } else {
    }
    %c0 = arith.constant 0 : index
    %c0_1 = arith.constant 0 : index
    %3 = vector.load %arg8[%c0, %c0_1] : memref<16x128xbf16, #tpu.memory_space<vmem>>, vector<16x128xbf16>
    %c0_2 = arith.constant 0 : index
    %c0_3 = arith.constant 0 : index
    %4 = vector.load %arg5[%c0_2, %c0_3] : memref<128x128xbf16, #tpu.memory_space<vmem>>, vector<128x128xbf16>
    %cst = arith.constant dense<0.000000e+00> : vector<16x128xf32>
    %5 = tpu.matmul %3, %4, %cst {dimension_numbers = #tpu.dot_dimension_numbers<[1], [0], [0], [1], [0, 0, 1, 1], [], []>} : vector<16x128xbf16>, vector<128x128xbf16>, vector<16x128xf32> -> vector<16x128xf32>
    %c0_4 = arith.constant 0 : index
    %c0_5 = arith.constant 0 : index
    %6 = vector.load %arg6[%c0_4, %c0_5] : memref<1x128xf32, #tpu.memory_space<vmem>>, vector<1x128xf32>
    %7 = vector.broadcast %6 : vector<1x128xf32> to vector<16x128xf32>
    %8 = arith.addf %5, %7 : vector<16x128xf32>
    %9 = arith.truncf %8 : vector<16x128xf32> to vector<16x128xbf16>
    %c0_6 = arith.constant 0 : index
    %c0_7 = arith.constant 0 : index
    %10 = vector.load %arg7[%c0_6, %c0_7] : memref<16x128xbf16, #tpu.memory_space<vmem>>, vector<16x128xbf16>
    tpu.vector_store %arg7[%c0_6, %c0_7], %9 {strides = array<i32>} : memref<16x128xbf16, #tpu.memory_space<vmem>>, vector<16x128xbf16>,
    return
  }
  func.func @transform_0(%arg0: i32, %arg1: i32) -> (i32, i32) {
    %c0_i32 = arith.constant 0 : i32
    %c0_i32_0 = arith.constant 0 : i32
    return %arg0, %c0_i32 : i32, i32
  }
  func.func @transform_1(%arg0: i32, %arg1: i32) -> (i32, i32) {
    %c0_i32 = arith.constant 0 : i32
    %c0_i32_0 = arith.constant 0 : i32
    %c0_i32_1 = arith.constant 0 : i32
    return %c0_i32, %c0_i32_0 : i32, i32
  }
  func.func @transform_2(%arg0: i32, %arg1: i32) -> (i32, i32) {
    %c0_i32 = arith.constant 0 : i32
    %c0_i32_0 = arith.constant 0 : i32
    %c0_i32_1 = arith.constant 0 : i32
    return %c0_i32, %c0_i32_0 : i32, i32
  }
  func.func @transform_3(%arg0: i32, %arg1: i32) -> (i32, i32) {
    %c0_i32 = arith.constant 0 : i32
    %c0_i32_0 = arith.constant 0 : i32
    return %c0_i32, %arg1 : i32, i32
  }
  func.func @transform_4(%arg0: i32, %arg1: i32) -> (i32, i32) {
    %c0_i32 = arith.constant 0 : i32
    %c0_i32_0 = arith.constant 0 : i32
    return %c0_i32, %arg1 : i32, i32
  }
  func.func @transform_5(%arg0: i32, %arg1: i32) -> (i32, i32) {
    %c0_i32 = arith.constant 0 : i32
    return %arg0, %arg1 : i32, i32
  }
}

module attributes {stable_mosaic.version = 11 : i64} {
  func.func @_matmul_ln_res_kernel(%arg0: i32, %arg1: i32, %arg2: memref<16x128xbf16, #tpu.memory_space<vmem>>, %arg3: memref<128x128xbf16, #tpu.memory_space<vmem>>, %arg4: memref<1x128xf32, #tpu.memory_space<vmem>>, %arg5: memref<1x128xf32, #tpu.memory_space<vmem>>, %arg6: memref<1x128xf32, #tpu.memory_space<vmem>>, %arg7: memref<16x128xf32, #tpu.memory_space<vmem>>, %arg8: memref<16x128xf32, #tpu.memory_space<vmem>>, %arg9: memref<16x128xf32, #tpu.memory_space<vmem>>) attributes {dimension_semantics = [#tpu.dimension_semantics<parallel>, #tpu.dimension_semantics<arbitrary>], iteration_bounds = array<i64: 1, 1>, scalar_prefetch = 0 : i64, scratch_operands = 1 : i64, tpu.core_type = #tpu.core_type<tc>, window_params = [{transform_indices = @transform_0, window_bounds = array<i64: 16, 128>}, {transform_indices = @transform_1, window_bounds = array<i64: 128, 128>}, {pipeline_mode = #tpu.pipeline_mode<synchronous>, transform_indices = @transform_2, window_bounds = array<i64: 1, 128>}, {pipeline_mode = #tpu.pipeline_mode<synchronous>, transform_indices = @transform_3, window_bounds = array<i64: 1, 128>}, {pipeline_mode = #tpu.pipeline_mode<synchronous>, transform_indices = @transform_4, window_bounds = array<i64: 1, 128>}, {transform_indices = @transform_5, window_bounds = array<i64: 16, 128>}, {transform_indices = @transform_6, window_bounds = array<i64: 16, 128>}]} {
    %c0_i32 = arith.constant 0 : i32
    %0 = arith.cmpi eq, %arg1, %c0_i32 : i32
    %1 = arith.extui %0 : i1 to i32
    %c0_i32_0 = arith.constant 0 : i32
    %2 = arith.cmpi ne, %1, %c0_i32_0 : i32
    scf.if %2 {
      %cst_10 = arith.constant 0.000000e+00 : f32
      %12 = vector.broadcast %cst_10 : f32 to vector<16x128xf32>
      %c0_11 = arith.constant 0 : index
      %c0_12 = arith.constant 0 : index
      %13 = vector.load %arg9[%c0_11, %c0_12] : memref<16x128xf32, #tpu.memory_space<vmem>>, vector<16x128xf32>
      tpu.vector_store %arg9[%c0_11, %c0_12], %12 {strides = array<i32>} : memref<16x128xf32, #tpu.memory_space<vmem>>, vector<16x128xf32>,
    } else {
    }
    %c0 = arith.constant 0 : index
    %c0_1 = arith.constant 0 : index
    %3 = vector.load %arg9[%c0, %c0_1] : memref<16x128xf32, #tpu.memory_space<vmem>>, vector<16x128xf32>
    %c0_2 = arith.constant 0 : index
    %c0_3 = arith.constant 0 : index
    %4 = vector.load %arg2[%c0_2, %c0_3] : memref<16x128xbf16, #tpu.memory_space<vmem>>, vector<16x128xbf16>
    %c0_4 = arith.constant 0 : index
    %c0_5 = arith.constant 0 : index
    %5 = vector.load %arg3[%c0_4, %c0_5] : memref<128x128xbf16, #tpu.memory_space<vmem>>, vector<128x128xbf16>
    %cst = arith.constant dense<0.000000e+00> : vector<16x128xf32>
    %6 = tpu.matmul %4, %5, %cst {dimension_numbers = #tpu.dot_dimension_numbers<[1], [0], [0], [1], [0, 0, 1, 1], [], []>} : vector<16x128xbf16>, vector<128x128xbf16>, vector<16x128xf32> -> vector<16x128xf32>
    %7 = arith.addf %3, %6 : vector<16x128xf32>
    %c0_6 = arith.constant 0 : index
    %c0_7 = arith.constant 0 : index
    %8 = vector.load %arg9[%c0_6, %c0_7] : memref<16x128xf32, #tpu.memory_space<vmem>>, vector<16x128xf32>
    tpu.vector_store %arg9[%c0_6, %c0_7], %7 {strides = array<i32>} : memref<16x128xf32, #tpu.memory_space<vmem>>, vector<16x128xf32>,
    %c0_i32_8 = arith.constant 0 : i32
    %9 = arith.cmpi eq, %arg1, %c0_i32_8 : i32
    %10 = arith.extui %9 : i1 to i32
    %c0_i32_9 = arith.constant 0 : i32
    %11 = arith.cmpi ne, %10, %c0_i32_9 : i32
    scf.if %11 {
      %c0_10 = arith.constant 0 : index
      %c0_11 = arith.constant 0 : index
      %12 = vector.load %arg9[%c0_10, %c0_11] : memref<16x128xf32, #tpu.memory_space<vmem>>, vector<16x128xf32>
      %c0_12 = arith.constant 0 : index
      %c0_13 = arith.constant 0 : index
      %13 = vector.load %arg4[%c0_12, %c0_13] : memref<1x128xf32, #tpu.memory_space<vmem>>, vector<1x128xf32>
      %14 = vector.broadcast %13 : vector<1x128xf32> to vector<16x128xf32>
      %15 = arith.addf %12, %14 : vector<16x128xf32>
      %cst_14 = arith.constant dense<0.000000e+00> : vector<16xf32>
      %16 = vector.multi_reduction <add>, %15, %cst_14 [1] : vector<16x128xf32> to vector<16xf32>
      %17 = vector.shape_cast %16 : vector<16xf32> to vector<16x1xf32>
      %cst_15 = arith.constant 1.280000e+02 : f32
      %18 = vector.broadcast %cst_15 : f32 to vector<16x1xf32>
      %19 = arith.divf %17, %18 : vector<16x1xf32>
      %20 = vector.broadcast %19 : vector<16x1xf32> to vector<16x128xf32>
      %21 = arith.subf %15, %20 : vector<16x128xf32>
      %22 = arith.mulf %21, %21 : vector<16x128xf32>
      %cst_16 = arith.constant dense<0.000000e+00> : vector<16xf32>
      %23 = vector.multi_reduction <add>, %22, %cst_16 [1] : vector<16x128xf32> to vector<16xf32>
      %24 = vector.shape_cast %23 : vector<16xf32> to vector<16x1xf32>
      %cst_17 = arith.constant 1.280000e+02 : f32
      %25 = vector.broadcast %cst_17 : f32 to vector<16x1xf32>
      %26 = arith.divf %24, %25 : vector<16x1xf32>
      %27 = vector.broadcast %19 : vector<16x1xf32> to vector<16x128xf32>
      %28 = arith.subf %15, %27 : vector<16x128xf32>
      %cst_18 = arith.constant 9.99999974E-6 : f32
      %29 = vector.broadcast %cst_18 : f32 to vector<16x1xf32>
      %30 = arith.addf %26, %29 : vector<16x1xf32>
      %31 = math.rsqrt %30 : vector<16x1xf32>
      %32 = vector.broadcast %31 : vector<16x1xf32> to vector<16x128xf32>
      %33 = arith.mulf %28, %32 : vector<16x128xf32>
      %c0_19 = arith.constant 0 : index
      %c0_20 = arith.constant 0 : index
      %34 = vector.load %arg5[%c0_19, %c0_20] : memref<1x128xf32, #tpu.memory_space<vmem>>, vector<1x128xf32>
      %35 = vector.broadcast %34 : vector<1x128xf32> to vector<16x128xf32>
      %36 = arith.mulf %33, %35 : vector<16x128xf32>
      %c0_21 = arith.constant 0 : index
      %c0_22 = arith.constant 0 : index
      %37 = vector.load %arg6[%c0_21, %c0_22] : memref<1x128xf32, #tpu.memory_space<vmem>>, vector<1x128xf32>
      %38 = vector.broadcast %37 : vector<1x128xf32> to vector<16x128xf32>
      %39 = arith.addf %36, %38 : vector<16x128xf32>
      %c0_23 = arith.constant 0 : index
      %c0_24 = arith.constant 0 : index
      %40 = vector.load %arg7[%c0_23, %c0_24] : memref<16x128xf32, #tpu.memory_space<vmem>>, vector<16x128xf32>
      %41 = arith.addf %40, %39 : vector<16x128xf32>
      %c0_25 = arith.constant 0 : index
      %c0_26 = arith.constant 0 : index
      %42 = vector.load %arg8[%c0_25, %c0_26] : memref<16x128xf32, #tpu.memory_space<vmem>>, vector<16x128xf32>
      tpu.vector_store %arg8[%c0_25, %c0_26], %41 {strides = array<i32>} : memref<16x128xf32, #tpu.memory_space<vmem>>, vector<16x128xf32>,
    } else {
    }
    return
  }
  func.func @transform_0(%arg0: i32, %arg1: i32) -> (i32, i32) {
    %c0_i32 = arith.constant 0 : i32
    return %arg0, %arg1 : i32, i32
  }
  func.func @transform_1(%arg0: i32, %arg1: i32) -> (i32, i32) {
    %c0_i32 = arith.constant 0 : i32
    %c0_i32_0 = arith.constant 0 : i32
    return %arg1, %c0_i32 : i32, i32
  }
  func.func @transform_2(%arg0: i32, %arg1: i32) -> (i32, i32) {
    %c0_i32 = arith.constant 0 : i32
    %c0_i32_0 = arith.constant 0 : i32
    %c0_i32_1 = arith.constant 0 : i32
    return %c0_i32, %c0_i32_0 : i32, i32
  }
  func.func @transform_3(%arg0: i32, %arg1: i32) -> (i32, i32) {
    %c0_i32 = arith.constant 0 : i32
    %c0_i32_0 = arith.constant 0 : i32
    %c0_i32_1 = arith.constant 0 : i32
    return %c0_i32, %c0_i32_0 : i32, i32
  }
  func.func @transform_4(%arg0: i32, %arg1: i32) -> (i32, i32) {
    %c0_i32 = arith.constant 0 : i32
    %c0_i32_0 = arith.constant 0 : i32
    %c0_i32_1 = arith.constant 0 : i32
    return %c0_i32, %c0_i32_0 : i32, i32
  }
  func.func @transform_5(%arg0: i32, %arg1: i32) -> (i32, i32) {
    %c0_i32 = arith.constant 0 : i32
    %c0_i32_0 = arith.constant 0 : i32
    return %arg0, %c0_i32 : i32, i32
  }
  func.func @transform_6(%arg0: i32, %arg1: i32) -> (i32, i32) {
    %c0_i32 = arith.constant 0 : i32
    %c0_i32_0 = arith.constant 0 : i32
    return %arg0, %c0_i32 : i32, i32
  }
}

module attributes {stable_mosaic.version = 11 : i64} {
  func.func @_ln_matmul_kernel(%arg0: i32, %arg1: i32, %arg2: memref<16x128xf32, #tpu.memory_space<vmem>>, %arg3: memref<1x128xf32, #tpu.memory_space<vmem>>, %arg4: memref<1x128xf32, #tpu.memory_space<vmem>>, %arg5: memref<128x512xbf16, #tpu.memory_space<vmem>>, %arg6: memref<1x512xf32, #tpu.memory_space<vmem>>, %arg7: memref<16x512xbf16, #tpu.memory_space<vmem>>, %arg8: memref<16x128xbf16, #tpu.memory_space<vmem>>) attributes {dimension_semantics = [#tpu.dimension_semantics<parallel>, #tpu.dimension_semantics<arbitrary>], iteration_bounds = array<i64: 1, 4>, scalar_prefetch = 0 : i64, scratch_operands = 1 : i64, tpu.core_type = #tpu.core_type<tc>, window_params = [{transform_indices = @transform_0, window_bounds = array<i64: 16, 128>}, {pipeline_mode = #tpu.pipeline_mode<synchronous>, transform_indices = @transform_1, window_bounds = array<i64: 1, 128>}, {pipeline_mode = #tpu.pipeline_mode<synchronous>, transform_indices = @transform_2, window_bounds = array<i64: 1, 128>}, {transform_indices = @transform_3, window_bounds = array<i64: 128, 512>}, {transform_indices = @transform_4, window_bounds = array<i64: 1, 512>}, {transform_indices = @transform_5, window_bounds = array<i64: 16, 512>}]} {
    %c0_i32 = arith.constant 0 : i32
    %0 = arith.cmpi eq, %arg1, %c0_i32 : i32
    %1 = arith.extui %0 : i1 to i32
    %c0_i32_0 = arith.constant 0 : i32
    %2 = arith.cmpi ne, %1, %c0_i32_0 : i32
    scf.if %2 {
      %c0_9 = arith.constant 0 : index
      %c0_10 = arith.constant 0 : index
      %13 = vector.load %arg2[%c0_9, %c0_10] : memref<16x128xf32, #tpu.memory_space<vmem>>, vector<16x128xf32>
      %cst_11 = arith.constant dense<0.000000e+00> : vector<16xf32>
      %14 = vector.multi_reduction <add>, %13, %cst_11 [1] : vector<16x128xf32> to vector<16xf32>
      %15 = vector.shape_cast %14 : vector<16xf32> to vector<16x1xf32>
      %cst_12 = arith.constant 1.280000e+02 : f32
      %16 = vector.broadcast %cst_12 : f32 to vector<16x1xf32>
      %17 = arith.divf %15, %16 : vector<16x1xf32>
      %18 = vector.broadcast %17 : vector<16x1xf32> to vector<16x128xf32>
      %19 = arith.subf %13, %18 : vector<16x128xf32>
      %20 = arith.mulf %19, %19 : vector<16x128xf32>
      %cst_13 = arith.constant dense<0.000000e+00> : vector<16xf32>
      %21 = vector.multi_reduction <add>, %20, %cst_13 [1] : vector<16x128xf32> to vector<16xf32>
      %22 = vector.shape_cast %21 : vector<16xf32> to vector<16x1xf32>
      %cst_14 = arith.constant 1.280000e+02 : f32
      %23 = vector.broadcast %cst_14 : f32 to vector<16x1xf32>
      %24 = arith.divf %22, %23 : vector<16x1xf32>
      %25 = vector.broadcast %17 : vector<16x1xf32> to vector<16x128xf32>
      %26 = arith.subf %13, %25 : vector<16x128xf32>
      %cst_15 = arith.constant 9.99999974E-6 : f32
      %27 = vector.broadcast %cst_15 : f32 to vector<16x1xf32>
      %28 = arith.addf %24, %27 : vector<16x1xf32>
      %29 = math.rsqrt %28 : vector<16x1xf32>
      %30 = vector.broadcast %29 : vector<16x1xf32> to vector<16x128xf32>
      %31 = arith.mulf %26, %30 : vector<16x128xf32>
      %c0_16 = arith.constant 0 : index
      %c0_17 = arith.constant 0 : index
      %32 = vector.load %arg3[%c0_16, %c0_17] : memref<1x128xf32, #tpu.memory_space<vmem>>, vector<1x128xf32>
      %33 = vector.broadcast %32 : vector<1x128xf32> to vector<16x128xf32>
      %34 = arith.mulf %31, %33 : vector<16x128xf32>
      %c0_18 = arith.constant 0 : index
      %c0_19 = arith.constant 0 : index
      %35 = vector.load %arg4[%c0_18, %c0_19] : memref<1x128xf32, #tpu.memory_space<vmem>>, vector<1x128xf32>
      %36 = vector.broadcast %35 : vector<1x128xf32> to vector<16x128xf32>
      %37 = arith.addf %34, %36 : vector<16x128xf32>
      %38 = arith.truncf %37 : vector<16x128xf32> to vector<16x128xbf16>
      %c0_20 = arith.constant 0 : index
      %c0_21 = arith.constant 0 : index
      %39 = vector.load %arg8[%c0_20, %c0_21] : memref<16x128xbf16, #tpu.memory_space<vmem>>, vector<16x128xbf16>
      tpu.vector_store %arg8[%c0_20, %c0_21], %38 {strides = array<i32>} : memref<16x128xbf16, #tpu.memory_space<vmem>>, vector<16x128xbf16>,
    } else {
    }
    %c0 = arith.constant 0 : index
    %c0_1 = arith.constant 0 : index
    %3 = vector.load %arg8[%c0, %c0_1] : memref<16x128xbf16, #tpu.memory_space<vmem>>, vector<16x128xbf16>
    %c0_2 = arith.constant 0 : index
    %c0_3 = arith.constant 0 : index
    %4 = vector.load %arg5[%c0_2, %c0_3] : memref<128x512xbf16, #tpu.memory_space<vmem>>, vector<128x512xbf16>
    %cst = arith.constant dense<0.000000e+00> : vector<16x512xf32>
    %5 = tpu.matmul %3, %4, %cst {dimension_numbers = #tpu.dot_dimension_numbers<[1], [0], [0], [1], [0, 0, 1, 1], [], []>} : vector<16x128xbf16>, vector<128x512xbf16>, vector<16x512xf32> -> vector<16x512xf32>
    %c0_4 = arith.constant 0 : index
    %c0_5 = arith.constant 0 : index
    %6 = vector.load %arg6[%c0_4, %c0_5] : memref<1x512xf32, #tpu.memory_space<vmem>>, vector<1x512xf32>
    %7 = vector.broadcast %6 : vector<1x512xf32> to vector<16x512xf32>
    %8 = arith.addf %5, %7 : vector<16x512xf32>
    %cst_6 = arith.constant 0.000000e+00 : f32
    %9 = vector.broadcast %cst_6 : f32 to vector<16x512xf32>
    %10 = arith.maximumf %8, %9 : vector<16x512xf32>
    %11 = arith.truncf %10 : vector<16x512xf32> to vector<16x512xbf16>
    %c0_7 = arith.constant 0 : index
    %c0_8 = arith.constant 0 : index
    %12 = vector.load %arg7[%c0_7, %c0_8] : memref<16x512xbf16, #tpu.memory_space<vmem>>, vector<16x512xbf16>
    tpu.vector_store %arg7[%c0_7, %c0_8], %11 {strides = array<i32>} : memref<16x512xbf16, #tpu.memory_space<vmem>>, vector<16x512xbf16>,
    return
  }
  func.func @transform_0(%arg0: i32, %arg1: i32) -> (i32, i32) {
    %c0_i32 = arith.constant 0 : i32
    %c0_i32_0 = arith.constant 0 : i32
    return %arg0, %c0_i32 : i32, i32
  }
  func.func @transform_1(%arg0: i32, %arg1: i32) -> (i32, i32) {
    %c0_i32 = arith.constant 0 : i32
    %c0_i32_0 = arith.constant 0 : i32
    %c0_i32_1 = arith.constant 0 : i32
    return %c0_i32, %c0_i32_0 : i32, i32
  }
  func.func @transform_2(%arg0: i32, %arg1: i32) -> (i32, i32) {
    %c0_i32 = arith.constant 0 : i32
    %c0_i32_0 = arith.constant 0 : i32
    %c0_i32_1 = arith.constant 0 : i32
    return %c0_i32, %c0_i32_0 : i32, i32
  }
  func.func @transform_3(%arg0: i32, %arg1: i32) -> (i32, i32) {
    %c0_i32 = arith.constant 0 : i32
    %c0_i32_0 = arith.constant 0 : i32
    return %c0_i32, %arg1 : i32, i32
  }
  func.func @transform_4(%arg0: i32, %arg1: i32) -> (i32, i32) {
    %c0_i32 = arith.constant 0 : i32
    %c0_i32_0 = arith.constant 0 : i32
    return %c0_i32, %arg1 : i32, i32
  }
  func.func @transform_5(%arg0: i32, %arg1: i32) -> (i32, i32) {
    %c0_i32 = arith.constant 0 : i32
    return %arg0, %arg1 : i32, i32
  }
}

module attributes {stable_mosaic.version = 11 : i64} {
  func.func @_matmul_res_kernel(%arg0: i32, %arg1: i32, %arg2: i32, %arg3: memref<16x128xbf16, #tpu.memory_space<vmem>>, %arg4: memref<128x128xbf16, #tpu.memory_space<vmem>>, %arg5: memref<1x128xf32, #tpu.memory_space<vmem>>, %arg6: memref<16x128xf32, #tpu.memory_space<vmem>>, %arg7: memref<16x128xf32, #tpu.memory_space<vmem>>, %arg8: memref<16x128xf32, #tpu.memory_space<vmem>>) attributes {dimension_semantics = [#tpu.dimension_semantics<parallel>, #tpu.dimension_semantics<parallel>, #tpu.dimension_semantics<arbitrary>], iteration_bounds = array<i64: 1, 1, 1>, scalar_prefetch = 0 : i64, scratch_operands = 1 : i64, tpu.core_type = #tpu.core_type<tc>, window_params = [{transform_indices = @transform_0, window_bounds = array<i64: 16, 128>}, {transform_indices = @transform_1, window_bounds = array<i64: 128, 128>}, {transform_indices = @transform_2, window_bounds = array<i64: 1, 128>}, {transform_indices = @transform_3, window_bounds = array<i64: 16, 128>}, {transform_indices = @transform_4, window_bounds = array<i64: 16, 128>}]} {
    %c0_i32 = arith.constant 0 : i32
    %0 = arith.cmpi eq, %arg2, %c0_i32 : i32
    %1 = arith.extui %0 : i1 to i32
    %c0_i32_0 = arith.constant 0 : i32
    %2 = arith.cmpi ne, %1, %c0_i32_0 : i32
    scf.if %2 {
      %cst_10 = arith.constant 0.000000e+00 : f32
      %12 = vector.broadcast %cst_10 : f32 to vector<16x128xf32>
      %c0_11 = arith.constant 0 : index
      %c0_12 = arith.constant 0 : index
      %13 = vector.load %arg8[%c0_11, %c0_12] : memref<16x128xf32, #tpu.memory_space<vmem>>, vector<16x128xf32>
      tpu.vector_store %arg8[%c0_11, %c0_12], %12 {strides = array<i32>} : memref<16x128xf32, #tpu.memory_space<vmem>>, vector<16x128xf32>,
    } else {
    }
    %c0 = arith.constant 0 : index
    %c0_1 = arith.constant 0 : index
    %3 = vector.load %arg8[%c0, %c0_1] : memref<16x128xf32, #tpu.memory_space<vmem>>, vector<16x128xf32>
    %c0_2 = arith.constant 0 : index
    %c0_3 = arith.constant 0 : index
    %4 = vector.load %arg3[%c0_2, %c0_3] : memref<16x128xbf16, #tpu.memory_space<vmem>>, vector<16x128xbf16>
    %c0_4 = arith.constant 0 : index
    %c0_5 = arith.constant 0 : index
    %5 = vector.load %arg4[%c0_4, %c0_5] : memref<128x128xbf16, #tpu.memory_space<vmem>>, vector<128x128xbf16>
    %cst = arith.constant dense<0.000000e+00> : vector<16x128xf32>
    %6 = tpu.matmul %4, %5, %cst {dimension_numbers = #tpu.dot_dimension_numbers<[1], [0], [0], [1], [0, 0, 1, 1], [], []>} : vector<16x128xbf16>, vector<128x128xbf16>, vector<16x128xf32> -> vector<16x128xf32>
    %7 = arith.addf %3, %6 : vector<16x128xf32>
    %c0_6 = arith.constant 0 : index
    %c0_7 = arith.constant 0 : index
    %8 = vector.load %arg8[%c0_6, %c0_7] : memref<16x128xf32, #tpu.memory_space<vmem>>, vector<16x128xf32>
    tpu.vector_store %arg8[%c0_6, %c0_7], %7 {strides = array<i32>} : memref<16x128xf32, #tpu.memory_space<vmem>>, vector<16x128xf32>,
    %c0_i32_8 = arith.constant 0 : i32
    %9 = arith.cmpi eq, %arg2, %c0_i32_8 : i32
    %10 = arith.extui %9 : i1 to i32
    %c0_i32_9 = arith.constant 0 : i32
    %11 = arith.cmpi ne, %10, %c0_i32_9 : i32
    scf.if %11 {
      %c0_10 = arith.constant 0 : index
      %c0_11 = arith.constant 0 : index
      %12 = vector.load %arg8[%c0_10, %c0_11] : memref<16x128xf32, #tpu.memory_space<vmem>>, vector<16x128xf32>
      %c0_12 = arith.constant 0 : index
      %c0_13 = arith.constant 0 : index
      %13 = vector.load %arg5[%c0_12, %c0_13] : memref<1x128xf32, #tpu.memory_space<vmem>>, vector<1x128xf32>
      %14 = vector.broadcast %13 : vector<1x128xf32> to vector<16x128xf32>
      %15 = arith.addf %12, %14 : vector<16x128xf32>
      %c0_14 = arith.constant 0 : index
      %c0_15 = arith.constant 0 : index
      %16 = vector.load %arg6[%c0_14, %c0_15] : memref<16x128xf32, #tpu.memory_space<vmem>>, vector<16x128xf32>
      %17 = arith.addf %15, %16 : vector<16x128xf32>
      %c0_16 = arith.constant 0 : index
      %c0_17 = arith.constant 0 : index
      %18 = vector.load %arg7[%c0_16, %c0_17] : memref<16x128xf32, #tpu.memory_space<vmem>>, vector<16x128xf32>
      tpu.vector_store %arg7[%c0_16, %c0_17], %17 {strides = array<i32>} : memref<16x128xf32, #tpu.memory_space<vmem>>, vector<16x128xf32>,
    } else {
    }
    return
  }
  func.func @transform_0(%arg0: i32, %arg1: i32, %arg2: i32) -> (i32, i32) {
    %c0_i32 = arith.constant 0 : i32
    return %arg0, %arg2 : i32, i32
  }
  func.func @transform_1(%arg0: i32, %arg1: i32, %arg2: i32) -> (i32, i32) {
    %c0_i32 = arith.constant 0 : i32
    return %arg2, %arg1 : i32, i32
  }
  func.func @transform_2(%arg0: i32, %arg1: i32, %arg2: i32) -> (i32, i32) {
    %c0_i32 = arith.constant 0 : i32
    %c0_i32_0 = arith.constant 0 : i32
    return %c0_i32, %arg1 : i32, i32
  }
  func.func @transform_3(%arg0: i32, %arg1: i32, %arg2: i32) -> (i32, i32) {
    %c0_i32 = arith.constant 0 : i32
    return %arg0, %arg1 : i32, i32
  }
  func.func @transform_4(%arg0: i32, %arg1: i32, %arg2: i32) -> (i32, i32) {
    %c0_i32 = arith.constant 0 : i32
    return %arg0, %arg1 : i32, i32
  }
}

module attributes {stable_mosaic.version = 11 : i64} {
  func.func @_matmul_res_kernel(%arg0: i32, %arg1: i32, %arg2: i32, %arg3: memref<16x512xbf16, #tpu.memory_space<vmem>>, %arg4: memref<512x128xbf16, #tpu.memory_space<vmem>>, %arg5: memref<1x128xf32, #tpu.memory_space<vmem>>, %arg6: memref<16x128xf32, #tpu.memory_space<vmem>>, %arg7: memref<16x128xf32, #tpu.memory_space<vmem>>, %arg8: memref<16x128xf32, #tpu.memory_space<vmem>>) attributes {dimension_semantics = [#tpu.dimension_semantics<parallel>, #tpu.dimension_semantics<parallel>, #tpu.dimension_semantics<arbitrary>], iteration_bounds = array<i64: 1, 1, 4>, scalar_prefetch = 0 : i64, scratch_operands = 1 : i64, tpu.core_type = #tpu.core_type<tc>, window_params = [{transform_indices = @transform_0, window_bounds = array<i64: 16, 512>}, {transform_indices = @transform_1, window_bounds = array<i64: 512, 128>}, {transform_indices = @transform_2, window_bounds = array<i64: 1, 128>}, {transform_indices = @transform_3, window_bounds = array<i64: 16, 128>}, {transform_indices = @transform_4, window_bounds = array<i64: 16, 128>}]} {
    %c0_i32 = arith.constant 0 : i32
    %0 = arith.cmpi eq, %arg2, %c0_i32 : i32
    %1 = arith.extui %0 : i1 to i32
    %c0_i32_0 = arith.constant 0 : i32
    %2 = arith.cmpi ne, %1, %c0_i32_0 : i32
    scf.if %2 {
      %cst_9 = arith.constant 0.000000e+00 : f32
      %12 = vector.broadcast %cst_9 : f32 to vector<16x128xf32>
      %c0_10 = arith.constant 0 : index
      %c0_11 = arith.constant 0 : index
      %13 = vector.load %arg8[%c0_10, %c0_11] : memref<16x128xf32, #tpu.memory_space<vmem>>, vector<16x128xf32>
      tpu.vector_store %arg8[%c0_10, %c0_11], %12 {strides = array<i32>} : memref<16x128xf32, #tpu.memory_space<vmem>>, vector<16x128xf32>,
    } else {
    }
    %c0 = arith.constant 0 : index
    %c0_1 = arith.constant 0 : index
    %3 = vector.load %arg8[%c0, %c0_1] : memref<16x128xf32, #tpu.memory_space<vmem>>, vector<16x128xf32>
    %c0_2 = arith.constant 0 : index
    %c0_3 = arith.constant 0 : index
    %4 = vector.load %arg3[%c0_2, %c0_3] : memref<16x512xbf16, #tpu.memory_space<vmem>>, vector<16x512xbf16>
    %c0_4 = arith.constant 0 : index
    %c0_5 = arith.constant 0 : index
    %5 = vector.load %arg4[%c0_4, %c0_5] : memref<512x128xbf16, #tpu.memory_space<vmem>>, vector<512x128xbf16>
    %cst = arith.constant dense<0.000000e+00> : vector<16x128xf32>
    %6 = tpu.matmul %4, %5, %cst {dimension_numbers = #tpu.dot_dimension_numbers<[1], [0], [0], [1], [0, 0, 1, 1], [], []>} : vector<16x512xbf16>, vector<512x128xbf16>, vector<16x128xf32> -> vector<16x128xf32>
    %7 = arith.addf %3, %6 : vector<16x128xf32>
    %c0_6 = arith.constant 0 : index
    %c0_7 = arith.constant 0 : index
    %8 = vector.load %arg8[%c0_6, %c0_7] : memref<16x128xf32, #tpu.memory_space<vmem>>, vector<16x128xf32>
    tpu.vector_store %arg8[%c0_6, %c0_7], %7 {strides = array<i32>} : memref<16x128xf32, #tpu.memory_space<vmem>>, vector<16x128xf32>,
    %c3_i32 = arith.constant 3 : i32
    %9 = arith.cmpi eq, %arg2, %c3_i32 : i32
    %10 = arith.extui %9 : i1 to i32
    %c0_i32_8 = arith.constant 0 : i32
    %11 = arith.cmpi ne, %10, %c0_i32_8 : i32
    scf.if %11 {
      %c0_9 = arith.constant 0 : index
      %c0_10 = arith.constant 0 : index
      %12 = vector.load %arg8[%c0_9, %c0_10] : memref<16x128xf32, #tpu.memory_space<vmem>>, vector<16x128xf32>
      %c0_11 = arith.constant 0 : index
      %c0_12 = arith.constant 0 : index
      %13 = vector.load %arg5[%c0_11, %c0_12] : memref<1x128xf32, #tpu.memory_space<vmem>>, vector<1x128xf32>
      %14 = vector.broadcast %13 : vector<1x128xf32> to vector<16x128xf32>
      %15 = arith.addf %12, %14 : vector<16x128xf32>
      %c0_13 = arith.constant 0 : index
      %c0_14 = arith.constant 0 : index
      %16 = vector.load %arg6[%c0_13, %c0_14] : memref<16x128xf32, #tpu.memory_space<vmem>>, vector<16x128xf32>
      %17 = arith.addf %15, %16 : vector<16x128xf32>
      %c0_15 = arith.constant 0 : index
      %c0_16 = arith.constant 0 : index
      %18 = vector.load %arg7[%c0_15, %c0_16] : memref<16x128xf32, #tpu.memory_space<vmem>>, vector<16x128xf32>
      tpu.vector_store %arg7[%c0_15, %c0_16], %17 {strides = array<i32>} : memref<16x128xf32, #tpu.memory_space<vmem>>, vector<16x128xf32>,
    } else {
    }
    return
  }
  func.func @transform_0(%arg0: i32, %arg1: i32, %arg2: i32) -> (i32, i32) {
    %c0_i32 = arith.constant 0 : i32
    return %arg0, %arg2 : i32, i32
  }
  func.func @transform_1(%arg0: i32, %arg1: i32, %arg2: i32) -> (i32, i32) {
    %c0_i32 = arith.constant 0 : i32
    return %arg2, %arg1 : i32, i32
  }
  func.func @transform_2(%arg0: i32, %arg1: i32, %arg2: i32) -> (i32, i32) {
    %c0_i32 = arith.constant 0 : i32
    %c0_i32_0 = arith.constant 0 : i32
    return %c0_i32, %arg1 : i32, i32
  }
  func.func @transform_3(%arg0: i32, %arg1: i32, %arg2: i32) -> (i32, i32) {
    %c0_i32 = arith.constant 0 : i32
    return %arg0, %arg1 : i32, i32
  }
  func.func @transform_4(%arg0: i32, %arg1: i32, %arg2: i32) -> (i32, i32) {
    %c0_i32 = arith.constant 0 : i32
    return %arg0, %arg1 : i32, i32
  }
}

</mosaic_0001>

<llo_original>
// kernel: layer_decoder_forward.15
$region0: #{layer_decoder_forward.15}
  #allocation0 [shape = 'u32[]', space=smem, size = 0x4, offset = 0x4, fixed_abs, tag = 'smem constant byte address 0x4 - core index']
  #allocation1 [shape = 'u32[72,128]{1,0:T(1,128)}', space=vmem, size = 0x9000, scoped, tag = 'internal scratch']
  #allocation2 [shape = 'bf16[16,128]{1,0:T(8,128)(2,1)}', space=vmem, size = 0x1000, scoped, tag = 'scratch operand']
  %s0 = inlined_call_operand.vmem [shape: f32[16,128], index: 0, kind: input, shape index: {}]
  %s1 = inlined_call_operand.vmem [shape: f32[1,128], index: 1, kind: input, shape index: {}]
  %s2 = inlined_call_operand.vmem [shape: f32[1,128], index: 2, kind: input, shape index: {}]
  %s3 = inlined_call_operand.hbm [shape: bf16[128,256], index: 3, kind: input, shape index: {}]
  %s4 = inlined_call_operand.vmem [shape: f32[1,256], index: 4, kind: input, shape index: {}]
  %s5 = inlined_call_operand.vmem [shape: bf16[16,256], index: 5, kind: output, shape index: {}]
  %s6 = sld [smem:[#allocation0]]
  $region38: #{layer_decoder_forward.15} parent=0
    _
  %s8 = ssub.s32 1, %s6
  %s9 = scalar_select 0, %s8, %s6
  $region1: #{layer_decoder_forward.15} parent=0
    #allocation3 [shape = 'u8[65536]{0}', space=vmem, size = 0x10000, scoped, tag = 'input window, operand 3, single buffered']
    #allocation4 [shape = 's32[1]{0}', space=sflag, size = 0x4, scoped, tag = 'scoped memory for layer_decoder_forward.15']
    %10 = vsyncpa [#allocation4], 0
    // Predicated region
    $region2: #{layer_decoder_forward.15} parent=1 // pred_check
      _
    $region3: #{layer_decoder_forward.15} parent=1 // pred_check_branch
      %12 = sbr.rel (0) target = $region5
    $region4: #{layer_decoder_forward.15} parent=1 // pred_region
      _
    $region5: #{layer_decoder_forward.15} parent=1 // pred_fallthru
      _
    // Predicated region
    $region6: #{layer_decoder_forward.15} parent=1 // pred_check
      _
    $region7: #{layer_decoder_forward.15} parent=1 // pred_check_branch
      %14 = sbr.rel (0) target = $region9
    $region8: #{layer_decoder_forward.15} parent=1 // pred_region
      _
    $region9: #{layer_decoder_forward.15} parent=1 // pred_fallthru
      _
    // Predicated region
    $region10: #{layer_decoder_forward.15} parent=1 // pred_check
      _
    $region11: #{layer_decoder_forward.15} parent=1 // pred_check_branch
      %16 = sbr.rel (0) target = $region13
    $region12: #{layer_decoder_forward.15} parent=1 // pred_region
      _
    $region13: #{layer_decoder_forward.15} parent=1 // pred_fallthru
      _
    // Predicated region
    $region14: #{layer_decoder_forward.15} parent=1 // pred_check
      _
    $region15: #{layer_decoder_forward.15} parent=1 // pred_check_branch
      %18 = sbr.rel (0) target = $region17
    $region16: #{layer_decoder_forward.15} parent=1 // pred_region
      %20 = vsyncadd [#allocation4], 0
      %s21 = sshll.u32 %s3, 4
      %s22 = int_to_ptr.hbm [resolvable:$true] %s21
      %s23 = sshll.u32 [#allocation3], 4
      %s24 = int_to_ptr.vmem [resolvable:$true] %s23
      %29 = dma.hbm_to_vmem [thread:$0]  %s22, 2048, %s24, [#allocation4], 128, 128, 8
    $region17: #{layer_decoder_forward.15} parent=1 // pred_fallthru
      _
    // Predicated region
    $region18: #{layer_decoder_forward.15} parent=1 // pred_check
      _
    $region19: #{layer_decoder_forward.15} parent=1 // pred_check_branch
      %31 = sbr.rel (0) target = $region21
    $region20: #{layer_decoder_forward.15} parent=1 // pred_region
      _
    $region21: #{layer_decoder_forward.15} parent=1 // pred_fallthru
      _
    // Predicated region
    $region22: #{layer_decoder_forward.15} parent=1 // pred_check
      _
    $region23: #{layer_decoder_forward.15} parent=1 // pred_check_branch
      %33 = sbr.rel (0) target = $region25
    $region24: #{layer_decoder_forward.15} parent=1 // pred_region
      %35 = dma.done [#allocation4], 2048
    $region25: #{layer_decoder_forward.15} parent=1 // pred_fallthru
      _
    %p36 = scmp.eq.s32.totalorder 0, 0
    // Predicated region
    $region26: #{layer_decoder_forward.15} parent=1 // pred_check
      %p37 = pneg %p36
    $region27: #{layer_decoder_forward.15} parent=1 // pred_check_branch
      %39 = sbr.rel (%p37) target = $region29
    $region28: #{layer_decoder_forward.15} parent=1 // pred_region
      %v40 = vld [vmem:[%s0] sm:$0xff]
      %v41 = vld [vmem:[%s0 + $0x8] sm:$0xff]
      %v42 = vpack.c.bf16 %v40, %v40
      %v43 = vpack.c.bf16 %v41, %v41
      %44 = vst [vmem:[#allocation2] sm:$0xf] %v42
      %45 = vst [vmem:[#allocation2 + $0x4] sm:$0xf] %v43
    $region29: #{layer_decoder_forward.15} parent=1 // pred_fallthru
      _
    %v46 = vld [vmem:[#allocation2] sm:$0xf]
    %v47 = vld [vmem:[#allocation2 + $0x4] sm:$0xf]
    %v48 = vld [vmem:[#allocation3] sm:$0xff]
    %v49 = vld [vmem:[#allocation3 + $0x8] sm:$0xff]
    %v50 = vld [vmem:[#allocation3 + $0x10] sm:$0xff]
    %v51 = vld [vmem:[#allocation3 + $0x18] sm:$0xff]
    %v52 = vld [vmem:[#allocation3 + $0x20] sm:$0xff]
    %v53 = vld [vmem:[#allocation3 + $0x28] sm:$0xff]
    %v54 = vld [vmem:[#allocation3 + $0x30] sm:$0xff]
    %v55 = vld [vmem:[#allocation3 + $0x38] sm:$0xff]
    %v56 = vld [vmem:[#allocation3 + $0x40] sm:$0xff]
    %v57 = vld [vmem:[#allocation3 + $0x48] sm:$0xff]
    %v58 = vld [vmem:[#allocation3 + $0x50] sm:$0xff]
    %v59 = vld [vmem:[#allocation3 + $0x58] sm:$0xff]
    %v60 = vld [vmem:[#allocation3 + $0x60] sm:$0xff]
    %v61 = vld [vmem:[#allocation3 + $0x68] sm:$0xff]
    %v62 = vld [vmem:[#allocation3 + $0x70] sm:$0xff]
    %v63 = vld [vmem:[#allocation3 + $0x78] sm:$0xff]
    %v64 = vld [vmem:[%s4] sm:$0x3]
    %v66 = vperm.slane %v64, 0
    %v67 = vperm.slane %v64, 1
    %v72 = vunpack.c.l.b16 %v46
    %v73 = vunpack.c.l.b16 %v47
    %v74 = vpack.c.b16 %v73, %v72
    %v92 = vunpack.c.l.b16 %v48
    %v93 = vunpack.c.h.b16 %v48
    %v94 = vunpack.c.l.b16 %v49
    %v95 = vunpack.c.h.b16 %v49
    %v96 = vunpack.c.l.b16 %v50
    %v97 = vunpack.c.h.b16 %v50
    %v98 = vunpack.c.l.b16 %v51
    %v99 = vunpack.c.h.b16 %v51
    %v100 = vunpack.c.l.b16 %v52
    %v101 = vunpack.c.h.b16 %v52
    %v102 = vunpack.c.l.b16 %v53
    %v103 = vunpack.c.h.b16 %v53
    %v104 = vunpack.c.l.b16 %v54
    %v105 = vunpack.c.h.b16 %v54
    %v106 = vunpack.c.l.b16 %v55
    %v107 = vunpack.c.h.b16 %v55
    %v108 = vunpack.c.l.b16 %v56
    %v109 = vunpack.c.h.b16 %v56
    %v110 = vunpack.c.l.b16 %v57
    %v111 = vunpack.c.h.b16 %v57
    %v112 = vunpack.c.l.b16 %v58
    %v113 = vunpack.c.h.b16 %v58
    %v114 = vunpack.c.l.b16 %v59
    %v115 = vunpack.c.h.b16 %v59
    %v116 = vunpack.c.l.b16 %v60
    %v117 = vunpack.c.h.b16 %v60
    %v118 = vunpack.c.l.b16 %v61
    %v119 = vunpack.c.h.b16 %v61
    %v120 = vunpack.c.l.b16 %v62
    %v121 = vunpack.c.h.b16 %v62
    %v122 = vunpack.c.l.b16 %v63
    %v123 = vunpack.c.h.b16 %v63
    %v124 = vpack.c.b16 %v94, %v92
    %v125 = vpack.c.b16 %v95, %v93
    %v126 = vpack.c.b16 %v98, %v96
    %v127 = vpack.c.b16 %v99, %v97
    %v128 = vpack.c.b16 %v102, %v100
    %v129 = vpack.c.b16 %v103, %v101
    %v130 = vpack.c.b16 %v106, %v104
    %v131 = vpack.c.b16 %v107, %v105
    %v132 = vpack.c.b16 %v110, %v108
    %v133 = vpack.c.b16 %v111, %v109
    %v134 = vpack.c.b16 %v114, %v112
    %v135 = vpack.c.b16 %v115, %v113
    %v136 = vpack.c.b16 %v118, %v116
    %v137 = vpack.c.b16 %v119, %v117
    %v138 = vpack.c.b16 %v122, %v120
    %v139 = vpack.c.b16 %v123, %v121
    %156 = vmatpush.bf16.msra.mxu0 %v138
    %157 = vmatpush.bf16.msra.mxu0 %v136
    %158 = vmatpush.bf16.msra.mxu0 %v134
    %159 = vmatpush.bf16.msra.mxu0 %v132
    %160 = vmatpush.bf16.msra.mxu0 %v130
    %161 = vmatpush.bf16.msra.mxu0 %v128
    %162 = vmatpush.bf16.msra.mxu0 %v126
    %163 = vmatpush.bf16.msra.mxu0 %v124
    %164 = vmatmul.bf16.gmra.mxu0 %v74
    %v165 = vpop.f32.mrf.mxu0
    %v166 = vadd.f32 %v66, %v165
    %v167 = vpop.f32.mrf.mxu0
    %v168 = vadd.f32 %v66, %v167
    %169 = vdwg.mxu0
    %170 = vmatpush.bf16.msra.mxu0 %v139
    %171 = vmatpush.bf16.msra.mxu0 %v137
    %172 = vmatpush.bf16.msra.mxu0 %v135
    %173 = vmatpush.bf16.msra.mxu0 %v133
    %174 = vmatpush.bf16.msra.mxu0 %v131
    %175 = vmatpush.bf16.msra.mxu0 %v129
    %176 = vmatpush.bf16.msra.mxu0 %v127
    %177 = vmatpush.bf16.msra.mxu0 %v125
    %178 = vmatmul.bf16.gmra.mxu0 %v74
    %v179 = vpop.f32.mrf.mxu0
    %v180 = vadd.f32 %v67, %v179
    %v181 = vpop.f32.mrf.mxu0
    %v182 = vadd.f32 %v67, %v181
    %183 = vdwg.mxu0
    %v184 = vpack.c.bf16 %v180, %v166
    %v185 = vpack.c.bf16 %v182, %v168
    %186 = vst [vmem:[%s5] sm:$0xff] %v184
    %187 = vst [vmem:[%s5 + $0x8] sm:$0xff] %v185
    // Predicated region
    $region30: #{layer_decoder_forward.15} parent=1 // pred_check
      _
    $region31: #{layer_decoder_forward.15} parent=1 // pred_check_branch
      %189 = sbr.rel (0) target = $region33
    $region32: #{layer_decoder_forward.15} parent=1 // pred_region
      _
    $region33: #{layer_decoder_forward.15} parent=1 // pred_fallthru
      _
    // Predicated region
    $region34: #{layer_decoder_forward.15} parent=1 // pred_check
      _
    $region35: #{layer_decoder_forward.15} parent=1 // pred_check_branch
      %191 = sbr.rel (0) target = $region37
    $region36: #{layer_decoder_forward.15} parent=1 // pred_region
      _
    $region37: #{layer_decoder_forward.15} parent=1 // pred_fallthru
      _
    %192 = vsyncpa [#allocation4], 1

// kernel: layer_decoder_forward.10
$region0: #{layer_decoder_forward.10}
  #allocation0 [shape = 'u32[]', space=smem, size = 0x4, offset = 0x4, fixed_abs, tag = 'smem constant byte address 0x4 - core index']
  #allocation1 [shape = 'u32[72,128]{1,0:T(1,128)}', space=vmem, size = 0x9000, scoped, tag = 'internal scratch']
  #allocation2 [shape = 'bf16[16,128]{1,0:T(8,128)(2,1)}', space=vmem, size = 0x1000, scoped, tag = 'scratch operand']
  %s0 = inlined_call_operand.vmem [shape: f32[16,128], index: 0, kind: input, shape index: {}]
  %s1 = inlined_call_operand.vmem [shape: f32[1,128], index: 1, kind: input, shape index: {}]
  %s2 = inlined_call_operand.vmem [shape: f32[1,128], index: 2, kind: input, shape index: {}]
  %s3 = inlined_call_operand.hbm [shape: bf16[128,128], index: 3, kind: input, shape index: {}]
  %s4 = inlined_call_operand.vmem [shape: f32[1,128], index: 4, kind: input, shape index: {}]
  %s5 = inlined_call_operand.vmem [shape: bf16[16,128], index: 5, kind: output, shape index: {}]
  %s6 = sld [smem:[#allocation0]]
  $region38: #{layer_decoder_forward.10} parent=0
    _
  %s8 = ssub.s32 1, %s6
  %s9 = scalar_select 0, %s8, %s6
  $region1: #{layer_decoder_forward.10} parent=0
    #allocation3 [shape = 'u8[32768]{0}', space=vmem, size = 0x8000, scoped, tag = 'input window, operand 3, single buffered']
    #allocation4 [shape = 's32[1]{0}', space=sflag, size = 0x4, scoped, tag = 'scoped memory for layer_decoder_forward.10']
    %10 = vsyncpa [#allocation4], 0
    // Predicated region
    $region2: #{layer_decoder_forward.10} parent=1 // pred_check
      _
    $region3: #{layer_decoder_forward.10} parent=1 // pred_check_branch
      %12 = sbr.rel (0) target = $region5
    $region4: #{layer_decoder_forward.10} parent=1 // pred_region
      _
    $region5: #{layer_decoder_forward.10} parent=1 // pred_fallthru
      _
    // Predicated region
    $region6: #{layer_decoder_forward.10} parent=1 // pred_check
      _
    $region7: #{layer_decoder_forward.10} parent=1 // pred_check_branch
      %14 = sbr.rel (0) target = $region9
    $region8: #{layer_decoder_forward.10} parent=1 // pred_region
      _
    $region9: #{layer_decoder_forward.10} parent=1 // pred_fallthru
      _
    // Predicated region
    $region10: #{layer_decoder_forward.10} parent=1 // pred_check
      _
    $region11: #{layer_decoder_forward.10} parent=1 // pred_check_branch
      %16 = sbr.rel (0) target = $region13
    $region12: #{layer_decoder_forward.10} parent=1 // pred_region
      _
    $region13: #{layer_decoder_forward.10} parent=1 // pred_fallthru
      _
    // Predicated region
    $region14: #{layer_decoder_forward.10} parent=1 // pred_check
      _
    $region15: #{layer_decoder_forward.10} parent=1 // pred_check_branch
      %18 = sbr.rel (0) target = $region17
    $region16: #{layer_decoder_forward.10} parent=1 // pred_region
      %20 = vsyncadd [#allocation4], 0
      %s21 = sshll.u32 %s3, 4
      %s22 = int_to_ptr.hbm [resolvable:$true] %s21
      %s23 = sshll.u32 [#allocation3], 4
      %s24 = int_to_ptr.vmem [resolvable:$true] %s23
      %29 = dma.hbm_to_vmem [thread:$0]  %s22, 1024, %s24, [#allocation4], 64, 64, 4
    $region17: #{layer_decoder_forward.10} parent=1 // pred_fallthru
      _
    // Predicated region
    $region18: #{layer_decoder_forward.10} parent=1 // pred_check
      _
    $region19: #{layer_decoder_forward.10} parent=1 // pred_check_branch
      %31 = sbr.rel (0) target = $region21
    $region20: #{layer_decoder_forward.10} parent=1 // pred_region
      _
    $region21: #{layer_decoder_forward.10} parent=1 // pred_fallthru
      _
    // Predicated region
    $region22: #{layer_decoder_forward.10} parent=1 // pred_check
      _
    $region23: #{layer_decoder_forward.10} parent=1 // pred_check_branch
      %33 = sbr.rel (0) target = $region25
    $region24: #{layer_decoder_forward.10} parent=1 // pred_region
      %35 = dma.done [#allocation4], 1024
    $region25: #{layer_decoder_forward.10} parent=1 // pred_fallthru
      _
    %p36 = scmp.eq.s32.totalorder 0, 0
    // Predicated region
    $region26: #{layer_decoder_forward.10} parent=1 // pred_check
      %p37 = pneg %p36
    $region27: #{layer_decoder_forward.10} parent=1 // pred_check_branch
      %39 = sbr.rel (%p37) target = $region29
    $region28: #{layer_decoder_forward.10} parent=1 // pred_region
      %v40 = vld [vmem:[%s0] sm:$0xff]
      %v41 = vld [vmem:[%s0 + $0x8] sm:$0xff]
      %42 = vadd.xlane.f32.xlu0 %v40
      %v43 = vpop.xlane.xlu0 %42
      %44 = vadd.xlane.f32.xlu0 %v41
      %v45 = vpop.xlane.xlu0 %44
      %v46 = vrcp.pop 128.0
      %v47 = vmul.f32 128.0, %v46
      %v48 = vsub.f32 1.0, %v47
      %v49 = vmul.f32 %v46, %v48
      %v50 = vadd.f32 %v46, %v49
      %vm51 = vweird.f32 %v46
      %v52 = vsel %vm51, %v46, %v50
      %v53 = vmul.f32 %v43, %v52
      %v54 = vmul.f32 %v45, %v52
      %v55 = vsub.f32 %v40, %v53
      %v56 = vsub.f32 %v41, %v54
      %v57 = vmul.f32 %v55, %v55
      %v58 = vmul.f32 %v56, %v56
      %59 = vadd.xlane.f32.xlu0 %v57
      %v60 = vpop.xlane.xlu0 %59
      %61 = vadd.xlane.f32.xlu0 %v58
      %v62 = vpop.xlane.xlu0 %61
      %v63 = vmul.f32 %v60, %v52
      %v64 = vmul.f32 %v62, %v52
      %v65 = vadd.f32 %v63, 1e-05
      %v66 = vadd.f32 %v64, 1e-05
      %v67 = vrsqrt.pop %v65
      %v68 = vmul.f32 %v67, %v65
      %v69 = vmul.f32 %v68, %v67
      %v70 = vmul.f32 0.5, %v69
      %v71 = vsub.f32 1.5, %v70
      %v72 = vmul.f32 %v67, %v71
      %vm73 = vweird.f32 %v65
      %vm74 = vweird.f32 %v67
      %vm75 = vmor %vm73, %vm74
      %v76 = vsel %vm75, %v67, %v72
      %v77 = vrsqrt.pop %v66
      %v78 = vmul.f32 %v77, %v66
      %v79 = vmul.f32 %v78, %v77
      %v80 = vmul.f32 0.5, %v79
      %v81 = vsub.f32 1.5, %v80
      %v82 = vmul.f32 %v77, %v81
      %vm83 = vweird.f32 %v66
      %vm84 = vweird.f32 %v77
      %vm85 = vmor %vm83, %vm84
      %v86 = vsel %vm85, %v77, %v82
      %v87 = vmul.f32 %v55, %v76
      %v88 = vmul.f32 %v56, %v86
      %v89 = vld [vmem:[%s1] sm:$0x1]
      %v91 = vperm.slane %v89, 0
      %v93 = vmul.f32 %v87, %v91
      %v94 = vmul.f32 %v88, %v91
      %v95 = vld [vmem:[%s2] sm:$0x1]
      %v97 = vperm.slane %v95, 0
      %v99 = vadd.f32 %v93, %v97
      %v100 = vadd.f32 %v94, %v97
      %v101 = vpack.c.bf16 %v99, %v99
      %v102 = vpack.c.bf16 %v100, %v100
      %103 = vst [vmem:[#allocation2] sm:$0xf] %v101
      %104 = vst [vmem:[#allocation2 + $0x4] sm:$0xf] %v102
    $region29: #{layer_decoder_forward.10} parent=1 // pred_fallthru
      _
    %v105 = vld [vmem:[#allocation2] sm:$0xf]
    %v106 = vld [vmem:[#allocation2 + $0x4] sm:$0xf]
    %v107 = vld [vmem:[#allocation3] sm:$0xf]
    %v108 = vld [vmem:[#allocation3 + $0x4] sm:$0xf]
    %v109 = vld [vmem:[#allocation3 + $0x8] sm:$0xf]
    %v110 = vld [vmem:[#allocation3 + $0xc] sm:$0xf]
    %v111 = vld [vmem:[#allocation3 + $0x10] sm:$0xf]
    %v112 = vld [vmem:[#allocation3 + $0x14] sm:$0xf]
    %v113 = vld [vmem:[#allocation3 + $0x18] sm:$0xf]
    %v114 = vld [vmem:[#allocation3 + $0x1c] sm:$0xf]
    %v115 = vld [vmem:[#allocation3 + $0x20] sm:$0xf]
    %v116 = vld [vmem:[#allocation3 + $0x24] sm:$0xf]
    %v117 = vld [vmem:[#allocation3 + $0x28] sm:$0xf]
    %v118 = vld [vmem:[#allocation3 + $0x2c] sm:$0xf]
    %v119 = vld [vmem:[#allocation3 + $0x30] sm:$0xf]
    %v120 = vld [vmem:[#allocation3 + $0x34] sm:$0xf]
    %v121 = vld [vmem:[#allocation3 + $0x38] sm:$0xf]
    %v122 = vld [vmem:[#allocation3 + $0x3c] sm:$0xf]
    %v123 = vld [vmem:[%s4] sm:$0x1]
    %v125 = vperm.slane %v123, 0
    %v129 = vunpack.c.l.b16 %v105
    %v130 = vunpack.c.l.b16 %v106
    %v131 = vpack.c.b16 %v130, %v129
    %v149 = vunpack.c.l.b16 %v107
    %v150 = vunpack.c.l.b16 %v108
    %v151 = vunpack.c.l.b16 %v109
    %v152 = vunpack.c.l.b16 %v110
    %v153 = vunpack.c.l.b16 %v111
    %v154 = vunpack.c.l.b16 %v112
    %v155 = vunpack.c.l.b16 %v113
    %v156 = vunpack.c.l.b16 %v114
    %v157 = vunpack.c.l.b16 %v115
    %v158 = vunpack.c.l.b16 %v116
    %v159 = vunpack.c.l.b16 %v117
    %v160 = vunpack.c.l.b16 %v118
    %v161 = vunpack.c.l.b16 %v119
    %v162 = vunpack.c.l.b16 %v120
    %v163 = vunpack.c.l.b16 %v121
    %v164 = vunpack.c.l.b16 %v122
    %v165 = vpack.c.b16 %v150, %v149
    %v166 = vpack.c.b16 %v152, %v151
    %v167 = vpack.c.b16 %v154, %v153
    %v168 = vpack.c.b16 %v156, %v155
    %v169 = vpack.c.b16 %v158, %v157
    %v170 = vpack.c.b16 %v160, %v159
    %v171 = vpack.c.b16 %v162, %v161
    %v172 = vpack.c.b16 %v164, %v163
    %181 = vmatpush.bf16.msra.mxu0 %v172
    %182 = vmatpush.bf16.msra.mxu0 %v171
    %183 = vmatpush.bf16.msra.mxu0 %v170
    %184 = vmatpush.bf16.msra.mxu0 %v169
    %185 = vmatpush.bf16.msra.mxu0 %v168
    %186 = vmatpush.bf16.msra.mxu0 %v167
    %187 = vmatpush.bf16.msra.mxu0 %v166
    %188 = vmatpush.bf16.msra.mxu0 %v165
    %189 = vmatmul.bf16.gmra.mxu0 %v131
    %v190 = vpop.f32.mrf.mxu0
    %v191 = vadd.f32 %v125, %v190
    %v192 = vpop.f32.mrf.mxu0
    %v193 = vadd.f32 %v125, %v192
    %194 = vdwg.mxu0
    %v195 = vpack.c.bf16 %v191, %v191
    %v196 = vpack.c.bf16 %v193, %v193
    %197 = vst [vmem:[%s5] sm:$0xf] %v195
    %198 = vst [vmem:[%s5 + $0x4] sm:$0xf] %v196
    // Predicated region
    $region30: #{layer_decoder_forward.10} parent=1 // pred_check
      _
    $region31: #{layer_decoder_forward.10} parent=1 // pred_check_branch
      %200 = sbr.rel (0) target = $region33
    $region32: #{layer_decoder_forward.10} parent=1 // pred_region
      _
    $region33: #{layer_decoder_forward.10} parent=1 // pred_fallthru
      _
    // Predicated region
    $region34: #{layer_decoder_forward.10} parent=1 // pred_check
      _
    $region35: #{layer_decoder_forward.10} parent=1 // pred_check_branch
      %202 = sbr.rel (0) target = $region37
    $region36: #{layer_decoder_forward.10} parent=1 // pred_region
      _
    $region37: #{layer_decoder_forward.10} parent=1 // pred_fallthru
      _
    %203 = vsyncpa [#allocation4], 1

// kernel: layer_decoder_forward.11
$region0: #{layer_decoder_forward.11}
  #allocation0 [shape = 'u32[]', space=smem, size = 0x4, offset = 0x4, fixed_abs, tag = 'smem constant byte address 0x4 - core index']
  #allocation1 [shape = 'u32[72,128]{1,0:T(1,128)}', space=vmem, size = 0x9000, scoped, tag = 'internal scratch']
  #allocation2 [shape = 'bf16[16,128]{1,0:T(8,128)(2,1)}', space=vmem, size = 0x1000, scoped, tag = 'scratch operand']
  %s0 = inlined_call_operand.vmem [shape: f32[16,128], index: 0, kind: input, shape index: {}]
  %s1 = inlined_call_operand.vmem [shape: f32[1,128], index: 1, kind: input, shape index: {}]
  %s2 = inlined_call_operand.vmem [shape: f32[1,128], index: 2, kind: input, shape index: {}]
  %s3 = inlined_call_operand.hbm [shape: bf16[128,256], index: 3, kind: input, shape index: {}]
  %s4 = inlined_call_operand.vmem [shape: f32[1,256], index: 4, kind: input, shape index: {}]
  %s5 = inlined_call_operand.vmem [shape: bf16[16,256], index: 5, kind: output, shape index: {}]
  %s6 = sld [smem:[#allocation0]]
  $region38: #{layer_decoder_forward.11} parent=0
    _
  %s8 = ssub.s32 1, %s6
  %s9 = scalar_select 0, %s8, %s6
  $region1: #{layer_decoder_forward.11} parent=0
    #allocation3 [shape = 'u8[65536]{0}', space=vmem, size = 0x10000, scoped, tag = 'input window, operand 3, single buffered']
    #allocation4 [shape = 's32[1]{0}', space=sflag, size = 0x4, scoped, tag = 'scoped memory for layer_decoder_forward.11']
    %10 = vsyncpa [#allocation4], 0
    // Predicated region
    $region2: #{layer_decoder_forward.11} parent=1 // pred_check
      _
    $region3: #{layer_decoder_forward.11} parent=1 // pred_check_branch
      %12 = sbr.rel (0) target = $region5
    $region4: #{layer_decoder_forward.11} parent=1 // pred_region
      _
    $region5: #{layer_decoder_forward.11} parent=1 // pred_fallthru
      _
    // Predicated region
    $region6: #{layer_decoder_forward.11} parent=1 // pred_check
      _
    $region7: #{layer_decoder_forward.11} parent=1 // pred_check_branch
      %14 = sbr.rel (0) target = $region9
    $region8: #{layer_decoder_forward.11} parent=1 // pred_region
      _
    $region9: #{layer_decoder_forward.11} parent=1 // pred_fallthru
      _
    // Predicated region
    $region10: #{layer_decoder_forward.11} parent=1 // pred_check
      _
    $region11: #{layer_decoder_forward.11} parent=1 // pred_check_branch
      %16 = sbr.rel (0) target = $region13
    $region12: #{layer_decoder_forward.11} parent=1 // pred_region
      _
    $region13: #{layer_decoder_forward.11} parent=1 // pred_fallthru
      _
    // Predicated region
    $region14: #{layer_decoder_forward.11} parent=1 // pred_check
      _
    $region15: #{layer_decoder_forward.11} parent=1 // pred_check_branch
      %18 = sbr.rel (0) target = $region17
    $region16: #{layer_decoder_forward.11} parent=1 // pred_region
      %20 = vsyncadd [#allocation4], 0
      %s21 = sshll.u32 %s3, 4
      %s22 = int_to_ptr.hbm [resolvable:$true] %s21
      %s23 = sshll.u32 [#allocation3], 4
      %s24 = int_to_ptr.vmem [resolvable:$true] %s23
      %29 = dma.hbm_to_vmem [thread:$0]  %s22, 2048, %s24, [#allocation4], 128, 128, 8
    $region17: #{layer_decoder_forward.11} parent=1 // pred_fallthru
      _
    // Predicated region
    $region18: #{layer_decoder_forward.11} parent=1 // pred_check
      _
    $region19: #{layer_decoder_forward.11} parent=1 // pred_check_branch
      %31 = sbr.rel (0) target = $region21
    $region20: #{layer_decoder_forward.11} parent=1 // pred_region
      _
    $region21: #{layer_decoder_forward.11} parent=1 // pred_fallthru
      _
    // Predicated region
    $region22: #{layer_decoder_forward.11} parent=1 // pred_check
      _
    $region23: #{layer_decoder_forward.11} parent=1 // pred_check_branch
      %33 = sbr.rel (0) target = $region25
    $region24: #{layer_decoder_forward.11} parent=1 // pred_region
      %35 = dma.done [#allocation4], 2048
    $region25: #{layer_decoder_forward.11} parent=1 // pred_fallthru
      _
    %p36 = scmp.eq.s32.totalorder 0, 0
    // Predicated region
    $region26: #{layer_decoder_forward.11} parent=1 // pred_check
      %p37 = pneg %p36
    $region27: #{layer_decoder_forward.11} parent=1 // pred_check_branch
      %39 = sbr.rel (%p37) target = $region29
    $region28: #{layer_decoder_forward.11} parent=1 // pred_region
      %v40 = vld [vmem:[%s0] sm:$0xff]
      %v41 = vld [vmem:[%s0 + $0x8] sm:$0xff]
      %42 = vadd.xlane.f32.xlu0 %v40
      %v43 = vpop.xlane.xlu0 %42
      %44 = vadd.xlane.f32.xlu0 %v41
      %v45 = vpop.xlane.xlu0 %44
      %v46 = vrcp.pop 128.0
      %v47 = vmul.f32 128.0, %v46
      %v48 = vsub.f32 1.0, %v47
      %v49 = vmul.f32 %v46, %v48
      %v50 = vadd.f32 %v46, %v49
      %vm51 = vweird.f32 %v46
      %v52 = vsel %vm51, %v46, %v50
      %v53 = vmul.f32 %v43, %v52
      %v54 = vmul.f32 %v45, %v52
      %v55 = vsub.f32 %v40, %v53
      %v56 = vsub.f32 %v41, %v54
      %v57 = vmul.f32 %v55, %v55
      %v58 = vmul.f32 %v56, %v56
      %59 = vadd.xlane.f32.xlu0 %v57
      %v60 = vpop.xlane.xlu0 %59
      %61 = vadd.xlane.f32.xlu0 %v58
      %v62 = vpop.xlane.xlu0 %61
      %v63 = vmul.f32 %v60, %v52
      %v64 = vmul.f32 %v62, %v52
      %v65 = vadd.f32 %v63, 1e-05
      %v66 = vadd.f32 %v64, 1e-05
      %v67 = vrsqrt.pop %v65
      %v68 = vmul.f32 %v67, %v65
      %v69 = vmul.f32 %v68, %v67
      %v70 = vmul.f32 0.5, %v69
      %v71 = vsub.f32 1.5, %v70
      %v72 = vmul.f32 %v67, %v71
      %vm73 = vweird.f32 %v65
      %vm74 = vweird.f32 %v67
      %vm75 = vmor %vm73, %vm74
      %v76 = vsel %vm75, %v67, %v72
      %v77 = vrsqrt.pop %v66
      %v78 = vmul.f32 %v77, %v66
      %v79 = vmul.f32 %v78, %v77
      %v80 = vmul.f32 0.5, %v79
      %v81 = vsub.f32 1.5, %v80
      %v82 = vmul.f32 %v77, %v81
      %vm83 = vweird.f32 %v66
      %vm84 = vweird.f32 %v77
      %vm85 = vmor %vm83, %vm84
      %v86 = vsel %vm85, %v77, %v82
      %v87 = vmul.f32 %v55, %v76
      %v88 = vmul.f32 %v56, %v86
      %v89 = vld [vmem:[%s1] sm:$0x1]
      %v91 = vperm.slane %v89, 0
      %v93 = vmul.f32 %v87, %v91
      %v94 = vmul.f32 %v88, %v91
      %v95 = vld [vmem:[%s2] sm:$0x1]
      %v97 = vperm.slane %v95, 0
      %v99 = vadd.f32 %v93, %v97
      %v100 = vadd.f32 %v94, %v97
      %v101 = vpack.c.bf16 %v99, %v99
      %v102 = vpack.c.bf16 %v100, %v100
      %103 = vst [vmem:[#allocation2] sm:$0xf] %v101
      %104 = vst [vmem:[#allocation2 + $0x4] sm:$0xf] %v102
    $region29: #{layer_decoder_forward.11} parent=1 // pred_fallthru
      _
    %v105 = vld [vmem:[#allocation2] sm:$0xf]
    %v106 = vld [vmem:[#allocation2 + $0x4] sm:$0xf]
    %v107 = vld [vmem:[#allocation3] sm:$0xff]
    %v108 = vld [vmem:[#allocation3 + $0x8] sm:$0xff]
    %v109 = vld [vmem:[#allocation3 + $0x10] sm:$0xff]
    %v110 = vld [vmem:[#allocation3 + $0x18] sm:$0xff]
    %v111 = vld [vmem:[#allocation3 + $0x20] sm:$0xff]
    %v112 = vld [vmem:[#allocation3 + $0x28] sm:$0xff]
    %v113 = vld [vmem:[#allocation3 + $0x30] sm:$0xff]
    %v114 = vld [vmem:[#allocation3 + $0x38] sm:$0xff]
    %v115 = vld [vmem:[#allocation3 + $0x40] sm:$0xff]
    %v116 = vld [vmem:[#allocation3 + $0x48] sm:$0xff]
    %v117 = vld [vmem:[#allocation3 + $0x50] sm:$0xff]
    %v118 = vld [vmem:[#allocation3 + $0x58] sm:$0xff]
    %v119 = vld [vmem:[#allocation3 + $0x60] sm:$0xff]
    %v120 = vld [vmem:[#allocation3 + $0x68] sm:$0xff]
    %v121 = vld [vmem:[#allocation3 + $0x70] sm:$0xff]
    %v122 = vld [vmem:[#allocation3 + $0x78] sm:$0xff]
    %v123 = vld [vmem:[%s4] sm:$0x3]
    %v125 = vperm.slane %v123, 0
    %v126 = vperm.slane %v123, 1
    %v131 = vunpack.c.l.b16 %v105
    %v132 = vunpack.c.l.b16 %v106
    %v133 = vpack.c.b16 %v132, %v131
    %v151 = vunpack.c.l.b16 %v107
    %v152 = vunpack.c.h.b16 %v107
    %v153 = vunpack.c.l.b16 %v108
    %v154 = vunpack.c.h.b16 %v108
    %v155 = vunpack.c.l.b16 %v109
    %v156 = vunpack.c.h.b16 %v109
    %v157 = vunpack.c.l.b16 %v110
    %v158 = vunpack.c.h.b16 %v110
    %v159 = vunpack.c.l.b16 %v111
    %v160 = vunpack.c.h.b16 %v111
    %v161 = vunpack.c.l.b16 %v112
    %v162 = vunpack.c.h.b16 %v112
    %v163 = vunpack.c.l.b16 %v113
    %v164 = vunpack.c.h.b16 %v113
    %v165 = vunpack.c.l.b16 %v114
    %v166 = vunpack.c.h.b16 %v114
    %v167 = vunpack.c.l.b16 %v115
    %v168 = vunpack.c.h.b16 %v115
    %v169 = vunpack.c.l.b16 %v116
    %v170 = vunpack.c.h.b16 %v116
    %v171 = vunpack.c.l.b16 %v117
    %v172 = vunpack.c.h.b16 %v117
    %v173 = vunpack.c.l.b16 %v118
    %v174 = vunpack.c.h.b16 %v118
    %v175 = vunpack.c.l.b16 %v119
    %v176 = vunpack.c.h.b16 %v119
    %v177 = vunpack.c.l.b16 %v120
    %v178 = vunpack.c.h.b16 %v120
    %v179 = vunpack.c.l.b16 %v121
    %v180 = vunpack.c.h.b16 %v121
    %v181 = vunpack.c.l.b16 %v122
    %v182 = vunpack.c.h.b16 %v122
    %v183 = vpack.c.b16 %v153, %v151
    %v184 = vpack.c.b16 %v154, %v152
    %v185 = vpack.c.b16 %v157, %v155
    %v186 = vpack.c.b16 %v158, %v156
    %v187 = vpack.c.b16 %v161, %v159
    %v188 = vpack.c.b16 %v162, %v160
    %v189 = vpack.c.b16 %v165, %v163
    %v190 = vpack.c.b16 %v166, %v164
    %v191 = vpack.c.b16 %v169, %v167
    %v192 = vpack.c.b16 %v170, %v168
    %v193 = vpack.c.b16 %v173, %v171
    %v194 = vpack.c.b16 %v174, %v172
    %v195 = vpack.c.b16 %v177, %v175
    %v196 = vpack.c.b16 %v178, %v176
    %v197 = vpack.c.b16 %v181, %v179
    %v198 = vpack.c.b16 %v182, %v180
    %215 = vmatpush.bf16.msra.mxu0 %v197
    %216 = vmatpush.bf16.msra.mxu0 %v195
    %217 = vmatpush.bf16.msra.mxu0 %v193
    %218 = vmatpush.bf16.msra.mxu0 %v191
    %219 = vmatpush.bf16.msra.mxu0 %v189
    %220 = vmatpush.bf16.msra.mxu0 %v187
    %221 = vmatpush.bf16.msra.mxu0 %v185
    %222 = vmatpush.bf16.msra.mxu0 %v183
    %223 = vmatmul.bf16.gmra.mxu0 %v133
    %v224 = vpop.f32.mrf.mxu0
    %v225 = vadd.f32 %v125, %v224
    %v226 = vpop.f32.mrf.mxu0
    %v227 = vadd.f32 %v125, %v226
    %228 = vdwg.mxu0
    %229 = vmatpush.bf16.msra.mxu0 %v198
    %230 = vmatpush.bf16.msra.mxu0 %v196
    %231 = vmatpush.bf16.msra.mxu0 %v194
    %232 = vmatpush.bf16.msra.mxu0 %v192
    %233 = vmatpush.bf16.msra.mxu0 %v190
    %234 = vmatpush.bf16.msra.mxu0 %v188
    %235 = vmatpush.bf16.msra.mxu0 %v186
    %236 = vmatpush.bf16.msra.mxu0 %v184
    %237 = vmatmul.bf16.gmra.mxu0 %v133
    %v238 = vpop.f32.mrf.mxu0
    %v239 = vadd.f32 %v126, %v238
    %v240 = vpop.f32.mrf.mxu0
    %v241 = vadd.f32 %v126, %v240
    %242 = vdwg.mxu0
    %v243 = vpack.c.bf16 %v239, %v225
    %v244 = vpack.c.bf16 %v241, %v227
    %245 = vst [vmem:[%s5] sm:$0xff] %v243
    %246 = vst [vmem:[%s5 + $0x8] sm:$0xff] %v244
    // Predicated region
    $region30: #{layer_decoder_forward.11} parent=1 // pred_check
      _
    $region31: #{layer_decoder_forward.11} parent=1 // pred_check_branch
      %248 = sbr.rel (0) target = $region33
    $region32: #{layer_decoder_forward.11} parent=1 // pred_region
      _
    $region33: #{layer_decoder_forward.11} parent=1 // pred_fallthru
      _
    // Predicated region
    $region34: #{layer_decoder_forward.11} parent=1 // pred_check
      _
    $region35: #{layer_decoder_forward.11} parent=1 // pred_check_branch
      %250 = sbr.rel (0) target = $region37
    $region36: #{layer_decoder_forward.11} parent=1 // pred_region
      _
    $region37: #{layer_decoder_forward.11} parent=1 // pred_fallthru
      _
    %251 = vsyncpa [#allocation4], 1

// kernel: layer_decoder_forward.14
$region0: #{layer_decoder_forward.14}
  #allocation0 [shape = 'u32[]', space=smem, size = 0x4, offset = 0x4, fixed_abs, tag = 'smem constant byte address 0x4 - core index']
  #allocation1 [shape = 'u32[72,128]{1,0:T(1,128)}', space=vmem, size = 0x9000, scoped, tag = 'internal scratch']
  #allocation2 [shape = 'bf16[16,128]{1,0:T(8,128)(2,1)}', space=vmem, size = 0x1000, scoped, tag = 'scratch operand']
  %s0 = inlined_call_operand.vmem [shape: f32[16,128], index: 0, kind: input, shape index: {}]
  %s1 = inlined_call_operand.vmem [shape: f32[1,128], index: 1, kind: input, shape index: {}]
  %s2 = inlined_call_operand.vmem [shape: f32[1,128], index: 2, kind: input, shape index: {}]
  %s3 = inlined_call_operand.hbm [shape: bf16[128,128], index: 3, kind: input, shape index: {}]
  %s4 = inlined_call_operand.hbm [shape: f32[1,128], index: 4, kind: input, shape index: {}]
  %s5 = inlined_call_operand.vmem [shape: bf16[16,128], index: 5, kind: output, shape index: {}]
  %s6 = sld [smem:[#allocation0]]
  $region42: #{layer_decoder_forward.14} parent=0
    _
  %s8 = ssub.s32 1, %s6
  %s9 = scalar_select 0, %s8, %s6
  $region1: #{layer_decoder_forward.14} parent=0
    #allocation3 [shape = 'u8[32768]{0}', space=vmem, size = 0x8000, scoped, tag = 'input window, operand 3, single buffered']
    #allocation4 [shape = 's32[1]{0}', space=sflag, size = 0x4, scoped, tag = 'scoped memory for layer_decoder_forward.14']
    #allocation5 [shape = 'u8[512]{0}', space=vmem, size = 0x400, scoped, tag = 'input window, operand 4, single buffered']
    #allocation6 [shape = 's32[1]{0}', space=sflag, size = 0x4, scoped, tag = 'scoped memory for layer_decoder_forward.14']
    %10 = vsyncpa [#allocation4], 0
    %11 = vsyncpa [#allocation6], 0
    // Predicated region
    $region2: #{layer_decoder_forward.14} parent=1 // pred_check
      _
    $region3: #{layer_decoder_forward.14} parent=1 // pred_check_branch
      %13 = sbr.rel (0) target = $region5
    $region4: #{layer_decoder_forward.14} parent=1 // pred_region
      _
    $region5: #{layer_decoder_forward.14} parent=1 // pred_fallthru
      _
    // Predicated region
    $region6: #{layer_decoder_forward.14} parent=1 // pred_check
      _
    $region7: #{layer_decoder_forward.14} parent=1 // pred_check_branch
      %15 = sbr.rel (0) target = $region9
    $region8: #{layer_decoder_forward.14} parent=1 // pred_region
      _
    $region9: #{layer_decoder_forward.14} parent=1 // pred_fallthru
      _
    // Predicated region
    $region10: #{layer_decoder_forward.14} parent=1 // pred_check
      _
    $region11: #{layer_decoder_forward.14} parent=1 // pred_check_branch
      %17 = sbr.rel (0) target = $region13
    $region12: #{layer_decoder_forward.14} parent=1 // pred_region
      _
    $region13: #{layer_decoder_forward.14} parent=1 // pred_fallthru
      _
    // Predicated region
    $region14: #{layer_decoder_forward.14} parent=1 // pred_check
      _
    $region15: #{layer_decoder_forward.14} parent=1 // pred_check_branch
      %19 = sbr.rel (0) target = $region17
    $region16: #{layer_decoder_forward.14} parent=1 // pred_region
      %21 = vsyncadd [#allocation4], 0
      %s22 = sshll.u32 %s3, 4
      %s23 = int_to_ptr.hbm [resolvable:$true] %s22
      %s24 = sshll.u32 [#allocation3], 4
      %s25 = int_to_ptr.vmem [resolvable:$true] %s24
      %30 = dma.hbm_to_vmem [thread:$0]  %s23, 1024, %s25, [#allocation4], 64, 64, 4
    $region17: #{layer_decoder_forward.14} parent=1 // pred_fallthru
      _
    // Predicated region
    $region18: #{layer_decoder_forward.14} parent=1 // pred_check
      _
    $region19: #{layer_decoder_forward.14} parent=1 // pred_check_branch
      %32 = sbr.rel (0) target = $region21
    $region20: #{layer_decoder_forward.14} parent=1 // pred_region
      %34 = vsyncadd [#allocation6], 0
      %s36 = sshll.u32 %s4, 4
      %s37 = int_to_ptr.hbm [resolvable:$true] %s36
      %s38 = sshll.u32 [#allocation5], 4
      %s39 = int_to_ptr.vmem [resolvable:$true] %s38
      %41 = dma.hbm_to_vmem [thread:$0]  %s37, 16, %s39, [#allocation6]
    $region21: #{layer_decoder_forward.14} parent=1 // pred_fallthru
      _
    // Predicated region
    $region22: #{layer_decoder_forward.14} parent=1 // pred_check
      _
    $region23: #{layer_decoder_forward.14} parent=1 // pred_check_branch
      %43 = sbr.rel (0) target = $region25
    $region24: #{layer_decoder_forward.14} parent=1 // pred_region
      %45 = dma.done [#allocation4], 1024
    $region25: #{layer_decoder_forward.14} parent=1 // pred_fallthru
      _
    // Predicated region
    $region26: #{layer_decoder_forward.14} parent=1 // pred_check
      _
    $region27: #{layer_decoder_forward.14} parent=1 // pred_check_branch
      %47 = sbr.rel (0) target = $region29
    $region28: #{layer_decoder_forward.14} parent=1 // pred_region
      %49 = dma.done [#allocation6], 16
    $region29: #{layer_decoder_forward.14} parent=1 // pred_fallthru
      _
    %p50 = scmp.eq.s32.totalorder 0, 0
    // Predicated region
    $region30: #{layer_decoder_forward.14} parent=1 // pred_check
      %p51 = pneg %p50
    $region31: #{layer_decoder_forward.14} parent=1 // pred_check_branch
      %53 = sbr.rel (%p51) target = $region33
    $region32: #{layer_decoder_forward.14} parent=1 // pred_region
      %v54 = vld [vmem:[%s0] sm:$0xff]
      %v55 = vld [vmem:[%s0 + $0x8] sm:$0xff]
      %56 = vadd.xlane.f32.xlu0 %v54
      %v57 = vpop.xlane.xlu0 %56
      %58 = vadd.xlane.f32.xlu0 %v55
      %v59 = vpop.xlane.xlu0 %58
      %v60 = vrcp.pop 128.0
      %v61 = vmul.f32 128.0, %v60
      %v62 = vsub.f32 1.0, %v61
      %v63 = vmul.f32 %v60, %v62
      %v64 = vadd.f32 %v60, %v63
      %vm65 = vweird.f32 %v60
      %v66 = vsel %vm65, %v60, %v64
      %v67 = vmul.f32 %v57, %v66
      %v68 = vmul.f32 %v59, %v66
      %v69 = vsub.f32 %v54, %v67
      %v70 = vsub.f32 %v55, %v68
      %v71 = vmul.f32 %v69, %v69
      %v72 = vmul.f32 %v70, %v70
      %73 = vadd.xlane.f32.xlu0 %v71
      %v74 = vpop.xlane.xlu0 %73
      %75 = vadd.xlane.f32.xlu0 %v72
      %v76 = vpop.xlane.xlu0 %75
      %v77 = vmul.f32 %v74, %v66
      %v78 = vmul.f32 %v76, %v66
      %v79 = vadd.f32 %v77, 1e-05
      %v80 = vadd.f32 %v78, 1e-05
      %v81 = vrsqrt.pop %v79
      %v82 = vmul.f32 %v81, %v79
      %v83 = vmul.f32 %v82, %v81
      %v84 = vmul.f32 0.5, %v83
      %v85 = vsub.f32 1.5, %v84
      %v86 = vmul.f32 %v81, %v85
      %vm87 = vweird.f32 %v79
      %vm88 = vweird.f32 %v81
      %vm89 = vmor %vm87, %vm88
      %v90 = vsel %vm89, %v81, %v86
      %v91 = vrsqrt.pop %v80
      %v92 = vmul.f32 %v91, %v80
      %v93 = vmul.f32 %v92, %v91
      %v94 = vmul.f32 0.5, %v93
      %v95 = vsub.f32 1.5, %v94
      %v96 = vmul.f32 %v91, %v95
      %vm97 = vweird.f32 %v80
      %vm98 = vweird.f32 %v91
      %vm99 = vmor %vm97, %vm98
      %v100 = vsel %vm99, %v91, %v96
      %v101 = vmul.f32 %v69, %v90
      %v102 = vmul.f32 %v70, %v100
      %v103 = vld [vmem:[%s1] sm:$0x1]
      %v105 = vperm.slane %v103, 0
      %v107 = vmul.f32 %v101, %v105
      %v108 = vmul.f32 %v102, %v105
      %v109 = vld [vmem:[%s2] sm:$0x1]
      %v111 = vperm.slane %v109, 0
      %v113 = vadd.f32 %v107, %v111
      %v114 = vadd.f32 %v108, %v111
      %v115 = vpack.c.bf16 %v113, %v113
      %v116 = vpack.c.bf16 %v114, %v114
      %117 = vst [vmem:[#allocation2] sm:$0xf] %v115
      %118 = vst [vmem:[#allocation2 + $0x4] sm:$0xf] %v116
    $region33: #{layer_decoder_forward.14} parent=1 // pred_fallthru
      _
    %v119 = vld [vmem:[#allocation2] sm:$0xf]
    %v120 = vld [vmem:[#allocation2 + $0x4] sm:$0xf]
    %v121 = vld [vmem:[#allocation3] sm:$0xf]
    %v122 = vld [vmem:[#allocation3 + $0x4] sm:$0xf]
    %v123 = vld [vmem:[#allocation3 + $0x8] sm:$0xf]
    %v124 = vld [vmem:[#allocation3 + $0xc] sm:$0xf]
    %v125 = vld [vmem:[#allocation3 + $0x10] sm:$0xf]
    %v126 = vld [vmem:[#allocation3 + $0x14] sm:$0xf]
    %v127 = vld [vmem:[#allocation3 + $0x18] sm:$0xf]
    %v128 = vld [vmem:[#allocation3 + $0x1c] sm:$0xf]
    %v129 = vld [vmem:[#allocation3 + $0x20] sm:$0xf]
    %v130 = vld [vmem:[#allocation3 + $0x24] sm:$0xf]
    %v131 = vld [vmem:[#allocation3 + $0x28] sm:$0xf]
    %v132 = vld [vmem:[#allocation3 + $0x2c] sm:$0xf]
    %v133 = vld [vmem:[#allocation3 + $0x30] sm:$0xf]
    %v134 = vld [vmem:[#allocation3 + $0x34] sm:$0xf]
    %v135 = vld [vmem:[#allocation3 + $0x38] sm:$0xf]
    %v136 = vld [vmem:[#allocation3 + $0x3c] sm:$0xf]
    %v137 = vld [vmem:[#allocation5] sm:$0x1]
    %v139 = vperm.slane %v137, 0
    %v143 = vunpack.c.l.b16 %v119
    %v144 = vunpack.c.l.b16 %v120
    %v145 = vpack.c.b16 %v144, %v143
    %v163 = vunpack.c.l.b16 %v121
    %v164 = vunpack.c.l.b16 %v122
    %v165 = vunpack.c.l.b16 %v123
    %v166 = vunpack.c.l.b16 %v124
    %v167 = vunpack.c.l.b16 %v125
    %v168 = vunpack.c.l.b16 %v126
    %v169 = vunpack.c.l.b16 %v127
    %v170 = vunpack.c.l.b16 %v128
    %v171 = vunpack.c.l.b16 %v129
    %v172 = vunpack.c.l.b16 %v130
    %v173 = vunpack.c.l.b16 %v131
    %v174 = vunpack.c.l.b16 %v132
    %v175 = vunpack.c.l.b16 %v133
    %v176 = vunpack.c.l.b16 %v134
    %v177 = vunpack.c.l.b16 %v135
    %v178 = vunpack.c.l.b16 %v136
    %v179 = vpack.c.b16 %v164, %v163
    %v180 = vpack.c.b16 %v166, %v165
    %v181 = vpack.c.b16 %v168, %v167
    %v182 = vpack.c.b16 %v170, %v169
    %v183 = vpack.c.b16 %v172, %v171
    %v184 = vpack.c.b16 %v174, %v173
    %v185 = vpack.c.b16 %v176, %v175
    %v186 = vpack.c.b16 %v178, %v177
    %195 = vmatpush.bf16.msra.mxu0 %v186
    %196 = vmatpush.bf16.msra.mxu0 %v185
    %197 = vmatpush.bf16.msra.mxu0 %v184
    %198 = vmatpush.bf16.msra.mxu0 %v183
    %199 = vmatpush.bf16.msra.mxu0 %v182
    %200 = vmatpush.bf16.msra.mxu0 %v181
    %201 = vmatpush.bf16.msra.mxu0 %v180
    %202 = vmatpush.bf16.msra.mxu0 %v179
    %203 = vmatmul.bf16.gmra.mxu0 %v145
    %v204 = vpop.f32.mrf.mxu0
    %v205 = vadd.f32 %v139, %v204
    %v206 = vpop.f32.mrf.mxu0
    %v207 = vadd.f32 %v139, %v206
    %208 = vdwg.mxu0
    %v209 = vpack.c.bf16 %v205, %v205
    %v210 = vpack.c.bf16 %v207, %v207
    %211 = vst [vmem:[%s5] sm:$0xf] %v209
    %212 = vst [vmem:[%s5 + $0x4] sm:$0xf] %v210
    // Predicated region
    $region34: #{layer_decoder_forward.14} parent=1 // pred_check
      _
    $region35: #{layer_decoder_forward.14} parent=1 // pred_check_branch
      %214 = sbr.rel (0) target = $region37
    $region36: #{layer_decoder_forward.14} parent=1 // pred_region
      _
    $region37: #{layer_decoder_forward.14} parent=1 // pred_fallthru
      _
    // Predicated region
    $region38: #{layer_decoder_forward.14} parent=1 // pred_check
      _
    $region39: #{layer_decoder_forward.14} parent=1 // pred_check_branch
      %216 = sbr.rel (0) target = $region41
    $region40: #{layer_decoder_forward.14} parent=1 // pred_region
      _
    $region41: #{layer_decoder_forward.14} parent=1 // pred_fallthru
      _
    %217 = vsyncpa [#allocation4], 1
    %218 = vsyncpa [#allocation6], 1

// kernel: layer_decoder_forward.12
$region0: #{layer_decoder_forward.12}
  #allocation0 [shape = 'u32[]', space=smem, size = 0x4, offset = 0x4, fixed_abs, tag = 'smem constant byte address 0x4 - core index']
  #allocation1 [shape = 'u32[72,128]{1,0:T(1,128)}', space=vmem, size = 0x9000, scoped, tag = 'internal scratch']
  %s0 = inlined_call_operand.vmem [shape: bf16[2,8,128], index: 0, kind: input, shape index: {}]
  %s1 = inlined_call_operand.vmem [shape: bf16[2,8,256], index: 1, kind: input, shape index: {}]
  %s2 = inlined_call_operand.vmem [shape: s8[2,8,8], index: 2, kind: input, shape index: {}]
  %s3 = inlined_call_operand.vmem [shape: bf16[2,8,128], index: 3, kind: output, shape index: {}]
  %s4 = sld [smem:[#allocation0]]
  $region45: #{layer_decoder_forward.12} parent=0
    _
  %s6 = ssub.s32 1, %s4
  %s7 = scalar_select 0, %s6, %s4
  loop: start=0, step=1, limit=4
  $region2: #{layer_decoder_forward.12} parent=0 // loop_pre_header
    _
  $region3: #{layer_decoder_forward.12} parent=0 // loop_header
    %s9 = sphi 0, %s13
    %p10 = scmp.ge.s32.totalorder %s9, 4
    %s16 = sphi 0, %s28
    %s17 = sphi 0, %s24
    %s18 = sphi 0, %s16
    %s19 = sphi 0, %s17
    %s20 = sphi 0, %s18
    %s21 = sphi 0, %s19
    %s33 = sphi 0, %s35
    %s36 = sphi 0, %s33
    %s37 = sphi 0, %s36
    %s53 = sphi 0, %s37
    %s59 = sphi 0, %s61
    %s62 = sphi 0, %s59
    %s63 = sphi 0, %s62
    %s79 = sphi 0, %s63
    %s87 = sphi 0, %s89
    %s90 = sphi 0, %s87
    %s91 = sphi 0, %s90
    %s107 = sphi 0, %s91
    %s115 = sphi 0, %s117
    %s118 = sphi 0, %s115
    %s119 = sphi 0, %s118
    %s135 = sphi 0, %s119
  $region4: #{layer_decoder_forward.12} parent=0 // loop_header_branch
    %12 = sbr.rel (%p10) target = $region8
  $region5: #{layer_decoder_forward.12} parent=0 // loop_body
    %s14 = ssub.s32 %s9, 1
    %s15 = ssub.s32 %s9, 2
    %s22 = sadd.s32 1, %s17
    %p23 = scmp.ge.s32.totalorder %s22, 1
    %s24 = scalar_select %p23, 0, %s22
    %s25 = sadd.s32 1, %s16
    %s26 = scalar_select %p23, %s25, %s16
    %p27 = scmp.ge.s32.totalorder %s26, 2
    %s28 = scalar_select %p27, 0, %s26
    %s29 = ssub.s32 %s16, %s28
    %s30 = ssub.s32 %s17, %s24
    %s31 = sor.u32 %s29, %s30
    %p32 = scmp.eq.s32.totalorder %s31, 0
    %s34 = sadd.s32 %s33, 1
    %s35 = scalar_select %p32, %s33, %s34
    %p38 = pneg %p32
    %p39 = scmp.eq.s32.totalorder %s9, 1
    %p40 = por %p38, %p39
    %p41 = scmp.ne.s32.totalorder %s33, %s36
    %p42 = scmp.eq.s32.totalorder %s9, 0
    %p43 = por %p41, %p42
    %p44 = scmp.ne.s32.totalorder %s33, %s36
    %p45 = scmp.eq.s32.totalorder %s14, 1
    %p46 = por %p44, %p45
    %p47 = scmp.ne.s32.totalorder %s36, %s37
    %p48 = scmp.eq.s32.totalorder %s14, 0
    %p49 = por %p47, %p48
    %p50 = scmp.ne.s32.totalorder %s36, %s37
    %p51 = scmp.eq.s32.totalorder %s15, 1
    %p52 = por %p50, %p51
    %p54 = scmp.ne.s32.totalorder %s37, %s53
    %p55 = scmp.eq.s32.totalorder %s15, 0
    %p56 = por %p54, %p55
    %s57 = ssub.s32 %s16, %s28
    %p58 = scmp.eq.s32.totalorder %s57, 0
    %s60 = sadd.s32 %s59, 1
    %s61 = scalar_select %p58, %s59, %s60
    %p64 = pneg %p58
    %p65 = scmp.eq.s32.totalorder %s9, 1
    %p66 = por %p64, %p65
    %p67 = scmp.ne.s32.totalorder %s59, %s62
    %p68 = scmp.eq.s32.totalorder %s9, 0
    %p69 = por %p67, %p68
    %p70 = scmp.ne.s32.totalorder %s59, %s62
    %p71 = scmp.eq.s32.totalorder %s14, 1
    %p72 = por %p70, %p71
    %p73 = scmp.ne.s32.totalorder %s62, %s63
    %p74 = scmp.eq.s32.totalorder %s14, 0
    %p75 = por %p73, %p74
    %p76 = scmp.ne.s32.totalorder %s62, %s63
    %p77 = scmp.eq.s32.totalorder %s15, 1
    %p78 = por %p76, %p77
    %p80 = scmp.ne.s32.totalorder %s63, %s79
    %p81 = scmp.eq.s32.totalorder %s15, 0
    %p82 = por %p80, %p81
    %s83 = ssub.s32 %s16, %s28
    %s84 = ssub.s32 %s17, %s24
    %s85 = sor.u32 %s83, %s84
    %p86 = scmp.eq.s32.totalorder %s85, 0
    %s88 = sadd.s32 %s87, 1
    %s89 = scalar_select %p86, %s87, %s88
    %p92 = pneg %p86
    %p93 = scmp.eq.s32.totalorder %s9, 1
    %p94 = por %p92, %p93
    %p95 = scmp.ne.s32.totalorder %s87, %s90
    %p96 = scmp.eq.s32.totalorder %s9, 0
    %p97 = por %p95, %p96
    %p98 = scmp.ne.s32.totalorder %s87, %s90
    %p99 = scmp.eq.s32.totalorder %s14, 1
    %p100 = por %p98, %p99
    %p101 = scmp.ne.s32.totalorder %s90, %s91
    %p102 = scmp.eq.s32.totalorder %s14, 0
    %p103 = por %p101, %p102
    %p104 = scmp.ne.s32.totalorder %s90, %s91
    %p105 = scmp.eq.s32.totalorder %s15, 1
    %p106 = por %p104, %p105
    %p108 = scmp.ne.s32.totalorder %s91, %s107
    %p109 = scmp.eq.s32.totalorder %s15, 0
    %p110 = por %p108, %p109
    %s111 = ssub.s32 %s16, %s28
    %s112 = ssub.s32 %s17, %s24
    %s113 = sor.u32 %s111, %s112
    %p114 = scmp.eq.s32.totalorder %s113, 0
    %s116 = sadd.s32 %s115, 1
    %s117 = scalar_select %p114, %s115, %s116
    %p120 = pneg %p114
    %p121 = scmp.eq.s32.totalorder %s9, 1
    %p122 = por %p120, %p121
    %p123 = scmp.ne.s32.totalorder %s115, %s118
    %p124 = scmp.eq.s32.totalorder %s9, 0
    %p125 = por %p123, %p124
    %p126 = scmp.ne.s32.totalorder %s115, %s118
    %p127 = scmp.eq.s32.totalorder %s14, 1
    %p128 = por %p126, %p127
    %p129 = scmp.ne.s32.totalorder %s118, %s119
    %p130 = scmp.eq.s32.totalorder %s14, 0
    %p131 = por %p129, %p130
    %p132 = scmp.ne.s32.totalorder %s118, %s119
    %p133 = scmp.eq.s32.totalorder %s15, 1
    %p134 = por %p132, %p133
    %p136 = scmp.ne.s32.totalorder %s119, %s135
    %p137 = scmp.eq.s32.totalorder %s15, 0
    %p138 = por %p136, %p137
    %p139 = scmp.le.s32.totalorder 1, %s9
    %p140 = scmp.lt.s32.totalorder %s9, 3
    %p141 = pnand %p139, %p140
    %p142 = pneg %p141
    // Predicated region
    $region9: #{layer_decoder_forward.12} parent=5 // pred_check
      _
    $region10: #{layer_decoder_forward.12} parent=5 // pred_check_branch
      %144 = sbr.rel (%p141) target = $region12
    $region11: #{layer_decoder_forward.12} parent=5 // pred_region
      %s145 = ssub.s32 %s9, 1
    $region12: #{layer_decoder_forward.12} parent=5 // pred_fallthru
      _
    %p146 = scmp.lt.s32.totalorder %s9, 2
    // Predicated region
    $region13: #{layer_decoder_forward.12} parent=5 // pred_check
      %p147 = pneg %p146
    $region14: #{layer_decoder_forward.12} parent=5 // pred_check_branch
      %149 = sbr.rel (%p147) target = $region16
    $region15: #{layer_decoder_forward.12} parent=5 // pred_region
      // Predicated region
      $region17: #{layer_decoder_forward.12} parent=15 // pred_check
        %p150 = pneg %p43
      $region18: #{layer_decoder_forward.12} parent=15 // pred_check_branch
        %152 = sbr.rel (%p150) target = $region20
      $region19: #{layer_decoder_forward.12} parent=15 // pred_region
        %p153 = scmp.lt.s32.totalorder %s16, 1
        %s154 = scalar_select %p153, %s16, 1
        %p155 = scmp.lt.s32.totalorder %s17, 0
        %s156 = scalar_select %p155, %s17, 0
        %s157 = sadd.s32 %s156, %s154
        %s158 = smul.addr %s157, 4
        %s159 = scalar_lea.vmem %s0, %s158
      $region20: #{layer_decoder_forward.12} parent=15 // pred_fallthru
        _
      // Predicated region
      $region21: #{layer_decoder_forward.12} parent=15 // pred_check
        %p160 = pneg %p69
      $region22: #{layer_decoder_forward.12} parent=15 // pred_check_branch
        %162 = sbr.rel (%p160) target = $region24
      $region23: #{layer_decoder_forward.12} parent=15 // pred_region
        %p163 = scmp.lt.s32.totalorder %s16, 1
        %s164 = scalar_select %p163, %s16, 1
        %s165 = smul.addr %s164, 2
        %s166 = smul.addr %s165, 4
        %s167 = scalar_lea.vmem %s1, %s166
      $region24: #{layer_decoder_forward.12} parent=15 // pred_fallthru
        _
      // Predicated region
      $region25: #{layer_decoder_forward.12} parent=15 // pred_check
        %p168 = pneg %p97
      $region26: #{layer_decoder_forward.12} parent=15 // pred_check_branch
        %170 = sbr.rel (%p168) target = $region28
      $region27: #{layer_decoder_forward.12} parent=15 // pred_region
        %p171 = scmp.lt.s32.totalorder %s16, 1
        %s172 = scalar_select %p171, %s16, 1
        %p173 = scmp.lt.s32.totalorder %s17, 0
        %s174 = scalar_select %p173, %s17, 0
        %s175 = sadd.s32 %s174, %s172
        %s176 = smul.addr %s175, 2
        %s177 = scalar_lea.vmem %s2, %s176
      $region28: #{layer_decoder_forward.12} parent=15 // pred_fallthru
        _
    $region16: #{layer_decoder_forward.12} parent=5 // pred_fallthru
      _
    %p178 = scmp.le.s32.totalorder 1, %s9
    %p179 = scmp.lt.s32.totalorder %s9, 3
    %p180 = pnand %p178, %p179
    %p181 = pneg %p180
    // Predicated region
    $region29: #{layer_decoder_forward.12} parent=5 // pred_check
      _
    $region30: #{layer_decoder_forward.12} parent=5 // pred_check_branch
      %183 = sbr.rel (%p180) target = $region32
    $region31: #{layer_decoder_forward.12} parent=5 // pred_region
      %s184 = ssub.s32 %s9, 1
      %p185 = scmp.lt.s32.totalorder %s18, 1
      %s186 = scalar_select %p185, %s18, 1
      %p187 = scmp.lt.s32.totalorder %s19, 0
      %s188 = scalar_select %p187, %s19, 0
      %s189 = sadd.s32 %s188, %s186
      %s190 = smul.addr %s189, 4
      %s191 = scalar_lea.vmem %s0, %s190
      %p192 = pneg %p49
      %p193 = pneg %p46
      %p194 = scmp.lt.s32.totalorder %s18, 1
      %s195 = scalar_select %p194, %s18, 1
      %s196 = smul.addr %s195, 2
      %s197 = smul.addr %s196, 4
      %s198 = scalar_lea.vmem %s1, %s197
      %p199 = pneg %p75
      %p200 = pneg %p72
      %p201 = scmp.lt.s32.totalorder %s18, 1
      %s202 = scalar_select %p201, %s18, 1
      %p203 = scmp.lt.s32.totalorder %s19, 0
      %s204 = scalar_select %p203, %s19, 0
      %s205 = sadd.s32 %s204, %s202
      %s206 = smul.addr %s205, 2
      %s207 = scalar_lea.vmem %s2, %s206
      %p208 = pneg %p103
      %p209 = pneg %p100
      %p210 = pneg %p131
      %p211 = pneg %p128
      %p212 = scmp.lt.s32.totalorder %s18, 1
      %s213 = scalar_select %p212, %s18, 1
      %p214 = scmp.lt.s32.totalorder %s19, 0
      %s215 = scalar_select %p214, %s19, 0
      %s216 = sadd.s32 %s215, %s213
      %s217 = smul.addr %s216, 4
      %s218 = scalar_lea.vmem %s3, %s217
      %p219 = scmp.lt.s32.totalorder %s18, 1
      %s220 = scalar_select %p219, %s18, 1
      %p221 = scmp.lt.s32.totalorder %s19, 0
      %s222 = scalar_select %p221, %s19, 0
      %s223 = sadd.s32 %s222, %s220
      %s224 = smul.addr %s223, 4
      %s225 = scalar_lea.vmem %s0, %s224
      %p226 = scmp.lt.s32.totalorder %s18, 1
      %s227 = scalar_select %p226, %s18, 1
      %s228 = smul.addr %s227, 2
      %s229 = smul.addr %s228, 4
      %s230 = scalar_lea.vmem %s1, %s229
      %p231 = scmp.lt.s32.totalorder %s18, 1
      %s232 = scalar_select %p231, %s18, 1
      %p233 = scmp.lt.s32.totalorder %s19, 0
      %s234 = scalar_select %p233, %s19, 0
      %s235 = sadd.s32 %s234, %s232
      %s236 = smul.addr %s235, 2
      %s237 = scalar_lea.vmem %s2, %s236
      %p238 = scmp.lt.s32.totalorder %s18, 1
      %s239 = scalar_select %p238, %s18, 1
      %p240 = scmp.lt.s32.totalorder %s19, 0
      %s241 = scalar_select %p240, %s19, 0
      %s242 = sadd.s32 %s241, %s239
      %s243 = smul.addr %s242, 4
      %s244 = scalar_lea.vmem %s3, %s243
      %v248 = vld [vmem:[%s237] sm:$0x3]
      %vm249 = vnez %v248
      %v250 = vld [vmem:[%s225] sm:$0xf]
      %v251 = vld [vmem:[%s230] sm:$0xf]
      %v252 = vld [vmem:[%s230 + $0x4] sm:$0xf]
      %vm253 = vcmask 261120
      %v255 = vsel %vm253, %v250, 0
      %v258 = vsel %vm253, %v251, 0
      %260 = vmatpush.bf16.xpose.msra.mxu0 0
      %261 = vmatpush.bf16.xpose.msra.mxu0 0
      %262 = vmatpush.bf16.xpose.msra.mxu0 0
      %263 = vmatpush.bf16.xpose.msra.mxu0 0
      %264 = vmatpush.bf16.xpose.msra.mxu0 0
      %265 = vmatpush.bf16.xpose.msra.mxu0 0
      %266 = vmatpush.bf16.xpose.msra.mxu0 0
      %267 = vmatpush.bf16.xpose.msra.mxu0 %v258
      %268 = vmatmul.bf16.gmra.mxu0 %v255
      %v269 = vpop.f32.mrf.mxu0
      %v270 = vadd.f32 0.0, %v269
      %v271 = vpop.f32.mrf.mxu0
      %272 = vdwg.mxu0
      %v273 = vmul.f32 %v270, 0.17677669
      %v274 = vsel %vm249, 16843009, 0
      %v275 = vunpack.c.0.s8 %v274
      %vm276 = vcmp.ne.s32.totalorder %v275, 0
      %v277 = vsel %vm276, %v273, -1e+09
      %vm278 = vcmask 64512
      %v279 = vsel %vm278, %v277, -inf
      %280 = vmax.xlane.f32.xlu0 %v279
      %v281 = vpop.xlane.xlu0 %280
      %v282 = vsub.f32 %v277, %v281
      %v283 = vmul.f32 %v282, 1.442695
      %v284 = vpow.pop %v283
      %v285 = vsel %vm278, %v284, 0.0
      %286 = vadd.xlane.f32.xlu0 %v285
      %v287 = vpop.xlane.xlu0 %286
      %v288 = vrcp.pop %v287
      %v289 = vmul.f32 %v284, %v288
      %v290 = vpack.c.bf16 %v289, %v289
      %v292 = vsel %vm278, %v290, 0
      %vm294 = vcmask 1043456
      %v296 = vsel %vm294, %v252, 0
      %298 = vmatpush.bf16.msra.mxu0 0
      %299 = vmatpush.bf16.msra.mxu0 0
      %300 = vmatpush.bf16.msra.mxu0 0
      %301 = vmatpush.bf16.msra.mxu0 0
      %302 = vmatpush.bf16.msra.mxu0 0
      %303 = vmatpush.bf16.msra.mxu0 0
      %304 = vmatpush.bf16.msra.mxu0 0
      %305 = vmatpush.bf16.msra.mxu0 %v296
      %306 = vmatmul.bf16.gmra.mxu0 %v292
      %v307 = vpop.f32.mrf.mxu0
      %v308 = vadd.f32 0.0, %v307
      %v309 = vpop.f32.mrf.mxu0
      %310 = vdwg.mxu0
      %v311 = vpack.c.bf16 %v308, %v308
      %vm312 = vcmask 257024
      %313 = vst.msk [vmem:[%s244] sm:$0xf] %vm312, %v311
      %v314 = vld [vmem:[%s225] sm:$0xf]
      %v315 = vld [vmem:[%s230] sm:$0xf]
      %v316 = vld [vmem:[%s230 + $0x4] sm:$0xf]
      %v318 = vunpack.c.l.b16 %v314
      %v319 = vpack.c.b16 %v318, %v318
      %320 = vrot.lane.b32.xlu0 %v319, 96
      %v321 = vpop.permute.xlu0 %320
      %v323 = vunpack.c.l.b16 %v315
      %v324 = vpack.c.b16 %v323, %v323
      %325 = vrot.lane.b32.xlu0 %v324, 96
      %v326 = vpop.permute.xlu0 %325
      %v328 = vsel %vm253, %v321, 0
      %v331 = vsel %vm253, %v326, 0
      %333 = vmatpush.bf16.xpose.msra.mxu0 0
      %334 = vmatpush.bf16.xpose.msra.mxu0 0
      %335 = vmatpush.bf16.xpose.msra.mxu0 0
      %336 = vmatpush.bf16.xpose.msra.mxu0 0
      %337 = vmatpush.bf16.xpose.msra.mxu0 0
      %338 = vmatpush.bf16.xpose.msra.mxu0 0
      %339 = vmatpush.bf16.xpose.msra.mxu0 0
      %340 = vmatpush.bf16.xpose.msra.mxu0 %v331
      %341 = vmatmul.bf16.gmra.mxu0 %v328
      %v342 = vpop.f32.mrf.mxu0
      %v343 = vadd.f32 0.0, %v342
      %v344 = vpop.f32.mrf.mxu0
      %345 = vdwg.mxu0
      %v346 = vmul.f32 %v343, 0.17677669
      %v347 = vsel %vm276, %v346, -1e+09
      %v348 = vsel %vm278, %v347, -inf
      %349 = vmax.xlane.f32.xlu0 %v348
      %v350 = vpop.xlane.xlu0 %349
      %v351 = vsub.f32 %v347, %v350
      %v352 = vmul.f32 %v351, 1.442695
      %v353 = vpow.pop %v352
      %v354 = vsel %vm278, %v353, 0.0
      %355 = vadd.xlane.f32.xlu0 %v354
      %v356 = vpop.xlane.xlu0 %355
      %v357 = vrcp.pop %v356
      %v358 = vmul.f32 %v353, %v357
      %v359 = vpack.c.bf16 %v358, %v358
      %v361 = vunpack.c.l.b16 %v316
      %v362 = vpack.c.b16 %v361, %v361
      %363 = vrot.lane.b32.xlu0 %v362, 96
      %v364 = vpop.permute.xlu0 %363
      %v366 = vsel %vm278, %v359, 0
      %v369 = vsel %vm294, %v364, 0
      %371 = vmatpush.bf16.msra.mxu0 0
      %372 = vmatpush.bf16.msra.mxu0 0
      %373 = vmatpush.bf16.msra.mxu0 0
      %374 = vmatpush.bf16.msra.mxu0 0
      %375 = vmatpush.bf16.msra.mxu0 0
      %376 = vmatpush.bf16.msra.mxu0 0
      %377 = vmatpush.bf16.msra.mxu0 0
      %378 = vmatpush.bf16.msra.mxu0 %v369
      %379 = vmatmul.bf16.gmra.mxu0 %v366
      %v380 = vpop.f32.mrf.mxu0
      %v381 = vadd.f32 0.0, %v380
      %v382 = vpop.f32.mrf.mxu0
      %383 = vdwg.mxu0
      %v384 = vpack.c.bf16 %v381, %v381
      %386 = vrot.lane.b32.xlu0 %v384, 32
      %v387 = vpop.permute.xlu0 %386
      %vm389 = vcmask 519424
      %390 = vst.msk [vmem:[%s244] sm:$0xf] %vm389, %v387
      %v391 = vld [vmem:[%s225] sm:$0xf]
      %v392 = vld [vmem:[%s230] sm:$0xf]
      %v393 = vld [vmem:[%s230 + $0x4] sm:$0xf]
      %v395 = vunpack.c.l.b16 %v391
      %v396 = vpack.c.b16 %v395, %v395
      %397 = vrot.lane.b32.xlu0 %v396, 64
      %v398 = vpop.permute.xlu0 %397
      %v400 = vunpack.c.l.b16 %v392
      %v401 = vpack.c.b16 %v400, %v400
      %402 = vrot.lane.b32.xlu0 %v401, 64
      %v403 = vpop.permute.xlu0 %402
      %v405 = vsel %vm253, %v398, 0
      %v408 = vsel %vm253, %v403, 0
      %410 = vmatpush.bf16.xpose.msra.mxu0 0
      %411 = vmatpush.bf16.xpose.msra.mxu0 0
      %412 = vmatpush.bf16.xpose.msra.mxu0 0
      %413 = vmatpush.bf16.xpose.msra.mxu0 0
      %414 = vmatpush.bf16.xpose.msra.mxu0 0
      %415 = vmatpush.bf16.xpose.msra.mxu0 0
      %416 = vmatpush.bf16.xpose.msra.mxu0 0
      %417 = vmatpush.bf16.xpose.msra.mxu0 %v408
      %418 = vmatmul.bf16.gmra.mxu0 %v405
      %v419 = vpop.f32.mrf.mxu0
      %v420 = vadd.f32 0.0, %v419
      %v421 = vpop.f32.mrf.mxu0
      %422 = vdwg.mxu0
      %v423 = vmul.f32 %v420, 0.17677669
      %v424 = vsel %vm276, %v423, -1e+09
      %v425 = vsel %vm278, %v424, -inf
      %426 = vmax.xlane.f32.xlu0 %v425
      %v427 = vpop.xlane.xlu0 %426
      %v428 = vsub.f32 %v424, %v427
      %v429 = vmul.f32 %v428, 1.442695
      %v430 = vpow.pop %v429
      %v431 = vsel %vm278, %v430, 0.0
      %432 = vadd.xlane.f32.xlu0 %v431
      %v433 = vpop.xlane.xlu0 %432
      %v434 = vrcp.pop %v433
      %v435 = vmul.f32 %v430, %v434
      %v436 = vpack.c.bf16 %v435, %v435
      %v438 = vunpack.c.l.b16 %v393
      %v439 = vpack.c.b16 %v438, %v438
      %440 = vrot.lane.b32.xlu0 %v439, 64
      %v441 = vpop.permute.xlu0 %440
      %v443 = vsel %vm278, %v436, 0
      %v446 = vsel %vm294, %v441, 0
      %448 = vmatpush.bf16.msra.mxu0 0
      %449 = vmatpush.bf16.msra.mxu0 0
      %450 = vmatpush.bf16.msra.mxu0 0
      %451 = vmatpush.bf16.msra.mxu0 0
      %452 = vmatpush.bf16.msra.mxu0 0
      %453 = vmatpush.bf16.msra.mxu0 0
      %454 = vmatpush.bf16.msra.mxu0 0
      %455 = vmatpush.bf16.msra.mxu0 %v446
      %456 = vmatmul.bf16.gmra.mxu0 %v443
      %v457 = vpop.f32.mrf.mxu0
      %v458 = vadd.f32 0.0, %v457
      %v459 = vpop.f32.mrf.mxu0
      %460 = vdwg.mxu0
      %v461 = vpack.c.bf16 %v458, %v458
      %463 = vrot.lane.b32.xlu0 %v461, 64
      %v464 = vpop.permute.xlu0 %463
      %vm466 = vcmask 781824
      %467 = vst.msk [vmem:[%s244] sm:$0xf] %vm466, %v464
      %v468 = vld [vmem:[%s225] sm:$0xf]
      %v469 = vld [vmem:[%s230] sm:$0xf]
      %v470 = vld [vmem:[%s230 + $0x4] sm:$0xf]
      %v472 = vunpack.c.l.b16 %v468
      %v473 = vpack.c.b16 %v472, %v472
      %474 = vrot.lane.b32.xlu0 %v473, 32
      %v475 = vpop.permute.xlu0 %474
      %v477 = vunpack.c.l.b16 %v469
      %v478 = vpack.c.b16 %v477, %v477
      %479 = vrot.lane.b32.xlu0 %v478, 32
      %v480 = vpop.permute.xlu0 %479
      %v482 = vsel %vm253, %v475, 0
      %v485 = vsel %vm253, %v480, 0
      %487 = vmatpush.bf16.xpose.msra.mxu0 0
      %488 = vmatpush.bf16.xpose.msra.mxu0 0
      %489 = vmatpush.bf16.xpose.msra.mxu0 0
      %490 = vmatpush.bf16.xpose.msra.mxu0 0
      %491 = vmatpush.bf16.xpose.msra.mxu0 0
      %492 = vmatpush.bf16.xpose.msra.mxu0 0
      %493 = vmatpush.bf16.xpose.msra.mxu0 0
      %494 = vmatpush.bf16.xpose.msra.mxu0 %v485
      %495 = vmatmul.bf16.gmra.mxu0 %v482
      %v496 = vpop.f32.mrf.mxu0
      %v497 = vadd.f32 0.0, %v496
      %v498 = vpop.f32.mrf.mxu0
      %499 = vdwg.mxu0
      %v500 = vmul.f32 %v497, 0.17677669
      %v501 = vsel %vm276, %v500, -1e+09
      %v502 = vsel %vm278, %v501, -inf
      %503 = vmax.xlane.f32.xlu0 %v502
      %v504 = vpop.xlane.xlu0 %503
      %v505 = vsub.f32 %v501, %v504
      %v506 = vmul.f32 %v505, 1.442695
      %v507 = vpow.pop %v506
      %v508 = vsel %vm278, %v507, 0.0
      %509 = vadd.xlane.f32.xlu0 %v508
      %v510 = vpop.xlane.xlu0 %509
      %v511 = vrcp.pop %v510
      %v512 = vmul.f32 %v507, %v511
      %v513 = vpack.c.bf16 %v512, %v512
      %v515 = vunpack.c.l.b16 %v470
      %v516 = vpack.c.b16 %v515, %v515
      %517 = vrot.lane.b32.xlu0 %v516, 32
      %v518 = vpop.permute.xlu0 %517
      %v520 = vsel %vm278, %v513, 0
      %v523 = vsel %vm294, %v518, 0
      %525 = vmatpush.bf16.msra.mxu0 0
      %526 = vmatpush.bf16.msra.mxu0 0
      %527 = vmatpush.bf16.msra.mxu0 0
      %528 = vmatpush.bf16.msra.mxu0 0
      %529 = vmatpush.bf16.msra.mxu0 0
      %530 = vmatpush.bf16.msra.mxu0 0
      %531 = vmatpush.bf16.msra.mxu0 0
      %532 = vmatpush.bf16.msra.mxu0 %v523
      %533 = vmatmul.bf16.gmra.mxu0 %v520
      %v534 = vpop.f32.mrf.mxu0
      %v535 = vadd.f32 0.0, %v534
      %v536 = vpop.f32.mrf.mxu0
      %537 = vdwg.mxu0
      %v538 = vpack.c.bf16 %v535, %v535
      %540 = vrot.lane.b32.xlu0 %v538, 96
      %v541 = vpop.permute.xlu0 %540
      %vm543 = vcmask 1044224
      %544 = vst.msk [vmem:[%s244] sm:$0xf] %vm543, %v541
      %p545 = scmp.lt.s32.totalorder %s18, 1
      %s546 = scalar_select %p545, %s18, 1
      %p547 = scmp.lt.s32.totalorder %s19, 0
      %s548 = scalar_select %p547, %s19, 0
      %s549 = sadd.s32 %s548, %s546
      %s550 = smul.addr %s549, 4
      %s551 = scalar_lea.vmem %s3, %s550
      // Predicated region
      $region33: #{layer_decoder_forward.12} parent=31 // pred_check
        %p552 = pneg %p128
      $region34: #{layer_decoder_forward.12} parent=31 // pred_check_branch
        %554 = sbr.rel (%p552) target = $region36
      $region35: #{layer_decoder_forward.12} parent=31 // pred_region
        _
      $region36: #{layer_decoder_forward.12} parent=31 // pred_fallthru
        _
    $region32: #{layer_decoder_forward.12} parent=5 // pred_fallthru
      _
    %p555 = scmp.le.s32.totalorder 2, %s9
    // Predicated region
    $region37: #{layer_decoder_forward.12} parent=5 // pred_check
      %p556 = pneg %p555
    $region38: #{layer_decoder_forward.12} parent=5 // pred_check_branch
      %558 = sbr.rel (%p556) target = $region40
    $region39: #{layer_decoder_forward.12} parent=5 // pred_region
      %s559 = ssub.s32 %s9, 2
      // Predicated region
      $region41: #{layer_decoder_forward.12} parent=39 // pred_check
        %p560 = pneg %p134
      $region42: #{layer_decoder_forward.12} parent=39 // pred_check_branch
        %562 = sbr.rel (%p560) target = $region44
      $region43: #{layer_decoder_forward.12} parent=39 // pred_region
        %p563 = scmp.lt.s32.totalorder %s20, 1
        %s564 = scalar_select %p563, %s20, 1
        %p565 = scmp.lt.s32.totalorder %s21, 0
        %s566 = scalar_select %p565, %s21, 0
        %s567 = sadd.s32 %s566, %s564
        %s568 = smul.addr %s567, 4
        %s569 = scalar_lea.vmem %s3, %s568
      $region44: #{layer_decoder_forward.12} parent=39 // pred_fallthru
        _
    $region40: #{layer_decoder_forward.12} parent=5 // pred_fallthru
      _
  $region6: #{layer_decoder_forward.12} parent=0 // loop_footer
    %s13 = sadd.s32 1, %s9
  $region7: #{layer_decoder_forward.12} parent=0 // loop_footer_branch
    %8 = sbr.rel target = $region3
  $region8: #{layer_decoder_forward.12} parent=0 // loop_exit
    _

// kernel: layer_decoder_forward.13
$region0: #{layer_decoder_forward.13}
  #allocation0 [shape = 'u32[]', space=smem, size = 0x4, offset = 0x4, fixed_abs, tag = 'smem constant byte address 0x4 - core index']
  #allocation1 [shape = 'u32[72,128]{1,0:T(1,128)}', space=vmem, size = 0x9000, scoped, tag = 'internal scratch']
  #allocation2 [shape = 'f32[16,128]{1,0:T(8,128)}', space=vmem, size = 0x2000, scoped, tag = 'scratch operand']
  %s0 = inlined_call_operand.vmem [shape: bf16[16,128], index: 0, kind: input, shape index: {}]
  %s1 = inlined_call_operand.hbm [shape: bf16[128,128], index: 1, kind: input, shape index: {}]
  %s2 = inlined_call_operand.vmem [shape: f32[1,128], index: 2, kind: input, shape index: {}]
  %s3 = inlined_call_operand.vmem [shape: f32[1,128], index: 3, kind: input, shape index: {}]
  %s4 = inlined_call_operand.vmem [shape: f32[1,128], index: 4, kind: input, shape index: {}]
  %s5 = inlined_call_operand.vmem [shape: f32[16,128], index: 5, kind: input, shape index: {}]
  %s6 = inlined_call_operand.vmem [shape: f32[16,128], index: 6, kind: output, shape index: {}]
  %s7 = sld [smem:[#allocation0]]
  $region46: #{layer_decoder_forward.13} parent=0
    _
  %s9 = ssub.s32 1, %s7
  %s10 = scalar_select 0, %s9, %s7
  $region1: #{layer_decoder_forward.13} parent=0
    #allocation3 [shape = 'u8[32768]{0}', space=vmem, size = 0x8000, scoped, tag = 'input window, operand 1, single buffered']
    #allocation4 [shape = 's32[1]{0}', space=sflag, size = 0x4, scoped, tag = 'scoped memory for layer_decoder_forward.13']
    %11 = vsyncpa [#allocation4], 0
    // Predicated region
    $region2: #{layer_decoder_forward.13} parent=1 // pred_check
      _
    $region3: #{layer_decoder_forward.13} parent=1 // pred_check_branch
      %13 = sbr.rel (0) target = $region5
    $region4: #{layer_decoder_forward.13} parent=1 // pred_region
      _
    $region5: #{layer_decoder_forward.13} parent=1 // pred_fallthru
      _
    // Predicated region
    $region6: #{layer_decoder_forward.13} parent=1 // pred_check
      _
    $region7: #{layer_decoder_forward.13} parent=1 // pred_check_branch
      %15 = sbr.rel (0) target = $region9
    $region8: #{layer_decoder_forward.13} parent=1 // pred_region
      %17 = vsyncadd [#allocation4], 0
      %s18 = sshll.u32 %s1, 4
      %s19 = int_to_ptr.hbm [resolvable:$true] %s18
      %s20 = sshll.u32 [#allocation3], 4
      %s21 = int_to_ptr.vmem [resolvable:$true] %s20
      %26 = dma.hbm_to_vmem [thread:$0]  %s19, 1024, %s21, [#allocation4], 64, 64, 4
    $region9: #{layer_decoder_forward.13} parent=1 // pred_fallthru
      _
    // Predicated region
    $region10: #{layer_decoder_forward.13} parent=1 // pred_check
      _
    $region11: #{layer_decoder_forward.13} parent=1 // pred_check_branch
      %28 = sbr.rel (0) target = $region13
    $region12: #{layer_decoder_forward.13} parent=1 // pred_region
      _
    $region13: #{layer_decoder_forward.13} parent=1 // pred_fallthru
      _
    // Predicated region
    $region14: #{layer_decoder_forward.13} parent=1 // pred_check
      _
    $region15: #{layer_decoder_forward.13} parent=1 // pred_check_branch
      %30 = sbr.rel (0) target = $region17
    $region16: #{layer_decoder_forward.13} parent=1 // pred_region
      _
    $region17: #{layer_decoder_forward.13} parent=1 // pred_fallthru
      _
    // Predicated region
    $region18: #{layer_decoder_forward.13} parent=1 // pred_check
      _
    $region19: #{layer_decoder_forward.13} parent=1 // pred_check_branch
      %32 = sbr.rel (0) target = $region21
    $region20: #{layer_decoder_forward.13} parent=1 // pred_region
      _
    $region21: #{layer_decoder_forward.13} parent=1 // pred_fallthru
      _
    // Predicated region
    $region22: #{layer_decoder_forward.13} parent=1 // pred_check
      _
    $region23: #{layer_decoder_forward.13} parent=1 // pred_check_branch
      %34 = sbr.rel (0) target = $region25
    $region24: #{layer_decoder_forward.13} parent=1 // pred_region
      _
    $region25: #{layer_decoder_forward.13} parent=1 // pred_fallthru
      _
    // Predicated region
    $region26: #{layer_decoder_forward.13} parent=1 // pred_check
      _
    $region27: #{layer_decoder_forward.13} parent=1 // pred_check_branch
      %36 = sbr.rel (0) target = $region29
    $region28: #{layer_decoder_forward.13} parent=1 // pred_region
      %38 = dma.done [#allocation4], 1024
    $region29: #{layer_decoder_forward.13} parent=1 // pred_fallthru
      _
    %p39 = scmp.eq.s32.totalorder 0, 0
    // Predicated region
    $region30: #{layer_decoder_forward.13} parent=1 // pred_check
      %p40 = pneg %p39
    $region31: #{layer_decoder_forward.13} parent=1 // pred_check_branch
      %42 = sbr.rel (%p40) target = $region33
    $region32: #{layer_decoder_forward.13} parent=1 // pred_region
      %43 = vst [vmem:[#allocation2] sm:$0xff] 0.0
      %44 = vst [vmem:[#allocation2 + $0x8] sm:$0xff] 0.0
    $region33: #{layer_decoder_forward.13} parent=1 // pred_fallthru
      _
    %v45 = vld [vmem:[#allocation2] sm:$0xff]
    %v46 = vld [vmem:[#allocation2 + $0x8] sm:$0xff]
    %v47 = vld [vmem:[%s0] sm:$0xf]
    %v48 = vld [vmem:[%s0 + $0x4] sm:$0xf]
    %v49 = vld [vmem:[#allocation3] sm:$0xf]
    %v50 = vld [vmem:[#allocation3 + $0x4] sm:$0xf]
    %v51 = vld [vmem:[#allocation3 + $0x8] sm:$0xf]
    %v52 = vld [vmem:[#allocation3 + $0xc] sm:$0xf]
    %v53 = vld [vmem:[#allocation3 + $0x10] sm:$0xf]
    %v54 = vld [vmem:[#allocation3 + $0x14] sm:$0xf]
    %v55 = vld [vmem:[#allocation3 + $0x18] sm:$0xf]
    %v56 = vld [vmem:[#allocation3 + $0x1c] sm:$0xf]
    %v57 = vld [vmem:[#allocation3 + $0x20] sm:$0xf]
    %v58 = vld [vmem:[#allocation3 + $0x24] sm:$0xf]
    %v59 = vld [vmem:[#allocation3 + $0x28] sm:$0xf]
    %v60 = vld [vmem:[#allocation3 + $0x2c] sm:$0xf]
    %v61 = vld [vmem:[#allocation3 + $0x30] sm:$0xf]
    %v62 = vld [vmem:[#allocation3 + $0x34] sm:$0xf]
    %v63 = vld [vmem:[#allocation3 + $0x38] sm:$0xf]
    %v64 = vld [vmem:[#allocation3 + $0x3c] sm:$0xf]
    %v67 = vunpack.c.l.b16 %v47
    %v68 = vunpack.c.l.b16 %v48
    %v69 = vpack.c.b16 %v68, %v67
    %v87 = vunpack.c.l.b16 %v49
    %v88 = vunpack.c.l.b16 %v50
    %v89 = vunpack.c.l.b16 %v51
    %v90 = vunpack.c.l.b16 %v52
    %v91 = vunpack.c.l.b16 %v53
    %v92 = vunpack.c.l.b16 %v54
    %v93 = vunpack.c.l.b16 %v55
    %v94 = vunpack.c.l.b16 %v56
    %v95 = vunpack.c.l.b16 %v57
    %v96 = vunpack.c.l.b16 %v58
    %v97 = vunpack.c.l.b16 %v59
    %v98 = vunpack.c.l.b16 %v60
    %v99 = vunpack.c.l.b16 %v61
    %v100 = vunpack.c.l.b16 %v62
    %v101 = vunpack.c.l.b16 %v63
    %v102 = vunpack.c.l.b16 %v64
    %v103 = vpack.c.b16 %v88, %v87
    %v104 = vpack.c.b16 %v90, %v89
    %v105 = vpack.c.b16 %v92, %v91
    %v106 = vpack.c.b16 %v94, %v93
    %v107 = vpack.c.b16 %v96, %v95
    %v108 = vpack.c.b16 %v98, %v97
    %v109 = vpack.c.b16 %v100, %v99
    %v110 = vpack.c.b16 %v102, %v101
    %119 = vmatpush.bf16.msra.mxu0 %v110
    %120 = vmatpush.bf16.msra.mxu0 %v109
    %121 = vmatpush.bf16.msra.mxu0 %v108
    %122 = vmatpush.bf16.msra.mxu0 %v107
    %123 = vmatpush.bf16.msra.mxu0 %v106
    %124 = vmatpush.bf16.msra.mxu0 %v105
    %125 = vmatpush.bf16.msra.mxu0 %v104
    %126 = vmatpush.bf16.msra.mxu0 %v103
    %127 = vmatmul.bf16.gmra.mxu0 %v69
    %v128 = vpop.f32.mrf.mxu0
    %v129 = vadd.f32 0.0, %v128
    %v130 = vpop.f32.mrf.mxu0
    %v131 = vadd.f32 0.0, %v130
    %132 = vdwg.mxu0
    %v133 = vadd.f32 %v45, %v129
    %v134 = vadd.f32 %v46, %v131
    %135 = vst [vmem:[#allocation2] sm:$0xff] %v133
    %136 = vst [vmem:[#allocation2 + $0x8] sm:$0xff] %v134
    // Predicated region
    $region34: #{layer_decoder_forward.13} parent=1 // pred_check
      %p137 = pneg %p39
    $region35: #{layer_decoder_forward.13} parent=1 // pred_check_branch
      %139 = sbr.rel (%p137) target = $region37
    $region36: #{layer_decoder_forward.13} parent=1 // pred_region
      %v140 = vld [vmem:[#allocation2] sm:$0xff]
      %v141 = vld [vmem:[#allocation2 + $0x8] sm:$0xff]
      %v142 = vld [vmem:[%s2] sm:$0x1]
      %v144 = vperm.slane %v142, 0
      %v146 = vadd.f32 %v140, %v144
      %v147 = vadd.f32 %v141, %v144
      %148 = vadd.xlane.f32.xlu0 %v146
      %v149 = vpop.xlane.xlu0 %148
      %150 = vadd.xlane.f32.xlu0 %v147
      %v151 = vpop.xlane.xlu0 %150
      %v152 = vrcp.pop 128.0
      %v153 = vmul.f32 128.0, %v152
      %v154 = vsub.f32 1.0, %v153
      %v155 = vmul.f32 %v152, %v154
      %v156 = vadd.f32 %v152, %v155
      %vm157 = vweird.f32 %v152
      %v158 = vsel %vm157, %v152, %v156
      %v159 = vmul.f32 %v149, %v158
      %v160 = vmul.f32 %v151, %v158
      %v161 = vsub.f32 %v146, %v159
      %v162 = vsub.f32 %v147, %v160
      %v163 = vmul.f32 %v161, %v161
      %v164 = vmul.f32 %v162, %v162
      %165 = vadd.xlane.f32.xlu0 %v163
      %v166 = vpop.xlane.xlu0 %165
      %167 = vadd.xlane.f32.xlu0 %v164
      %v168 = vpop.xlane.xlu0 %167
      %v169 = vmul.f32 %v166, %v158
      %v170 = vmul.f32 %v168, %v158
      %v171 = vadd.f32 %v169, 1e-05
      %v172 = vadd.f32 %v170, 1e-05
      %v173 = vrsqrt.pop %v171
      %v174 = vmul.f32 %v173, %v171
      %v175 = vmul.f32 %v174, %v173
      %v176 = vmul.f32 0.5, %v175
      %v177 = vsub.f32 1.5, %v176
      %v178 = vmul.f32 %v173, %v177
      %vm179 = vweird.f32 %v171
      %vm180 = vweird.f32 %v173
      %vm181 = vmor %vm179, %vm180
      %v182 = vsel %vm181, %v173, %v178
      %v183 = vrsqrt.pop %v172
      %v184 = vmul.f32 %v183, %v172
      %v185 = vmul.f32 %v184, %v183
      %v186 = vmul.f32 0.5, %v185
      %v187 = vsub.f32 1.5, %v186
      %v188 = vmul.f32 %v183, %v187
      %vm189 = vweird.f32 %v172
      %vm190 = vweird.f32 %v183
      %vm191 = vmor %vm189, %vm190
      %v192 = vsel %vm191, %v183, %v188
      %v193 = vmul.f32 %v161, %v182
      %v194 = vmul.f32 %v162, %v192
      %v195 = vld [vmem:[%s3] sm:$0x1]
      %v197 = vperm.slane %v195, 0
      %v199 = vmul.f32 %v193, %v197
      %v200 = vmul.f32 %v194, %v197
      %v201 = vld [vmem:[%s4] sm:$0x1]
      %v203 = vperm.slane %v201, 0
      %v205 = vadd.f32 %v199, %v203
      %v206 = vadd.f32 %v200, %v203
      %v207 = vld [vmem:[%s5] sm:$0xff]
      %v208 = vld [vmem:[%s5 + $0x8] sm:$0xff]
      %v209 = vadd.f32 %v207, %v205
      %v210 = vadd.f32 %v208, %v206
      %211 = vst [vmem:[%s6] sm:$0xff] %v209
      %212 = vst [vmem:[%s6 + $0x8] sm:$0xff] %v210
    $region37: #{layer_decoder_forward.13} parent=1 // pred_fallthru
      _
    // Predicated region
    $region38: #{layer_decoder_forward.13} parent=1 // pred_check
      _
    $region39: #{layer_decoder_forward.13} parent=1 // pred_check_branch
      %214 = sbr.rel (0) target = $region41
    $region40: #{layer_decoder_forward.13} parent=1 // pred_region
      _
    $region41: #{layer_decoder_forward.13} parent=1 // pred_fallthru
      _
    // Predicated region
    $region42: #{layer_decoder_forward.13} parent=1 // pred_check
      _
    $region43: #{layer_decoder_forward.13} parent=1 // pred_check_branch
      %216 = sbr.rel (0) target = $region45
    $region44: #{layer_decoder_forward.13} parent=1 // pred_region
      _
    $region45: #{layer_decoder_forward.13} parent=1 // pred_fallthru
      _
    %217 = vsyncpa [#allocation4], 1

// kernel: layer_decoder_forward.18
$region0: #{layer_decoder_forward.18}
  #allocation0 [shape = 'u32[]', space=smem, size = 0x4, offset = 0x4, fixed_abs, tag = 'smem constant byte address 0x4 - core index']
  #allocation1 [shape = 'u32[72,128]{1,0:T(1,128)}', space=vmem, size = 0x9000, scoped, tag = 'internal scratch']
  #allocation2 [shape = 'bf16[16,128]{1,0:T(8,128)(2,1)}', space=vmem, size = 0x1000, scoped, tag = 'scratch operand']
  %s0 = inlined_call_operand.vmem [shape: f32[16,128], index: 0, kind: input, shape index: {}]
  %s1 = inlined_call_operand.vmem [shape: f32[1,128], index: 1, kind: input, shape index: {}]
  %s2 = inlined_call_operand.vmem [shape: f32[1,128], index: 2, kind: input, shape index: {}]
  %s3 = inlined_call_operand.hbm [shape: bf16[128,2048], index: 3, kind: input, shape index: {}]
  %s4 = inlined_call_operand.vmem [shape: f32[1,2048], index: 4, kind: input, shape index: {}]
  %s5 = inlined_call_operand.vmem [shape: bf16[16,2048], index: 5, kind: output, shape index: {}]
  %s6 = sld [smem:[#allocation0]]
  $region80: #{layer_decoder_forward.18} parent=0
    _
  %s8 = ssub.s32 1, %s6
  %s9 = scalar_select 0, %s8, %s6
  $region1: #{layer_decoder_forward.18} parent=0
    #allocation3 [shape = 'u8[262144]{0}', space=vmem, size = 0x40000, scoped, tag = 'input window, operand 3']
    #allocation4 [shape = 's32[2]{0}', space=sflag, size = 0x8, scoped, tag = 'scoped memory for layer_decoder_forward.18']
    #allocation5 [shape = 'u8[32768]{0}', space=vmem, size = 0x8000, scoped, tag = 'output window, operand 0']
    %10 = vsyncpa [#allocation4], 0
    %s11 = scalar_lea.sflag [#allocation4], 1
    %12 = vsyncpa %s11, 0
    loop: start=0, step=1, limit=6
    $region2: #{layer_decoder_forward.18} parent=1 // loop_pre_header
      _
    $region3: #{layer_decoder_forward.18} parent=1 // loop_header
      %s14 = sphi 0, %s18
      %p15 = scmp.ge.s32.totalorder %s14, 6
      %s21 = sphi 0, %s33
      %s22 = sphi 0, %s29
      %s23 = sphi 0, %s21
      %s24 = sphi 0, %s22
      %s25 = sphi 0, %s23
      %s26 = sphi 0, %s24
      %s36 = sphi 0, %s38
      %s39 = sphi 0, %s36
      %s40 = sphi 0, %s39
      %s56 = sphi 0, %s40
      %s60 = sphi 0, %s60
      %s62 = sphi 0, %s60
      %s63 = sphi 0, %s62
      %s77 = sphi 0, %s63
      %s81 = sphi 0, %s81
      %s83 = sphi 0, %s81
      %s84 = sphi 0, %s83
      %s98 = sphi 0, %s84
      %s104 = sphi 0, %s106
      %s107 = sphi 0, %s104
      %s108 = sphi 0, %s107
      %s124 = sphi 0, %s108
      %s130 = sphi 0, %s132
      %s133 = sphi 0, %s130
      %s134 = sphi 0, %s133
      %s150 = sphi 0, %s134
      %s158 = sphi 0, %s160
      %s161 = sphi 0, %s158
      %s162 = sphi 0, %s161
      %s178 = sphi 0, %s162
    $region4: #{layer_decoder_forward.18} parent=1 // loop_header_branch
      %17 = sbr.rel (%p15) target = $region8
    $region5: #{layer_decoder_forward.18} parent=1 // loop_body
      %s19 = ssub.s32 %s14, 1
      %s20 = ssub.s32 %s14, 2
      %s27 = sadd.s32 1, %s22
      %p28 = scmp.ge.s32.totalorder %s27, 4
      %s29 = scalar_select %p28, 0, %s27
      %s30 = sadd.s32 1, %s21
      %s31 = scalar_select %p28, %s30, %s21
      %p32 = scmp.ge.s32.totalorder %s31, 1
      %s33 = scalar_select %p32, 0, %s31
      %s34 = ssub.s32 %s21, %s33
      %p35 = scmp.eq.s32.totalorder %s34, 0
      %s37 = sadd.s32 %s36, 1
      %s38 = scalar_select %p35, %s36, %s37
      %p41 = pneg %p35
      %p42 = scmp.eq.s32.totalorder %s14, 3
      %p43 = por %p41, %p42
      %p44 = scmp.ne.s32.totalorder %s36, %s39
      %p45 = scmp.eq.s32.totalorder %s14, 0
      %p46 = por %p44, %p45
      %p47 = scmp.ne.s32.totalorder %s36, %s39
      %p48 = scmp.eq.s32.totalorder %s19, 3
      %p49 = por %p47, %p48
      %p50 = scmp.ne.s32.totalorder %s39, %s40
      %p51 = scmp.eq.s32.totalorder %s19, 0
      %p52 = por %p50, %p51
      %p53 = scmp.ne.s32.totalorder %s39, %s40
      %p54 = scmp.eq.s32.totalorder %s20, 3
      %p55 = por %p53, %p54
      %p57 = scmp.ne.s32.totalorder %s40, %s56
      %p58 = scmp.eq.s32.totalorder %s20, 0
      %p59 = por %p57, %p58
      %s61 = sadd.s32 %s60, 1
      %p64 = scmp.eq.s32.totalorder %s14, 3
      %p65 = scmp.ne.s32.totalorder %s60, %s62
      %p66 = scmp.eq.s32.totalorder %s14, 0
      %p67 = por %p65, %p66
      %p68 = scmp.ne.s32.totalorder %s60, %s62
      %p69 = scmp.eq.s32.totalorder %s19, 3
      %p70 = por %p68, %p69
      %p71 = scmp.ne.s32.totalorder %s62, %s63
      %p72 = scmp.eq.s32.totalorder %s19, 0
      %p73 = por %p71, %p72
      %p74 = scmp.ne.s32.totalorder %s62, %s63
      %p75 = scmp.eq.s32.totalorder %s20, 3
      %p76 = por %p74, %p75
      %p78 = scmp.ne.s32.totalorder %s63, %s77
      %p79 = scmp.eq.s32.totalorder %s20, 0
      %p80 = por %p78, %p79
      %s82 = sadd.s32 %s81, 1
      %p85 = scmp.eq.s32.totalorder %s14, 3
      %p86 = scmp.ne.s32.totalorder %s81, %s83
      %p87 = scmp.eq.s32.totalorder %s14, 0
      %p88 = por %p86, %p87
      %p89 = scmp.ne.s32.totalorder %s81, %s83
      %p90 = scmp.eq.s32.totalorder %s19, 3
      %p91 = por %p89, %p90
      %p92 = scmp.ne.s32.totalorder %s83, %s84
      %p93 = scmp.eq.s32.totalorder %s19, 0
      %p94 = por %p92, %p93
      %p95 = scmp.ne.s32.totalorder %s83, %s84
      %p96 = scmp.eq.s32.totalorder %s20, 3
      %p97 = por %p95, %p96
      %p99 = scmp.ne.s32.totalorder %s84, %s98
      %p100 = scmp.eq.s32.totalorder %s20, 0
      %p101 = por %p99, %p100
      %s102 = ssub.s32 %s22, %s29
      %p103 = scmp.eq.s32.totalorder %s102, 0
      %s105 = sadd.s32 %s104, 1
      %s106 = scalar_select %p103, %s104, %s105
      %p109 = pneg %p103
      %p110 = scmp.eq.s32.totalorder %s14, 3
      %p111 = por %p109, %p110
      %p112 = scmp.ne.s32.totalorder %s104, %s107
      %p113 = scmp.eq.s32.totalorder %s14, 0
      %p114 = por %p112, %p113
      %p115 = scmp.ne.s32.totalorder %s104, %s107
      %p116 = scmp.eq.s32.totalorder %s19, 3
      %p117 = por %p115, %p116
      %p118 = scmp.ne.s32.totalorder %s107, %s108
      %p119 = scmp.eq.s32.totalorder %s19, 0
      %p120 = por %p118, %p119
      %p121 = scmp.ne.s32.totalorder %s107, %s108
      %p122 = scmp.eq.s32.totalorder %s20, 3
      %p123 = por %p121, %p122
      %p125 = scmp.ne.s32.totalorder %s108, %s124
      %p126 = scmp.eq.s32.totalorder %s20, 0
      %p127 = por %p125, %p126
      %s128 = ssub.s32 %s22, %s29
      %p129 = scmp.eq.s32.totalorder %s128, 0
      %s131 = sadd.s32 %s130, 1
      %s132 = scalar_select %p129, %s130, %s131
      %p135 = pneg %p129
      %p136 = scmp.eq.s32.totalorder %s14, 3
      %p137 = por %p135, %p136
      %p138 = scmp.ne.s32.totalorder %s130, %s133
      %p139 = scmp.eq.s32.totalorder %s14, 0
      %p140 = por %p138, %p139
      %p141 = scmp.ne.s32.totalorder %s130, %s133
      %p142 = scmp.eq.s32.totalorder %s19, 3
      %p143 = por %p141, %p142
      %p144 = scmp.ne.s32.totalorder %s133, %s134
      %p145 = scmp.eq.s32.totalorder %s19, 0
      %p146 = por %p144, %p145
      %p147 = scmp.ne.s32.totalorder %s133, %s134
      %p148 = scmp.eq.s32.totalorder %s20, 3
      %p149 = por %p147, %p148
      %p151 = scmp.ne.s32.totalorder %s134, %s150
      %p152 = scmp.eq.s32.totalorder %s20, 0
      %p153 = por %p151, %p152
      %s154 = ssub.s32 %s21, %s33
      %s155 = ssub.s32 %s22, %s29
      %s156 = sor.u32 %s154, %s155
      %p157 = scmp.eq.s32.totalorder %s156, 0
      %s159 = sadd.s32 %s158, 1
      %s160 = scalar_select %p157, %s158, %s159
      %p163 = pneg %p157
      %p164 = scmp.eq.s32.totalorder %s14, 3
      %p165 = por %p163, %p164
      %p166 = scmp.ne.s32.totalorder %s158, %s161
      %p167 = scmp.eq.s32.totalorder %s14, 0
      %p168 = por %p166, %p167
      %p169 = scmp.ne.s32.totalorder %s158, %s161
      %p170 = scmp.eq.s32.totalorder %s19, 3
      %p171 = por %p169, %p170
      %p172 = scmp.ne.s32.totalorder %s161, %s162
      %p173 = scmp.eq.s32.totalorder %s19, 0
      %p174 = por %p172, %p173
      %p175 = scmp.ne.s32.totalorder %s161, %s162
      %p176 = scmp.eq.s32.totalorder %s20, 3
      %p177 = por %p175, %p176
      %p179 = scmp.ne.s32.totalorder %s162, %s178
      %p180 = scmp.eq.s32.totalorder %s20, 0
      %p181 = por %p179, %p180
      %p182 = scmp.le.s32.totalorder 1, %s14
      %p183 = scmp.lt.s32.totalorder %s14, 5
      %p184 = pnand %p182, %p183
      %p185 = pneg %p184
      // Predicated region
      $region9: #{layer_decoder_forward.18} parent=5 // pred_check
        _
      $region10: #{layer_decoder_forward.18} parent=5 // pred_check_branch
        %187 = sbr.rel (%p184) target = $region12
      $region11: #{layer_decoder_forward.18} parent=5 // pred_region
        %s188 = ssub.s32 %s14, 1
        // Predicated region
        $region13: #{layer_decoder_forward.18} parent=11 // pred_check
          %p189 = pneg %p52
        $region14: #{layer_decoder_forward.18} parent=11 // pred_check_branch
          %191 = sbr.rel (%p189) target = $region16
        $region15: #{layer_decoder_forward.18} parent=11 // pred_region
          %s192 = smul.u32 2, %s23
          %p193 = scmp.lt.s32.totalorder %s192, 1
          %s194 = scalar_select %p193, %s192, 1
          %s195 = smul.addr %s194, 8
          %s196 = scalar_lea.vmem %s0, %s195
          %s197 = smul.u32 2, %s23
        $region16: #{layer_decoder_forward.18} parent=11 // pred_fallthru
          _
        // Predicated region
        $region17: #{layer_decoder_forward.18} parent=11 // pred_check
          %p198 = pneg %p73
        $region18: #{layer_decoder_forward.18} parent=11 // pred_check_branch
          %200 = sbr.rel (%p198) target = $region20
        $region19: #{layer_decoder_forward.18} parent=11 // pred_region
          _
        $region20: #{layer_decoder_forward.18} parent=11 // pred_fallthru
          _
        // Predicated region
        $region21: #{layer_decoder_forward.18} parent=11 // pred_check
          %p201 = pneg %p94
        $region22: #{layer_decoder_forward.18} parent=11 // pred_check_branch
          %203 = sbr.rel (%p201) target = $region24
        $region23: #{layer_decoder_forward.18} parent=11 // pred_region
          _
        $region24: #{layer_decoder_forward.18} parent=11 // pred_fallthru
          _
      $region12: #{layer_decoder_forward.18} parent=5 // pred_fallthru
        _
      %p204 = scmp.lt.s32.totalorder %s14, 4
      // Predicated region
      $region25: #{layer_decoder_forward.18} parent=5 // pred_check
        %p205 = pneg %p204
      $region26: #{layer_decoder_forward.18} parent=5 // pred_check_branch
        %207 = sbr.rel (%p205) target = $region28
      $region27: #{layer_decoder_forward.18} parent=5 // pred_region
        // Predicated region
        $region29: #{layer_decoder_forward.18} parent=27 // pred_check
          %p208 = pneg %p114
        $region30: #{layer_decoder_forward.18} parent=27 // pred_check_branch
          %210 = sbr.rel (%p208) target = $region32
        $region31: #{layer_decoder_forward.18} parent=27 // pred_region
          %s211 = sand.u32 %s104, 1
          %s212 = scalar_lea.sflag [#allocation4], %s211
          %s213 = sand.u32 %s104, 1
          %s214 = smul.addr %s213, 256
          %s215 = scalar_lea.vmem [#allocation3], %s214
          %s216 = smul.u32 4, %s22
          %218 = vsyncadd %s212, 0
          %s219 = smul.addr %s216, 4
          %s220 = scalar_lea.hbm %s3, %s219
          %s221 = sshll.u32 %s220, 4
          %s222 = int_to_ptr.hbm [resolvable:$true] %s221
          %s223 = sshll.u32 %s215, 4
          %s224 = int_to_ptr.vmem [resolvable:$true] %s223
          %229 = dma.hbm_to_vmem [thread:$0]  %s222, 4096, %s224, %s212, 1024, 256, 16
        $region32: #{layer_decoder_forward.18} parent=27 // pred_fallthru
          _
        // Predicated region
        $region33: #{layer_decoder_forward.18} parent=27 // pred_check
          %p230 = pneg %p140
        $region34: #{layer_decoder_forward.18} parent=27 // pred_check_branch
          %232 = sbr.rel (%p230) target = $region36
        $region35: #{layer_decoder_forward.18} parent=27 // pred_region
          %s233 = smul.u32 4, %s22
          %p234 = scmp.lt.s32.totalorder %s233, 15
          %s235 = scalar_select %p234, %s233, 15
          %s236 = scalar_lea.vmem %s4, %s235
          %s237 = smul.u32 4, %s22
        $region36: #{layer_decoder_forward.18} parent=27 // pred_fallthru
          _
      $region28: #{layer_decoder_forward.18} parent=5 // pred_fallthru
        _
      %p238 = scmp.le.s32.totalorder 1, %s14
      %p239 = scmp.lt.s32.totalorder %s14, 5
      %p240 = pnand %p238, %p239
      %p241 = pneg %p240
      // Predicated region
      $region37: #{layer_decoder_forward.18} parent=5 // pred_check
        _
      $region38: #{layer_decoder_forward.18} parent=5 // pred_check_branch
        %243 = sbr.rel (%p240) target = $region40
      $region39: #{layer_decoder_forward.18} parent=5 // pred_region
        %s244 = ssub.s32 %s14, 1
        %s245 = sand.u32 %s107, 1
        %s246 = scalar_lea.sflag [#allocation4], %s245
        %s247 = sand.u32 %s107, 1
        %s248 = smul.addr %s247, 256
        %s249 = scalar_lea.vmem [#allocation3], %s248
        // Predicated region
        $region41: #{layer_decoder_forward.18} parent=39 // pred_check
          %p250 = pneg %p120
        $region42: #{layer_decoder_forward.18} parent=39 // pred_check_branch
          %252 = sbr.rel (%p250) target = $region44
        $region43: #{layer_decoder_forward.18} parent=39 // pred_region
          %254 = dma.done %s246, 4096
        $region44: #{layer_decoder_forward.18} parent=39 // pred_fallthru
          _
        %s255 = smul.u32 2, %s23
        %p256 = scmp.lt.s32.totalorder %s255, 1
        %s257 = scalar_select %p256, %s255, 1
        %s258 = smul.addr %s257, 8
        %s259 = scalar_lea.vmem %s0, %s258
        %p260 = pneg %p52
        %p261 = pneg %p49
        %p262 = pneg %p73
        %p263 = pneg %p70
        %p264 = pneg %p94
        %p265 = pneg %p91
        %s266 = sand.u32 %s107, 1
        %s267 = scalar_lea.sflag [#allocation4], %s266
        %s268 = sand.u32 %s107, 1
        %s269 = smul.addr %s268, 256
        %s270 = scalar_lea.vmem [#allocation3], %s269
        %p271 = pneg %p120
        %p272 = pneg %p117
        %s273 = smul.u32 4, %s24
        %p274 = scmp.lt.s32.totalorder %s273, 15
        %s275 = scalar_select %p274, %s273, 15
        %s276 = scalar_lea.vmem %s4, %s275
        %p277 = pneg %p146
        %p278 = pneg %p143
        %p279 = pneg %p174
        %p280 = pneg %p171
        %s281 = sand.u32 %s161, 1
        %s282 = sand.u32 %s161, 1
        %s283 = smul.addr %s282, 32
        %s284 = scalar_lea.vmem [#allocation5], %s283
        %s285 = smul.u32 2, %s23
        %p286 = scmp.lt.s32.totalorder %s285, 1
        %s287 = scalar_select %p286, %s285, 1
        %s288 = smul.addr %s287, 8
        %s289 = scalar_lea.vmem %s0, %s288
        %s290 = smul.u32 2, %s23
        %s291 = smul.u32 4, %s24
        %s292 = smul.u32 4, %s24
        %p293 = scmp.lt.s32.totalorder %s292, 15
        %s294 = scalar_select %p293, %s292, 15
        %s295 = scalar_lea.vmem %s4, %s294
        %s296 = smul.u32 4, %s24
        %s297 = smul.u32 2, %s23
        %s298 = smul.u32 4, %s24
        %p299 = scmp.eq.s32.totalorder %s24, 0
        // Predicated region
        $region45: #{layer_decoder_forward.18} parent=39 // pred_check
          %p300 = pneg %p299
        $region46: #{layer_decoder_forward.18} parent=39 // pred_check_branch
          %302 = sbr.rel (%p300) target = $region48
        $region47: #{layer_decoder_forward.18} parent=39 // pred_region
          %v303 = vld [vmem:[%s289] sm:$0xff]
          %v304 = vld [vmem:[%s289 + $0x8] sm:$0xff]
          %305 = vadd.xlane.f32.xlu0 %v303
          %v306 = vpop.xlane.xlu0 %305
          %307 = vadd.xlane.f32.xlu0 %v304
          %v308 = vpop.xlane.xlu0 %307
          %v309 = vrcp.pop 128.0
          %v310 = vmul.f32 128.0, %v309
          %v311 = vsub.f32 1.0, %v310
          %v312 = vmul.f32 %v309, %v311
          %v313 = vadd.f32 %v309, %v312
          %vm314 = vweird.f32 %v309
          %v315 = vsel %vm314, %v309, %v313
          %v316 = vmul.f32 %v306, %v315
          %v317 = vmul.f32 %v308, %v315
          %v318 = vsub.f32 %v303, %v316
          %v319 = vsub.f32 %v304, %v317
          %v320 = vmul.f32 %v318, %v318
          %v321 = vmul.f32 %v319, %v319
          %322 = vadd.xlane.f32.xlu0 %v320
          %v323 = vpop.xlane.xlu0 %322
          %324 = vadd.xlane.f32.xlu0 %v321
          %v325 = vpop.xlane.xlu0 %324
          %v326 = vmul.f32 %v323, %v315
          %v327 = vmul.f32 %v325, %v315
          %v328 = vadd.f32 %v326, 1e-05
          %v329 = vadd.f32 %v327, 1e-05
          %v330 = vrsqrt.pop %v328
          %v331 = vmul.f32 %v330, %v328
          %v332 = vmul.f32 %v331, %v330
          %v333 = vmul.f32 0.5, %v332
          %v334 = vsub.f32 1.5, %v333
          %v335 = vmul.f32 %v330, %v334
          %vm336 = vweird.f32 %v328
          %vm337 = vweird.f32 %v330
          %vm338 = vmor %vm336, %vm337
          %v339 = vsel %vm338, %v330, %v335
          %v340 = vrsqrt.pop %v329
          %v341 = vmul.f32 %v340, %v329
          %v342 = vmul.f32 %v341, %v340
          %v343 = vmul.f32 0.5, %v342
          %v344 = vsub.f32 1.5, %v343
          %v345 = vmul.f32 %v340, %v344
          %vm346 = vweird.f32 %v329
          %vm347 = vweird.f32 %v340
          %vm348 = vmor %vm346, %vm347
          %v349 = vsel %vm348, %v340, %v345
          %v350 = vmul.f32 %v318, %v339
          %v351 = vmul.f32 %v319, %v349
          %v352 = vld [vmem:[%s1] sm:$0x1]
          %v354 = vperm.slane %v352, 0
          %v356 = vmul.f32 %v350, %v354
          %v357 = vmul.f32 %v351, %v354
          %v358 = vld [vmem:[%s2] sm:$0x1]
          %v360 = vperm.slane %v358, 0
          %v362 = vadd.f32 %v356, %v360
          %v363 = vadd.f32 %v357, %v360
          %v364 = vpack.c.bf16 %v362, %v362
          %v365 = vpack.c.bf16 %v363, %v363
          %366 = vst [vmem:[#allocation2] sm:$0xf] %v364
          %367 = vst [vmem:[#allocation2 + $0x4] sm:$0xf] %v365
        $region48: #{layer_decoder_forward.18} parent=39 // pred_fallthru
          _
        %v368 = vld [vmem:[#allocation2] sm:$0xf]
        %v369 = vld [vmem:[#allocation2 + $0x4] sm:$0xf]
        %v370 = vld [vmem:[%s249] sm:$0xff]
        %v371 = vld [vmem:[%s249 + $0x8] sm:$0xff]
        %v372 = vld [vmem:[%s249 + $0x10] sm:$0xff]
        %v373 = vld [vmem:[%s249 + $0x18] sm:$0xff]
        %v374 = vld [vmem:[%s249 + $0x20] sm:$0xff]
        %v375 = vld [vmem:[%s249 + $0x28] sm:$0xff]
        %v376 = vld [vmem:[%s249 + $0x30] sm:$0xff]
        %v377 = vld [vmem:[%s249 + $0x38] sm:$0xff]
        %v378 = vld [vmem:[%s249 + $0x40] sm:$0xff]
        %v379 = vld [vmem:[%s249 + $0x48] sm:$0xff]
        %v380 = vld [vmem:[%s249 + $0x50] sm:$0xff]
        %v381 = vld [vmem:[%s249 + $0x58] sm:$0xff]
        %v382 = vld [vmem:[%s249 + $0x60] sm:$0xff]
        %v383 = vld [vmem:[%s249 + $0x68] sm:$0xff]
        %v384 = vld [vmem:[%s249 + $0x70] sm:$0xff]
        %v385 = vld [vmem:[%s249 + $0x78] sm:$0xff]
        %v386 = vld [vmem:[%s249 + $0x80] sm:$0xff]
        %v387 = vld [vmem:[%s249 + $0x88] sm:$0xff]
        %v388 = vld [vmem:[%s249 + $0x90] sm:$0xff]
        %v389 = vld [vmem:[%s249 + $0x98] sm:$0xff]
        %v390 = vld [vmem:[%s249 + $0xa0] sm:$0xff]
        %v391 = vld [vmem:[%s249 + $0xa8] sm:$0xff]
        %v392 = vld [vmem:[%s249 + $0xb0] sm:$0xff]
        %v393 = vld [vmem:[%s249 + $0xb8] sm:$0xff]
        %v394 = vld [vmem:[%s249 + $0xc0] sm:$0xff]
        %v395 = vld [vmem:[%s249 + $0xc8] sm:$0xff]
        %v396 = vld [vmem:[%s249 + $0xd0] sm:$0xff]
        %v397 = vld [vmem:[%s249 + $0xd8] sm:$0xff]
        %v398 = vld [vmem:[%s249 + $0xe0] sm:$0xff]
        %v399 = vld [vmem:[%s249 + $0xe8] sm:$0xff]
        %v400 = vld [vmem:[%s249 + $0xf0] sm:$0xff]
        %v401 = vld [vmem:[%s249 + $0xf8] sm:$0xff]
        %v402 = vld [vmem:[%s295] sm:$0xf]
        %v404 = vperm.slane %v402, 0
        %v405 = vperm.slane %v402, 1
        %v406 = vperm.slane %v402, 2
        %v407 = vperm.slane %v402, 3
        %v414 = vunpack.c.l.b16 %v368
        %v415 = vunpack.c.l.b16 %v369
        %v416 = vpack.c.b16 %v415, %v414
        %v450 = vunpack.c.l.b16 %v370
        %v451 = vunpack.c.h.b16 %v370
        %v452 = vunpack.c.l.b16 %v371
        %v453 = vunpack.c.h.b16 %v371
        %v454 = vunpack.c.l.b16 %v372
        %v455 = vunpack.c.h.b16 %v372
        %v456 = vunpack.c.l.b16 %v373
        %v457 = vunpack.c.h.b16 %v373
        %v458 = vunpack.c.l.b16 %v374
        %v459 = vunpack.c.h.b16 %v374
        %v460 = vunpack.c.l.b16 %v375
        %v461 = vunpack.c.h.b16 %v375
        %v462 = vunpack.c.l.b16 %v376
        %v463 = vunpack.c.h.b16 %v376
        %v464 = vunpack.c.l.b16 %v377
        %v465 = vunpack.c.h.b16 %v377
        %v466 = vunpack.c.l.b16 %v378
        %v467 = vunpack.c.h.b16 %v378
        %v468 = vunpack.c.l.b16 %v379
        %v469 = vunpack.c.h.b16 %v379
        %v470 = vunpack.c.l.b16 %v380
        %v471 = vunpack.c.h.b16 %v380
        %v472 = vunpack.c.l.b16 %v381
        %v473 = vunpack.c.h.b16 %v381
        %v474 = vunpack.c.l.b16 %v382
        %v475 = vunpack.c.h.b16 %v382
        %v476 = vunpack.c.l.b16 %v383
        %v477 = vunpack.c.h.b16 %v383
        %v478 = vunpack.c.l.b16 %v384
        %v479 = vunpack.c.h.b16 %v384
        %v480 = vunpack.c.l.b16 %v385
        %v481 = vunpack.c.h.b16 %v385
        %v482 = vunpack.c.l.b16 %v386
        %v483 = vunpack.c.h.b16 %v386
        %v484 = vunpack.c.l.b16 %v387
        %v485 = vunpack.c.h.b16 %v387
        %v486 = vunpack.c.l.b16 %v388
        %v487 = vunpack.c.h.b16 %v388
        %v488 = vunpack.c.l.b16 %v389
        %v489 = vunpack.c.h.b16 %v389
        %v490 = vunpack.c.l.b16 %v390
        %v491 = vunpack.c.h.b16 %v390
        %v492 = vunpack.c.l.b16 %v391
        %v493 = vunpack.c.h.b16 %v391
        %v494 = vunpack.c.l.b16 %v392
        %v495 = vunpack.c.h.b16 %v392
        %v496 = vunpack.c.l.b16 %v393
        %v497 = vunpack.c.h.b16 %v393
        %v498 = vunpack.c.l.b16 %v394
        %v499 = vunpack.c.h.b16 %v394
        %v500 = vunpack.c.l.b16 %v395
        %v501 = vunpack.c.h.b16 %v395
        %v502 = vunpack.c.l.b16 %v396
        %v503 = vunpack.c.h.b16 %v396
        %v504 = vunpack.c.l.b16 %v397
        %v505 = vunpack.c.h.b16 %v397
        %v506 = vunpack.c.l.b16 %v398
        %v507 = vunpack.c.h.b16 %v398
        %v508 = vunpack.c.l.b16 %v399
        %v509 = vunpack.c.h.b16 %v399
        %v510 = vunpack.c.l.b16 %v400
        %v511 = vunpack.c.h.b16 %v400
        %v512 = vunpack.c.l.b16 %v401
        %v513 = vunpack.c.h.b16 %v401
        %v514 = vpack.c.b16 %v454, %v450
        %v515 = vpack.c.b16 %v455, %v451
        %v516 = vpack.c.b16 %v456, %v452
        %v517 = vpack.c.b16 %v457, %v453
        %v518 = vpack.c.b16 %v462, %v458
        %v519 = vpack.c.b16 %v463, %v459
        %v520 = vpack.c.b16 %v464, %v460
        %v521 = vpack.c.b16 %v465, %v461
        %v522 = vpack.c.b16 %v470, %v466
        %v523 = vpack.c.b16 %v471, %v467
        %v524 = vpack.c.b16 %v472, %v468
        %v525 = vpack.c.b16 %v473, %v469
        %v526 = vpack.c.b16 %v478, %v474
        %v527 = vpack.c.b16 %v479, %v475
        %v528 = vpack.c.b16 %v480, %v476
        %v529 = vpack.c.b16 %v481, %v477
        %v530 = vpack.c.b16 %v486, %v482
        %v531 = vpack.c.b16 %v487, %v483
        %v532 = vpack.c.b16 %v488, %v484
        %v533 = vpack.c.b16 %v489, %v485
        %v534 = vpack.c.b16 %v494, %v490
        %v535 = vpack.c.b16 %v495, %v491
        %v536 = vpack.c.b16 %v496, %v492
        %v537 = vpack.c.b16 %v497, %v493
        %v538 = vpack.c.b16 %v502, %v498
        %v539 = vpack.c.b16 %v503, %v499
        %v540 = vpack.c.b16 %v504, %v500
        %v541 = vpack.c.b16 %v505, %v501
        %v542 = vpack.c.b16 %v510, %v506
        %v543 = vpack.c.b16 %v511, %v507
        %v544 = vpack.c.b16 %v512, %v508
        %v545 = vpack.c.b16 %v513, %v509
        %578 = vmatpush.bf16.msra.mxu0 %v542
        %579 = vmatpush.bf16.msra.mxu0 %v538
        %580 = vmatpush.bf16.msra.mxu0 %v534
        %581 = vmatpush.bf16.msra.mxu0 %v530
        %582 = vmatpush.bf16.msra.mxu0 %v526
        %583 = vmatpush.bf16.msra.mxu0 %v522
        %584 = vmatpush.bf16.msra.mxu0 %v518
        %585 = vmatpush.bf16.msra.mxu0 %v514
        %586 = vmatmul.bf16.gmra.mxu0 %v416
        %v587 = vpop.f32.mrf.mxu0
        %v588 = vadd.f32 %v404, %v587
        %v589 = vpop.f32.mrf.mxu0
        %v590 = vadd.f32 %v404, %v589
        %591 = vdwg.mxu0
        %592 = vmatpush.bf16.msra.mxu0 %v543
        %593 = vmatpush.bf16.msra.mxu0 %v539
        %594 = vmatpush.bf16.msra.mxu0 %v535
        %595 = vmatpush.bf16.msra.mxu0 %v531
        %596 = vmatpush.bf16.msra.mxu0 %v527
        %597 = vmatpush.bf16.msra.mxu0 %v523
        %598 = vmatpush.bf16.msra.mxu0 %v519
        %599 = vmatpush.bf16.msra.mxu0 %v515
        %600 = vmatmul.bf16.gmra.mxu0 %v416
        %v601 = vpop.f32.mrf.mxu0
        %v602 = vadd.f32 %v405, %v601
        %v603 = vpop.f32.mrf.mxu0
        %v604 = vadd.f32 %v405, %v603
        %605 = vdwg.mxu0
        %606 = vmatpush.bf16.msra.mxu0 %v544
        %607 = vmatpush.bf16.msra.mxu0 %v540
        %608 = vmatpush.bf16.msra.mxu0 %v536
        %609 = vmatpush.bf16.msra.mxu0 %v532
        %610 = vmatpush.bf16.msra.mxu0 %v528
        %611 = vmatpush.bf16.msra.mxu0 %v524
        %612 = vmatpush.bf16.msra.mxu0 %v520
        %613 = vmatpush.bf16.msra.mxu0 %v516
        %614 = vmatmul.bf16.gmra.mxu0 %v416
        %v615 = vpop.f32.mrf.mxu0
        %v616 = vadd.f32 %v406, %v615
        %v617 = vpop.f32.mrf.mxu0
        %v618 = vadd.f32 %v406, %v617
        %619 = vdwg.mxu0
        %620 = vmatpush.bf16.msra.mxu0 %v545
        %621 = vmatpush.bf16.msra.mxu0 %v541
        %622 = vmatpush.bf16.msra.mxu0 %v537
        %623 = vmatpush.bf16.msra.mxu0 %v533
        %624 = vmatpush.bf16.msra.mxu0 %v529
        %625 = vmatpush.bf16.msra.mxu0 %v525
        %626 = vmatpush.bf16.msra.mxu0 %v521
        %627 = vmatpush.bf16.msra.mxu0 %v517
        %628 = vmatmul.bf16.gmra.mxu0 %v416
        %v629 = vpop.f32.mrf.mxu0
        %v630 = vadd.f32 %v407, %v629
        %v631 = vpop.f32.mrf.mxu0
        %v632 = vadd.f32 %v407, %v631
        %633 = vdwg.mxu0
        %v634 = vmax.f32 %v588, 0.0
        %v635 = vmax.f32 %v602, 0.0
        %v636 = vmax.f32 %v616, 0.0
        %v637 = vmax.f32 %v630, 0.0
        %v638 = vmax.f32 %v590, 0.0
        %v639 = vmax.f32 %v604, 0.0
        %v640 = vmax.f32 %v618, 0.0
        %v641 = vmax.f32 %v632, 0.0
        %v642 = vpack.c.bf16 %v635, %v634
        %v643 = vpack.c.bf16 %v637, %v636
        %v644 = vpack.c.bf16 %v639, %v638
        %v645 = vpack.c.bf16 %v641, %v640
        %646 = vst [vmem:[%s284] sm:$0xff] %v642
        %647 = vst [vmem:[%s284 + $0x8] sm:$0xff] %v643
        %648 = vst [vmem:[%s284 + $0x10] sm:$0xff] %v644
        %649 = vst [vmem:[%s284 + $0x18] sm:$0xff] %v645
        %s650 = sand.u32 %s161, 1
        %s651 = sand.u32 %s161, 1
        %s652 = smul.addr %s651, 32
        %s653 = scalar_lea.vmem [#allocation5], %s652
        // Predicated region
        $region49: #{layer_decoder_forward.18} parent=39 // pred_check
          %p654 = pneg %p171
        $region50: #{layer_decoder_forward.18} parent=39 // pred_check_branch
          %656 = sbr.rel (%p654) target = $region52
        $region51: #{layer_decoder_forward.18} parent=39 // pred_region
          %s657 = smul.u32 2, %s23
          %s658 = smul.u32 4, %s24
          %s659 = smul.addr %s657, 16
          %s660 = sadd.s32 %s658, %s659
          %s661 = smul.addr %s660, 4
          %s662 = scalar_lea.vmem %s5, %s661
          // Predicated region
          $region53: #{layer_decoder_forward.18} parent=51 // pred_check
            _
          $region54: #{layer_decoder_forward.18} parent=51 // pred_check_branch
            %664 = sbr.rel (0) target = $region56
          $region55: #{layer_decoder_forward.18} parent=51 // pred_region
            // Predicated region
            $region57: #{layer_decoder_forward.18} parent=55 // pred_check
              _
            $region58: #{layer_decoder_forward.18} parent=55 // pred_check_branch
              %666 = sbr.rel (0) target = $region60
            $region59: #{layer_decoder_forward.18} parent=55 // pred_region
              loop: start=0, step=1, limit=1
              $region61: #{layer_decoder_forward.18} parent=59 // loop_pre_header
                _
              $region62: #{layer_decoder_forward.18} parent=59 // loop_header
                %s668 = sphi 0, %s672
                %p669 = scmp.ge.s32.totalorder %s668, 1
                %s673 = sphi %s653, %s653
                %s674 = sphi %s662, %s662
              $region63: #{layer_decoder_forward.18} parent=59 // loop_header_branch
                %671 = sbr.rel (%p669) target = $region67
              $region64: #{layer_decoder_forward.18} parent=59 // loop_body
                %v675 = vld [vmem:[%s673] sm:$0xff]
                %676 = vst [vmem:[%s674] sm:$0xff] %v675
                %v677 = vld [vmem:[%s673 + $0x8] sm:$0xff]
                %678 = vst [vmem:[%s674 + $0x8] sm:$0xff] %v677
                %v679 = vld [vmem:[%s673 + $0x10] sm:$0xff]
                %680 = vst [vmem:[%s674 + $0x40] sm:$0xff] %v679
                %v681 = vld [vmem:[%s673 + $0x18] sm:$0xff]
                %682 = vst [vmem:[%s674 + $0x48] sm:$0xff] %v681
              $region65: #{layer_decoder_forward.18} parent=59 // loop_footer
                %s672 = sadd.s32 1, %s668
              $region66: #{layer_decoder_forward.18} parent=59 // loop_footer_branch
                %667 = sbr.rel target = $region62
              $region67: #{layer_decoder_forward.18} parent=59 // loop_exit
                _
            $region60: #{layer_decoder_forward.18} parent=55 // pred_fallthru
              _
            // Predicated region
            $region68: #{layer_decoder_forward.18} parent=55 // pred_check
              _
            $region69: #{layer_decoder_forward.18} parent=55 // pred_check_branch
              %684 = sbr.rel target = $region71
            $region70: #{layer_decoder_forward.18} parent=55 // pred_region
              _
            $region71: #{layer_decoder_forward.18} parent=55 // pred_fallthru
              _
          $region56: #{layer_decoder_forward.18} parent=51 // pred_fallthru
            _
          %685 = vnop
        $region52: #{layer_decoder_forward.18} parent=39 // pred_fallthru
          _
      $region40: #{layer_decoder_forward.18} parent=5 // pred_fallthru
        _
      %p686 = scmp.le.s32.totalorder 2, %s14
      // Predicated region
      $region72: #{layer_decoder_forward.18} parent=5 // pred_check
        %p687 = pneg %p686
      $region73: #{layer_decoder_forward.18} parent=5 // pred_check_branch
        %689 = sbr.rel (%p687) target = $region75
      $region74: #{layer_decoder_forward.18} parent=5 // pred_region
        %s690 = ssub.s32 %s14, 2
        // Predicated region
        $region76: #{layer_decoder_forward.18} parent=74 // pred_check
          %p691 = pneg %p177
        $region77: #{layer_decoder_forward.18} parent=74 // pred_check_branch
          %693 = sbr.rel (%p691) target = $region79
        $region78: #{layer_decoder_forward.18} parent=74 // pred_region
          %s694 = sand.u32 %s162, 1
          %s695 = sand.u32 %s162, 1
          %s696 = smul.addr %s695, 32
          %s697 = scalar_lea.vmem [#allocation5], %s696
        $region79: #{layer_decoder_forward.18} parent=74 // pred_fallthru
          _
      $region75: #{layer_decoder_forward.18} parent=5 // pred_fallthru
        _
    $region6: #{layer_decoder_forward.18} parent=1 // loop_footer
      %s18 = sadd.s32 1, %s14
    $region7: #{layer_decoder_forward.18} parent=1 // loop_footer_branch
      %13 = sbr.rel target = $region3
    $region8: #{layer_decoder_forward.18} parent=1 // loop_exit
      _
    %698 = vsyncpa [#allocation4], 1
    %s699 = scalar_lea.sflag [#allocation4], 1
    %700 = vsyncpa %s699, 1

// kernel: layer_decoder_forward.17
$region0: #{layer_decoder_forward.17}
  #allocation0 [shape = 'u32[]', space=smem, size = 0x4, offset = 0x4, fixed_abs, tag = 'smem constant byte address 0x4 - core index']
  #allocation1 [shape = 'u32[72,128]{1,0:T(1,128)}', space=vmem, size = 0x9000, scoped, tag = 'internal scratch']
  #allocation2 [shape = 'f32[16,128]{1,0:T(8,128)}', space=vmem, size = 0x2000, scoped, tag = 'scratch operand']
  %s0 = inlined_call_operand.vmem [shape: bf16[16,128], index: 0, kind: input, shape index: {}]
  %s1 = inlined_call_operand.hbm [shape: bf16[128,128], index: 1, kind: input, shape index: {}]
  %s2 = inlined_call_operand.hbm [shape: f32[1,128], index: 2, kind: input, shape index: {}]
  %s3 = inlined_call_operand.vmem [shape: f32[16,128], index: 3, kind: input, shape index: {}]
  %s4 = inlined_call_operand.vmem [shape: f32[16,128], index: 4, kind: output, shape index: {}]
  %s5 = sld [smem:[#allocation0]]
  $region42: #{layer_decoder_forward.17} parent=0
    _
  %s7 = ssub.s32 1, %s5
  %s8 = scalar_select 0, %s7, %s5
  $region1: #{layer_decoder_forward.17} parent=0
    #allocation3 [shape = 'u8[32768]{0}', space=vmem, size = 0x8000, scoped, tag = 'input window, operand 1, single buffered']
    #allocation4 [shape = 's32[1]{0}', space=sflag, size = 0x4, scoped, tag = 'scoped memory for layer_decoder_forward.17']
    #allocation5 [shape = 'u8[512]{0}', space=vmem, size = 0x400, scoped, tag = 'input window, operand 2, single buffered']
    #allocation6 [shape = 's32[1]{0}', space=sflag, size = 0x4, scoped, tag = 'scoped memory for layer_decoder_forward.17']
    %9 = vsyncpa [#allocation4], 0
    %10 = vsyncpa [#allocation6], 0
    // Predicated region
    $region2: #{layer_decoder_forward.17} parent=1 // pred_check
      _
    $region3: #{layer_decoder_forward.17} parent=1 // pred_check_branch
      %12 = sbr.rel (0) target = $region5
    $region4: #{layer_decoder_forward.17} parent=1 // pred_region
      _
    $region5: #{layer_decoder_forward.17} parent=1 // pred_fallthru
      _
    // Predicated region
    $region6: #{layer_decoder_forward.17} parent=1 // pred_check
      _
    $region7: #{layer_decoder_forward.17} parent=1 // pred_check_branch
      %14 = sbr.rel (0) target = $region9
    $region8: #{layer_decoder_forward.17} parent=1 // pred_region
      %16 = vsyncadd [#allocation4], 0
      %s17 = sshll.u32 %s1, 4
      %s18 = int_to_ptr.hbm [resolvable:$true] %s17
      %s19 = sshll.u32 [#allocation3], 4
      %s20 = int_to_ptr.vmem [resolvable:$true] %s19
      %25 = dma.hbm_to_vmem [thread:$0]  %s18, 1024, %s20, [#allocation4], 64, 64, 4
    $region9: #{layer_decoder_forward.17} parent=1 // pred_fallthru
      _
    // Predicated region
    $region10: #{layer_decoder_forward.17} parent=1 // pred_check
      _
    $region11: #{layer_decoder_forward.17} parent=1 // pred_check_branch
      %27 = sbr.rel (0) target = $region13
    $region12: #{layer_decoder_forward.17} parent=1 // pred_region
      %29 = vsyncadd [#allocation6], 0
      %s31 = sshll.u32 %s2, 4
      %s32 = int_to_ptr.hbm [resolvable:$true] %s31
      %s33 = sshll.u32 [#allocation5], 4
      %s34 = int_to_ptr.vmem [resolvable:$true] %s33
      %36 = dma.hbm_to_vmem [thread:$0]  %s32, 16, %s34, [#allocation6]
    $region13: #{layer_decoder_forward.17} parent=1 // pred_fallthru
      _
    // Predicated region
    $region14: #{layer_decoder_forward.17} parent=1 // pred_check
      _
    $region15: #{layer_decoder_forward.17} parent=1 // pred_check_branch
      %38 = sbr.rel (0) target = $region17
    $region16: #{layer_decoder_forward.17} parent=1 // pred_region
      _
    $region17: #{layer_decoder_forward.17} parent=1 // pred_fallthru
      _
    // Predicated region
    $region18: #{layer_decoder_forward.17} parent=1 // pred_check
      _
    $region19: #{layer_decoder_forward.17} parent=1 // pred_check_branch
      %40 = sbr.rel (0) target = $region21
    $region20: #{layer_decoder_forward.17} parent=1 // pred_region
      %42 = dma.done [#allocation4], 1024
    $region21: #{layer_decoder_forward.17} parent=1 // pred_fallthru
      _
    // Predicated region
    $region22: #{layer_decoder_forward.17} parent=1 // pred_check
      _
    $region23: #{layer_decoder_forward.17} parent=1 // pred_check_branch
      %44 = sbr.rel (0) target = $region25
    $region24: #{layer_decoder_forward.17} parent=1 // pred_region
      %46 = dma.done [#allocation6], 16
    $region25: #{layer_decoder_forward.17} parent=1 // pred_fallthru
      _
    %p47 = scmp.eq.s32.totalorder 0, 0
    // Predicated region
    $region26: #{layer_decoder_forward.17} parent=1 // pred_check
      %p48 = pneg %p47
    $region27: #{layer_decoder_forward.17} parent=1 // pred_check_branch
      %50 = sbr.rel (%p48) target = $region29
    $region28: #{layer_decoder_forward.17} parent=1 // pred_region
      %51 = vst [vmem:[#allocation2] sm:$0xff] 0.0
      %52 = vst [vmem:[#allocation2 + $0x8] sm:$0xff] 0.0
    $region29: #{layer_decoder_forward.17} parent=1 // pred_fallthru
      _
    %v53 = vld [vmem:[#allocation2] sm:$0xff]
    %v54 = vld [vmem:[#allocation2 + $0x8] sm:$0xff]
    %v55 = vld [vmem:[%s0] sm:$0xf]
    %v56 = vld [vmem:[%s0 + $0x4] sm:$0xf]
    %v57 = vld [vmem:[#allocation3] sm:$0xf]
    %v58 = vld [vmem:[#allocation3 + $0x4] sm:$0xf]
    %v59 = vld [vmem:[#allocation3 + $0x8] sm:$0xf]
    %v60 = vld [vmem:[#allocation3 + $0xc] sm:$0xf]
    %v61 = vld [vmem:[#allocation3 + $0x10] sm:$0xf]
    %v62 = vld [vmem:[#allocation3 + $0x14] sm:$0xf]
    %v63 = vld [vmem:[#allocation3 + $0x18] sm:$0xf]
    %v64 = vld [vmem:[#allocation3 + $0x1c] sm:$0xf]
    %v65 = vld [vmem:[#allocation3 + $0x20] sm:$0xf]
    %v66 = vld [vmem:[#allocation3 + $0x24] sm:$0xf]
    %v67 = vld [vmem:[#allocation3 + $0x28] sm:$0xf]
    %v68 = vld [vmem:[#allocation3 + $0x2c] sm:$0xf]
    %v69 = vld [vmem:[#allocation3 + $0x30] sm:$0xf]
    %v70 = vld [vmem:[#allocation3 + $0x34] sm:$0xf]
    %v71 = vld [vmem:[#allocation3 + $0x38] sm:$0xf]
    %v72 = vld [vmem:[#allocation3 + $0x3c] sm:$0xf]
    %v75 = vunpack.c.l.b16 %v55
    %v76 = vunpack.c.l.b16 %v56
    %v77 = vpack.c.b16 %v76, %v75
    %v95 = vunpack.c.l.b16 %v57
    %v96 = vunpack.c.l.b16 %v58
    %v97 = vunpack.c.l.b16 %v59
    %v98 = vunpack.c.l.b16 %v60
    %v99 = vunpack.c.l.b16 %v61
    %v100 = vunpack.c.l.b16 %v62
    %v101 = vunpack.c.l.b16 %v63
    %v102 = vunpack.c.l.b16 %v64
    %v103 = vunpack.c.l.b16 %v65
    %v104 = vunpack.c.l.b16 %v66
    %v105 = vunpack.c.l.b16 %v67
    %v106 = vunpack.c.l.b16 %v68
    %v107 = vunpack.c.l.b16 %v69
    %v108 = vunpack.c.l.b16 %v70
    %v109 = vunpack.c.l.b16 %v71
    %v110 = vunpack.c.l.b16 %v72
    %v111 = vpack.c.b16 %v96, %v95
    %v112 = vpack.c.b16 %v98, %v97
    %v113 = vpack.c.b16 %v100, %v99
    %v114 = vpack.c.b16 %v102, %v101
    %v115 = vpack.c.b16 %v104, %v103
    %v116 = vpack.c.b16 %v106, %v105
    %v117 = vpack.c.b16 %v108, %v107
    %v118 = vpack.c.b16 %v110, %v109
    %127 = vmatpush.bf16.msra.mxu0 %v118
    %128 = vmatpush.bf16.msra.mxu0 %v117
    %129 = vmatpush.bf16.msra.mxu0 %v116
    %130 = vmatpush.bf16.msra.mxu0 %v115
    %131 = vmatpush.bf16.msra.mxu0 %v114
    %132 = vmatpush.bf16.msra.mxu0 %v113
    %133 = vmatpush.bf16.msra.mxu0 %v112
    %134 = vmatpush.bf16.msra.mxu0 %v111
    %135 = vmatmul.bf16.gmra.mxu0 %v77
    %v136 = vpop.f32.mrf.mxu0
    %v137 = vadd.f32 0.0, %v136
    %v138 = vpop.f32.mrf.mxu0
    %v139 = vadd.f32 0.0, %v138
    %140 = vdwg.mxu0
    %v141 = vadd.f32 %v53, %v137
    %v142 = vadd.f32 %v54, %v139
    %143 = vst [vmem:[#allocation2] sm:$0xff] %v141
    %144 = vst [vmem:[#allocation2 + $0x8] sm:$0xff] %v142
    // Predicated region
    $region30: #{layer_decoder_forward.17} parent=1 // pred_check
      %p145 = pneg %p47
    $region31: #{layer_decoder_forward.17} parent=1 // pred_check_branch
      %147 = sbr.rel (%p145) target = $region33
    $region32: #{layer_decoder_forward.17} parent=1 // pred_region
      %v148 = vld [vmem:[#allocation2] sm:$0xff]
      %v149 = vld [vmem:[#allocation2 + $0x8] sm:$0xff]
      %v150 = vld [vmem:[#allocation5] sm:$0x1]
      %v152 = vperm.slane %v150, 0
      %v154 = vadd.f32 %v148, %v152
      %v155 = vadd.f32 %v149, %v152
      %v156 = vld [vmem:[%s3] sm:$0xff]
      %v157 = vld [vmem:[%s3 + $0x8] sm:$0xff]
      %v158 = vadd.f32 %v154, %v156
      %v159 = vadd.f32 %v155, %v157
      %160 = vst [vmem:[%s4] sm:$0xff] %v158
      %161 = vst [vmem:[%s4 + $0x8] sm:$0xff] %v159
    $region33: #{layer_decoder_forward.17} parent=1 // pred_fallthru
      _
    // Predicated region
    $region34: #{layer_decoder_forward.17} parent=1 // pred_check
      _
    $region35: #{layer_decoder_forward.17} parent=1 // pred_check_branch
      %163 = sbr.rel (0) target = $region37
    $region36: #{layer_decoder_forward.17} parent=1 // pred_region
      _
    $region37: #{layer_decoder_forward.17} parent=1 // pred_fallthru
      _
    // Predicated region
    $region38: #{layer_decoder_forward.17} parent=1 // pred_check
      _
    $region39: #{layer_decoder_forward.17} parent=1 // pred_check_branch
      %165 = sbr.rel (0) target = $region41
    $region40: #{layer_decoder_forward.17} parent=1 // pred_region
      _
    $region41: #{layer_decoder_forward.17} parent=1 // pred_fallthru
      _
    %166 = vsyncpa [#allocation4], 1
    %167 = vsyncpa [#allocation6], 1

// kernel: layer_decoder_forward.19
$region0: #{layer_decoder_forward.19}
  #allocation0 [shape = 'u32[]', space=smem, size = 0x4, offset = 0x4, fixed_abs, tag = 'smem constant byte address 0x4 - core index']
  #allocation1 [shape = 'u32[72,128]{1,0:T(1,128)}', space=vmem, size = 0x9000, scoped, tag = 'internal scratch']
  #allocation2 [shape = 'f32[16,128]{1,0:T(8,128)}', space=vmem, size = 0x2000, scoped, tag = 'scratch operand']
  %s0 = inlined_call_operand.vmem [shape: bf16[16,2048], index: 0, kind: input, shape index: {}]
  %s1 = inlined_call_operand.hbm [shape: bf16[2048,128], index: 1, kind: input, shape index: {}]
  %s2 = inlined_call_operand.hbm [shape: f32[1,128], index: 2, kind: input, shape index: {}]
  %s3 = inlined_call_operand.vmem [shape: f32[16,128], index: 3, kind: input, shape index: {}]
  %s4 = inlined_call_operand.hbm [shape: f32[16,128], index: 4, kind: output, shape index: {}]
  %s5 = sld [smem:[#allocation0]]
  $region88: #{layer_decoder_forward.19} parent=0
    _
  %s7 = ssub.s32 1, %s5
  %s8 = scalar_select 0, %s7, %s5
  $region1: #{layer_decoder_forward.19} parent=0
    #allocation3 [shape = 'u8[32768]{0}', space=vmem, size = 0x8000, scoped, tag = 'input window, operand 0']
    #allocation4 [shape = 'u8[262144]{0}', space=vmem, size = 0x40000, scoped, tag = 'input window, operand 1']
    #allocation5 [shape = 's32[2]{0}', space=sflag, size = 0x8, scoped, tag = 'scoped memory for layer_decoder_forward.19']
    #allocation6 [shape = 's32[2]{0}', space=sflag, size = 0x8, scoped, tag = 'scoped memory for layer_decoder_forward.19']
    #allocation7 [shape = 'u8[512]{0}', space=vmem, size = 0x400, scoped, tag = 'input window, operand 2, single buffered']
    #allocation8 [shape = 's32[1]{0}', space=sflag, size = 0x4, scoped, tag = 'scoped memory for layer_decoder_forward.19']
    #allocation9 [shape = 'u8[8192]{0}', space=vmem, size = 0x2000, scoped, tag = 'output window, operand 0, single buffered']
    %9 = vsyncpa [#allocation5], 0
    %s10 = scalar_lea.sflag [#allocation5], 1
    %11 = vsyncpa %s10, 0
    %12 = vsyncpa [#allocation8], 0
    %13 = vsyncpa [#allocation6], 0
    loop: start=0, step=1, limit=6
    $region2: #{layer_decoder_forward.19} parent=1 // loop_pre_header
      _
    $region3: #{layer_decoder_forward.19} parent=1 // loop_header
      %s15 = sphi 0, %s19
      %p16 = scmp.ge.s32.totalorder %s15, 6
      %s22 = sphi 0, %s41
      %s23 = sphi 0, %s37
      %s24 = sphi 0, %s33
      %s25 = sphi 0, %s22
      %s26 = sphi 0, %s23
      %s27 = sphi 0, %s24
      %s28 = sphi 0, %s25
      %s29 = sphi 0, %s26
      %s30 = sphi 0, %s27
      %s46 = sphi 0, %s48
      %s49 = sphi 0, %s46
      %s50 = sphi 0, %s49
      %s66 = sphi 0, %s50
      %s74 = sphi 0, %s76
      %s77 = sphi 0, %s74
      %s78 = sphi 0, %s77
      %s94 = sphi 0, %s78
      %s100 = sphi 0, %s102
      %s103 = sphi 0, %s100
      %s104 = sphi 0, %s103
      %s120 = sphi 0, %s104
      %s128 = sphi 0, %s130
      %s131 = sphi 0, %s128
      %s132 = sphi 0, %s131
      %s148 = sphi 0, %s132
      %s156 = sphi 0, %s158
      %s159 = sphi 0, %s156
      %s160 = sphi 0, %s159
      %s176 = sphi 0, %s160
    $region4: #{layer_decoder_forward.19} parent=1 // loop_header_branch
      %18 = sbr.rel (%p16) target = $region8
    $region5: #{layer_decoder_forward.19} parent=1 // loop_body
      %s20 = ssub.s32 %s15, 1
      %s21 = ssub.s32 %s15, 2
      %s31 = sadd.s32 1, %s24
      %p32 = scmp.ge.s32.totalorder %s31, 4
      %s33 = scalar_select %p32, 0, %s31
      %s34 = sadd.s32 1, %s23
      %s35 = scalar_select %p32, %s34, %s23
      %p36 = scmp.ge.s32.totalorder %s35, 1
      %s37 = scalar_select %p36, 0, %s35
      %s38 = sadd.s32 1, %s22
      %s39 = scalar_select %p36, %s38, %s22
      %p40 = scmp.ge.s32.totalorder %s39, 1
      %s41 = scalar_select %p40, 0, %s39
      %s42 = ssub.s32 %s22, %s41
      %s43 = ssub.s32 %s24, %s33
      %s44 = sor.u32 %s42, %s43
      %p45 = scmp.eq.s32.totalorder %s44, 0
      %s47 = sadd.s32 %s46, 1
      %s48 = scalar_select %p45, %s46, %s47
      %p51 = pneg %p45
      %p52 = scmp.eq.s32.totalorder %s15, 3
      %p53 = por %p51, %p52
      %p54 = scmp.ne.s32.totalorder %s46, %s49
      %p55 = scmp.eq.s32.totalorder %s15, 0
      %p56 = por %p54, %p55
      %p57 = scmp.ne.s32.totalorder %s46, %s49
      %p58 = scmp.eq.s32.totalorder %s20, 3
      %p59 = por %p57, %p58
      %p60 = scmp.ne.s32.totalorder %s49, %s50
      %p61 = scmp.eq.s32.totalorder %s20, 0
      %p62 = por %p60, %p61
      %p63 = scmp.ne.s32.totalorder %s49, %s50
      %p64 = scmp.eq.s32.totalorder %s21, 3
      %p65 = por %p63, %p64
      %p67 = scmp.ne.s32.totalorder %s50, %s66
      %p68 = scmp.eq.s32.totalorder %s21, 0
      %p69 = por %p67, %p68
      %s70 = ssub.s32 %s24, %s33
      %s71 = ssub.s32 %s23, %s37
      %s72 = sor.u32 %s70, %s71
      %p73 = scmp.eq.s32.totalorder %s72, 0
      %s75 = sadd.s32 %s74, 1
      %s76 = scalar_select %p73, %s74, %s75
      %p79 = pneg %p73
      %p80 = scmp.eq.s32.totalorder %s15, 3
      %p81 = por %p79, %p80
      %p82 = scmp.ne.s32.totalorder %s74, %s77
      %p83 = scmp.eq.s32.totalorder %s15, 0
      %p84 = por %p82, %p83
      %p85 = scmp.ne.s32.totalorder %s74, %s77
      %p86 = scmp.eq.s32.totalorder %s20, 3
      %p87 = por %p85, %p86
      %p88 = scmp.ne.s32.totalorder %s77, %s78
      %p89 = scmp.eq.s32.totalorder %s20, 0
      %p90 = por %p88, %p89
      %p91 = scmp.ne.s32.totalorder %s77, %s78
      %p92 = scmp.eq.s32.totalorder %s21, 3
      %p93 = por %p91, %p92
      %p95 = scmp.ne.s32.totalorder %s78, %s94
      %p96 = scmp.eq.s32.totalorder %s21, 0
      %p97 = por %p95, %p96
      %s98 = ssub.s32 %s23, %s37
      %p99 = scmp.eq.s32.totalorder %s98, 0
      %s101 = sadd.s32 %s100, 1
      %s102 = scalar_select %p99, %s100, %s101
      %p105 = pneg %p99
      %p106 = scmp.eq.s32.totalorder %s15, 3
      %p107 = por %p105, %p106
      %p108 = scmp.ne.s32.totalorder %s100, %s103
      %p109 = scmp.eq.s32.totalorder %s15, 0
      %p110 = por %p108, %p109
      %p111 = scmp.ne.s32.totalorder %s100, %s103
      %p112 = scmp.eq.s32.totalorder %s20, 3
      %p113 = por %p111, %p112
      %p114 = scmp.ne.s32.totalorder %s103, %s104
      %p115 = scmp.eq.s32.totalorder %s20, 0
      %p116 = por %p114, %p115
      %p117 = scmp.ne.s32.totalorder %s103, %s104
      %p118 = scmp.eq.s32.totalorder %s21, 3
      %p119 = por %p117, %p118
      %p121 = scmp.ne.s32.totalorder %s104, %s120
      %p122 = scmp.eq.s32.totalorder %s21, 0
      %p123 = por %p121, %p122
      %s124 = ssub.s32 %s22, %s41
      %s125 = ssub.s32 %s23, %s37
      %s126 = sor.u32 %s124, %s125
      %p127 = scmp.eq.s32.totalorder %s126, 0
      %s129 = sadd.s32 %s128, 1
      %s130 = scalar_select %p127, %s128, %s129
      %p133 = pneg %p127
      %p134 = scmp.eq.s32.totalorder %s15, 3
      %p135 = por %p133, %p134
      %p136 = scmp.ne.s32.totalorder %s128, %s131
      %p137 = scmp.eq.s32.totalorder %s15, 0
      %p138 = por %p136, %p137
      %p139 = scmp.ne.s32.totalorder %s128, %s131
      %p140 = scmp.eq.s32.totalorder %s20, 3
      %p141 = por %p139, %p140
      %p142 = scmp.ne.s32.totalorder %s131, %s132
      %p143 = scmp.eq.s32.totalorder %s20, 0
      %p144 = por %p142, %p143
      %p145 = scmp.ne.s32.totalorder %s131, %s132
      %p146 = scmp.eq.s32.totalorder %s21, 3
      %p147 = por %p145, %p146
      %p149 = scmp.ne.s32.totalorder %s132, %s148
      %p150 = scmp.eq.s32.totalorder %s21, 0
      %p151 = por %p149, %p150
      %s152 = ssub.s32 %s22, %s41
      %s153 = ssub.s32 %s23, %s37
      %s154 = sor.u32 %s152, %s153
      %p155 = scmp.eq.s32.totalorder %s154, 0
      %s157 = sadd.s32 %s156, 1
      %s158 = scalar_select %p155, %s156, %s157
      %p161 = pneg %p155
      %p162 = scmp.eq.s32.totalorder %s15, 3
      %p163 = por %p161, %p162
      %p164 = scmp.ne.s32.totalorder %s156, %s159
      %p165 = scmp.eq.s32.totalorder %s15, 0
      %p166 = por %p164, %p165
      %p167 = scmp.ne.s32.totalorder %s156, %s159
      %p168 = scmp.eq.s32.totalorder %s20, 3
      %p169 = por %p167, %p168
      %p170 = scmp.ne.s32.totalorder %s159, %s160
      %p171 = scmp.eq.s32.totalorder %s20, 0
      %p172 = por %p170, %p171
      %p173 = scmp.ne.s32.totalorder %s159, %s160
      %p174 = scmp.eq.s32.totalorder %s21, 3
      %p175 = por %p173, %p174
      %p177 = scmp.ne.s32.totalorder %s160, %s176
      %p178 = scmp.eq.s32.totalorder %s21, 0
      %p179 = por %p177, %p178
      %p180 = scmp.le.s32.totalorder 1, %s15
      %p181 = scmp.lt.s32.totalorder %s15, 5
      %p182 = pnand %p180, %p181
      %p183 = pneg %p182
      // Predicated region
      $region9: #{layer_decoder_forward.19} parent=5 // pred_check
        _
      $region10: #{layer_decoder_forward.19} parent=5 // pred_check_branch
        %185 = sbr.rel (%p182) target = $region12
      $region11: #{layer_decoder_forward.19} parent=5 // pred_region
        %s186 = ssub.s32 %s15, 1
        // Predicated region
        $region13: #{layer_decoder_forward.19} parent=11 // pred_check
          %p187 = pneg %p116
        $region14: #{layer_decoder_forward.19} parent=11 // pred_check_branch
          %189 = sbr.rel (%p187) target = $region16
        $region15: #{layer_decoder_forward.19} parent=11 // pred_region
          %191 = vsyncadd [#allocation8], 0
          %s192 = scalar_lea.hbm %s2, %s26
          %s194 = sshll.u32 %s192, 4
          %s195 = int_to_ptr.hbm [resolvable:$true] %s194
          %s196 = sshll.u32 [#allocation7], 4
          %s197 = int_to_ptr.vmem [resolvable:$true] %s196
          %199 = dma.hbm_to_vmem [thread:$0]  %s195, 16, %s197, [#allocation8]
        $region16: #{layer_decoder_forward.19} parent=11 // pred_fallthru
          _
        // Predicated region
        $region17: #{layer_decoder_forward.19} parent=11 // pred_check
          %p200 = pneg %p144
        $region18: #{layer_decoder_forward.19} parent=11 // pred_check_branch
          %202 = sbr.rel (%p200) target = $region20
        $region19: #{layer_decoder_forward.19} parent=11 // pred_region
          %s203 = smul.u32 2, %s25
          %p204 = scmp.lt.s32.totalorder %s203, 1
          %s205 = scalar_select %p204, %s203, 1
          %p206 = scmp.lt.s32.totalorder %s26, 0
          %s207 = scalar_select %p206, %s26, 0
          %s208 = sadd.s32 %s207, %s205
          %s209 = smul.addr %s208, 8
          %s210 = scalar_lea.vmem %s3, %s209
          %s211 = smul.u32 2, %s25
        $region20: #{layer_decoder_forward.19} parent=11 // pred_fallthru
          _
      $region12: #{layer_decoder_forward.19} parent=5 // pred_fallthru
        _
      %p212 = scmp.lt.s32.totalorder %s15, 4
      // Predicated region
      $region21: #{layer_decoder_forward.19} parent=5 // pred_check
        %p213 = pneg %p212
      $region22: #{layer_decoder_forward.19} parent=5 // pred_check_branch
        %215 = sbr.rel (%p213) target = $region24
      $region23: #{layer_decoder_forward.19} parent=5 // pred_region
        // Predicated region
        $region25: #{layer_decoder_forward.19} parent=23 // pred_check
          %p216 = pneg %p56
        $region26: #{layer_decoder_forward.19} parent=23 // pred_check_branch
          %218 = sbr.rel (%p216) target = $region28
        $region27: #{layer_decoder_forward.19} parent=23 // pred_region
          %s219 = sand.u32 %s46, 1
          %s220 = sand.u32 %s46, 1
          %s221 = smul.addr %s220, 32
          %s222 = scalar_lea.vmem [#allocation3], %s221
          %s223 = smul.u32 2, %s22
          %s224 = smul.u32 4, %s24
          %s225 = smul.addr %s223, 16
          %s226 = sadd.s32 %s224, %s225
          %s227 = smul.addr %s226, 4
          %s228 = scalar_lea.vmem %s0, %s227
          // Predicated region
          $region29: #{layer_decoder_forward.19} parent=27 // pred_check
            _
          $region30: #{layer_decoder_forward.19} parent=27 // pred_check_branch
            %230 = sbr.rel (0) target = $region32
          $region31: #{layer_decoder_forward.19} parent=27 // pred_region
            // Predicated region
            $region33: #{layer_decoder_forward.19} parent=31 // pred_check
              _
            $region34: #{layer_decoder_forward.19} parent=31 // pred_check_branch
              %232 = sbr.rel (0) target = $region36
            $region35: #{layer_decoder_forward.19} parent=31 // pred_region
              loop: start=0, step=1, limit=1
              $region37: #{layer_decoder_forward.19} parent=35 // loop_pre_header
                _
              $region38: #{layer_decoder_forward.19} parent=35 // loop_header
                %s234 = sphi 0, %s238
                %p235 = scmp.ge.s32.totalorder %s234, 1
                %s239 = sphi %s228, %s228
                %s240 = sphi %s222, %s222
              $region39: #{layer_decoder_forward.19} parent=35 // loop_header_branch
                %237 = sbr.rel (%p235) target = $region43
              $region40: #{layer_decoder_forward.19} parent=35 // loop_body
                %v241 = vld [vmem:[%s239] sm:$0xff]
                %242 = vst [vmem:[%s240] sm:$0xff] %v241
                %v243 = vld [vmem:[%s239 + $0x8] sm:$0xff]
                %244 = vst [vmem:[%s240 + $0x8] sm:$0xff] %v243
                %v245 = vld [vmem:[%s239 + $0x40] sm:$0xff]
                %246 = vst [vmem:[%s240 + $0x10] sm:$0xff] %v245
                %v247 = vld [vmem:[%s239 + $0x48] sm:$0xff]
                %248 = vst [vmem:[%s240 + $0x18] sm:$0xff] %v247
              $region41: #{layer_decoder_forward.19} parent=35 // loop_footer
                %s238 = sadd.s32 1, %s234
              $region42: #{layer_decoder_forward.19} parent=35 // loop_footer_branch
                %233 = sbr.rel target = $region38
              $region43: #{layer_decoder_forward.19} parent=35 // loop_exit
                _
            $region36: #{layer_decoder_forward.19} parent=31 // pred_fallthru
              _
            // Predicated region
            $region44: #{layer_decoder_forward.19} parent=31 // pred_check
              _
            $region45: #{layer_decoder_forward.19} parent=31 // pred_check_branch
              %250 = sbr.rel target = $region47
            $region46: #{layer_decoder_forward.19} parent=31 // pred_region
              _
            $region47: #{layer_decoder_forward.19} parent=31 // pred_fallthru
              _
          $region32: #{layer_decoder_forward.19} parent=27 // pred_fallthru
            _
          %251 = vnop
        $region28: #{layer_decoder_forward.19} parent=23 // pred_fallthru
          _
        // Predicated region
        $region48: #{layer_decoder_forward.19} parent=23 // pred_check
          %p252 = pneg %p84
        $region49: #{layer_decoder_forward.19} parent=23 // pred_check_branch
          %254 = sbr.rel (%p252) target = $region51
        $region50: #{layer_decoder_forward.19} parent=23 // pred_region
          %s255 = sand.u32 %s74, 1
          %s256 = scalar_lea.sflag [#allocation5], %s255
          %s257 = sand.u32 %s74, 1
          %s258 = smul.addr %s257, 256
          %s259 = scalar_lea.vmem [#allocation4], %s258
          %s260 = smul.u32 64, %s24
          %262 = vsyncadd %s256, 0
          %s263 = sadd.s32 %s23, %s260
          %s264 = smul.addr %s263, 4
          %s265 = scalar_lea.hbm %s1, %s264
          %s266 = sshll.u32 %s265, 4
          %s267 = int_to_ptr.hbm [resolvable:$true] %s266
          %s268 = sshll.u32 %s259, 4
          %s269 = int_to_ptr.vmem [resolvable:$true] %s268
          %274 = dma.hbm_to_vmem [thread:$0]  %s267, 4096, %s269, %s256, 64, 64, 4
        $region51: #{layer_decoder_forward.19} parent=23 // pred_fallthru
          _
      $region24: #{layer_decoder_forward.19} parent=5 // pred_fallthru
        _
      %p275 = scmp.le.s32.totalorder 1, %s15
      %p276 = scmp.lt.s32.totalorder %s15, 5
      %p277 = pnand %p275, %p276
      %p278 = pneg %p277
      // Predicated region
      $region52: #{layer_decoder_forward.19} parent=5 // pred_check
        _
      $region53: #{layer_decoder_forward.19} parent=5 // pred_check_branch
        %280 = sbr.rel (%p277) target = $region55
      $region54: #{layer_decoder_forward.19} parent=5 // pred_region
        %s281 = ssub.s32 %s15, 1
        %s282 = sand.u32 %s49, 1
        %s283 = sand.u32 %s49, 1
        %s284 = smul.addr %s283, 32
        %s285 = scalar_lea.vmem [#allocation3], %s284
        // Predicated region
        $region56: #{layer_decoder_forward.19} parent=54 // pred_check
          %p286 = pneg %p62
        $region57: #{layer_decoder_forward.19} parent=54 // pred_check_branch
          %288 = sbr.rel (%p286) target = $region59
        $region58: #{layer_decoder_forward.19} parent=54 // pred_region
          _
        $region59: #{layer_decoder_forward.19} parent=54 // pred_fallthru
          _
        %s289 = sand.u32 %s77, 1
        %s290 = scalar_lea.sflag [#allocation5], %s289
        %s291 = sand.u32 %s77, 1
        %s292 = smul.addr %s291, 256
        %s293 = scalar_lea.vmem [#allocation4], %s292
        // Predicated region
        $region60: #{layer_decoder_forward.19} parent=54 // pred_check
          %p294 = pneg %p90
        $region61: #{layer_decoder_forward.19} parent=54 // pred_check_branch
          %296 = sbr.rel (%p294) target = $region63
        $region62: #{layer_decoder_forward.19} parent=54 // pred_region
          %298 = dma.done %s290, 4096
        $region63: #{layer_decoder_forward.19} parent=54 // pred_fallthru
          _
        // Predicated region
        $region64: #{layer_decoder_forward.19} parent=54 // pred_check
          %p299 = pneg %p116
        $region65: #{layer_decoder_forward.19} parent=54 // pred_check_branch
          %301 = sbr.rel (%p299) target = $region67
        $region66: #{layer_decoder_forward.19} parent=54 // pred_region
          %303 = dma.done [#allocation8], 16
        $region67: #{layer_decoder_forward.19} parent=54 // pred_fallthru
          _
        %s304 = sand.u32 %s49, 1
        %s305 = sand.u32 %s49, 1
        %s306 = smul.addr %s305, 32
        %s307 = scalar_lea.vmem [#allocation3], %s306
        %p308 = pneg %p62
        %p309 = pneg %p59
        %s310 = sand.u32 %s77, 1
        %s311 = scalar_lea.sflag [#allocation5], %s310
        %s312 = sand.u32 %s77, 1
        %s313 = smul.addr %s312, 256
        %s314 = scalar_lea.vmem [#allocation4], %s313
        %p315 = pneg %p90
        %p316 = pneg %p87
        %p317 = pneg %p116
        %p318 = pneg %p113
        %s319 = smul.u32 2, %s25
        %p320 = scmp.lt.s32.totalorder %s319, 1
        %s321 = scalar_select %p320, %s319, 1
        %p322 = scmp.lt.s32.totalorder %s26, 0
        %s323 = scalar_select %p322, %s26, 0
        %s324 = sadd.s32 %s323, %s321
        %s325 = smul.addr %s324, 8
        %s326 = scalar_lea.vmem %s3, %s325
        %p327 = pneg %p144
        %p328 = pneg %p141
        %p329 = pneg %p172
        %p330 = pneg %p169
        %s331 = smul.u32 2, %s25
        %s332 = smul.u32 4, %s27
        %s333 = smul.u32 64, %s27
        %s334 = smul.u32 2, %s25
        %p335 = scmp.lt.s32.totalorder %s334, 1
        %s336 = scalar_select %p335, %s334, 1
        %p337 = scmp.lt.s32.totalorder %s26, 0
        %s338 = scalar_select %p337, %s26, 0
        %s339 = sadd.s32 %s338, %s336
        %s340 = smul.addr %s339, 8
        %s341 = scalar_lea.vmem %s3, %s340
        %s342 = smul.u32 2, %s25
        %s343 = smul.u32 2, %s25
        %p344 = scmp.eq.s32.totalorder %s27, 0
        // Predicated region
        $region68: #{layer_decoder_forward.19} parent=54 // pred_check
          %p345 = pneg %p344
        $region69: #{layer_decoder_forward.19} parent=54 // pred_check_branch
          %347 = sbr.rel (%p345) target = $region71
        $region70: #{layer_decoder_forward.19} parent=54 // pred_region
          %348 = vst [vmem:[#allocation2] sm:$0xff] 0.0
          %349 = vst [vmem:[#allocation2 + $0x8] sm:$0xff] 0.0
        $region71: #{layer_decoder_forward.19} parent=54 // pred_fallthru
          _
        %v350 = vld [vmem:[#allocation2] sm:$0xff]
        %v351 = vld [vmem:[#allocation2 + $0x8] sm:$0xff]
        %v352 = vld [vmem:[%s285] sm:$0xff]
        %v353 = vld [vmem:[%s285 + $0x8] sm:$0xff]
        %v354 = vld [vmem:[%s285 + $0x10] sm:$0xff]
        %v355 = vld [vmem:[%s285 + $0x18] sm:$0xff]
        %v356 = vld [vmem:[%s293] sm:$0xf]
        %v357 = vld [vmem:[%s293 + $0x4] sm:$0xf]
        %v358 = vld [vmem:[%s293 + $0x8] sm:$0xf]
        %v359 = vld [vmem:[%s293 + $0xc] sm:$0xf]
        %v360 = vld [vmem:[%s293 + $0x10] sm:$0xf]
        %v361 = vld [vmem:[%s293 + $0x14] sm:$0xf]
        %v362 = vld [vmem:[%s293 + $0x18] sm:$0xf]
        %v363 = vld [vmem:[%s293 + $0x1c] sm:$0xf]
        %v364 = vld [vmem:[%s293 + $0x20] sm:$0xf]
        %v365 = vld [vmem:[%s293 + $0x24] sm:$0xf]
        %v366 = vld [vmem:[%s293 + $0x28] sm:$0xf]
        %v367 = vld [vmem:[%s293 + $0x2c] sm:$0xf]
        %v368 = vld [vmem:[%s293 + $0x30] sm:$0xf]
        %v369 = vld [vmem:[%s293 + $0x34] sm:$0xf]
        %v370 = vld [vmem:[%s293 + $0x38] sm:$0xf]
        %v371 = vld [vmem:[%s293 + $0x3c] sm:$0xf]
        %v372 = vld [vmem:[%s293 + $0x40] sm:$0xf]
        %v373 = vld [vmem:[%s293 + $0x44] sm:$0xf]
        %v374 = vld [vmem:[%s293 + $0x48] sm:$0xf]
        %v375 = vld [vmem:[%s293 + $0x4c] sm:$0xf]
        %v376 = vld [vmem:[%s293 + $0x50] sm:$0xf]
        %v377 = vld [vmem:[%s293 + $0x54] sm:$0xf]
        %v378 = vld [vmem:[%s293 + $0x58] sm:$0xf]
        %v379 = vld [vmem:[%s293 + $0x5c] sm:$0xf]
        %v380 = vld [vmem:[%s293 + $0x60] sm:$0xf]
        %v381 = vld [vmem:[%s293 + $0x64] sm:$0xf]
        %v382 = vld [vmem:[%s293 + $0x68] sm:$0xf]
        %v383 = vld [vmem:[%s293 + $0x6c] sm:$0xf]
        %v384 = vld [vmem:[%s293 + $0x70] sm:$0xf]
        %v385 = vld [vmem:[%s293 + $0x74] sm:$0xf]
        %v386 = vld [vmem:[%s293 + $0x78] sm:$0xf]
        %v387 = vld [vmem:[%s293 + $0x7c] sm:$0xf]
        %v388 = vld [vmem:[%s293 + $0x80] sm:$0xf]
        %v389 = vld [vmem:[%s293 + $0x84] sm:$0xf]
        %v390 = vld [vmem:[%s293 + $0x88] sm:$0xf]
        %v391 = vld [vmem:[%s293 + $0x8c] sm:$0xf]
        %v392 = vld [vmem:[%s293 + $0x90] sm:$0xf]
        %v393 = vld [vmem:[%s293 + $0x94] sm:$0xf]
        %v394 = vld [vmem:[%s293 + $0x98] sm:$0xf]
        %v395 = vld [vmem:[%s293 + $0x9c] sm:$0xf]
        %v396 = vld [vmem:[%s293 + $0xa0] sm:$0xf]
        %v397 = vld [vmem:[%s293 + $0xa4] sm:$0xf]
        %v398 = vld [vmem:[%s293 + $0xa8] sm:$0xf]
        %v399 = vld [vmem:[%s293 + $0xac] sm:$0xf]
        %v400 = vld [vmem:[%s293 + $0xb0] sm:$0xf]
        %v401 = vld [vmem:[%s293 + $0xb4] sm:$0xf]
        %v402 = vld [vmem:[%s293 + $0xb8] sm:$0xf]
        %v403 = vld [vmem:[%s293 + $0xbc] sm:$0xf]
        %v404 = vld [vmem:[%s293 + $0xc0] sm:$0xf]
        %v405 = vld [vmem:[%s293 + $0xc4] sm:$0xf]
        %v406 = vld [vmem:[%s293 + $0xc8] sm:$0xf]
        %v407 = vld [vmem:[%s293 + $0xcc] sm:$0xf]
        %v408 = vld [vmem:[%s293 + $0xd0] sm:$0xf]
        %v409 = vld [vmem:[%s293 + $0xd4] sm:$0xf]
        %v410 = vld [vmem:[%s293 + $0xd8] sm:$0xf]
        %v411 = vld [vmem:[%s293 + $0xdc] sm:$0xf]
        %v412 = vld [vmem:[%s293 + $0xe0] sm:$0xf]
        %v413 = vld [vmem:[%s293 + $0xe4] sm:$0xf]
        %v414 = vld [vmem:[%s293 + $0xe8] sm:$0xf]
        %v415 = vld [vmem:[%s293 + $0xec] sm:$0xf]
        %v416 = vld [vmem:[%s293 + $0xf0] sm:$0xf]
        %v417 = vld [vmem:[%s293 + $0xf4] sm:$0xf]
        %v418 = vld [vmem:[%s293 + $0xf8] sm:$0xf]
        %v419 = vld [vmem:[%s293 + $0xfc] sm:$0xf]
        %v424 = vunpack.c.l.b16 %v352
        %v425 = vunpack.c.h.b16 %v352
        %v426 = vunpack.c.l.b16 %v353
        %v427 = vunpack.c.h.b16 %v353
        %v428 = vunpack.c.l.b16 %v354
        %v429 = vunpack.c.h.b16 %v354
        %v430 = vunpack.c.l.b16 %v355
        %v431 = vunpack.c.h.b16 %v355
        %v432 = vpack.c.b16 %v428, %v424
        %v433 = vpack.c.b16 %v429, %v425
        %v434 = vpack.c.b16 %v430, %v426
        %v435 = vpack.c.b16 %v431, %v427
        %v504 = vunpack.c.l.b16 %v356
        %v505 = vunpack.c.l.b16 %v357
        %v506 = vunpack.c.l.b16 %v358
        %v507 = vunpack.c.l.b16 %v359
        %v508 = vunpack.c.l.b16 %v360
        %v509 = vunpack.c.l.b16 %v361
        %v510 = vunpack.c.l.b16 %v362
        %v511 = vunpack.c.l.b16 %v363
        %v512 = vunpack.c.l.b16 %v364
        %v513 = vunpack.c.l.b16 %v365
        %v514 = vunpack.c.l.b16 %v366
        %v515 = vunpack.c.l.b16 %v367
        %v516 = vunpack.c.l.b16 %v368
        %v517 = vunpack.c.l.b16 %v369
        %v518 = vunpack.c.l.b16 %v370
        %v519 = vunpack.c.l.b16 %v371
        %v520 = vunpack.c.l.b16 %v372
        %v521 = vunpack.c.l.b16 %v373
        %v522 = vunpack.c.l.b16 %v374
        %v523 = vunpack.c.l.b16 %v375
        %v524 = vunpack.c.l.b16 %v376
        %v525 = vunpack.c.l.b16 %v377
        %v526 = vunpack.c.l.b16 %v378
        %v527 = vunpack.c.l.b16 %v379
        %v528 = vunpack.c.l.b16 %v380
        %v529 = vunpack.c.l.b16 %v381
        %v530 = vunpack.c.l.b16 %v382
        %v531 = vunpack.c.l.b16 %v383
        %v532 = vunpack.c.l.b16 %v384
        %v533 = vunpack.c.l.b16 %v385
        %v534 = vunpack.c.l.b16 %v386
        %v535 = vunpack.c.l.b16 %v387
        %v536 = vunpack.c.l.b16 %v388
        %v537 = vunpack.c.l.b16 %v389
        %v538 = vunpack.c.l.b16 %v390
        %v539 = vunpack.c.l.b16 %v391
        %v540 = vunpack.c.l.b16 %v392
        %v541 = vunpack.c.l.b16 %v393
        %v542 = vunpack.c.l.b16 %v394
        %v543 = vunpack.c.l.b16 %v395
        %v544 = vunpack.c.l.b16 %v396
        %v545 = vunpack.c.l.b16 %v397
        %v546 = vunpack.c.l.b16 %v398
        %v547 = vunpack.c.l.b16 %v399
        %v548 = vunpack.c.l.b16 %v400
        %v549 = vunpack.c.l.b16 %v401
        %v550 = vunpack.c.l.b16 %v402
        %v551 = vunpack.c.l.b16 %v403
        %v552 = vunpack.c.l.b16 %v404
        %v553 = vunpack.c.l.b16 %v405
        %v554 = vunpack.c.l.b16 %v406
        %v555 = vunpack.c.l.b16 %v407
        %v556 = vunpack.c.l.b16 %v408
        %v557 = vunpack.c.l.b16 %v409
        %v558 = vunpack.c.l.b16 %v410
        %v559 = vunpack.c.l.b16 %v411
        %v560 = vunpack.c.l.b16 %v412
        %v561 = vunpack.c.l.b16 %v413
        %v562 = vunpack.c.l.b16 %v414
        %v563 = vunpack.c.l.b16 %v415
        %v564 = vunpack.c.l.b16 %v416
        %v565 = vunpack.c.l.b16 %v417
        %v566 = vunpack.c.l.b16 %v418
        %v567 = vunpack.c.l.b16 %v419
        %v568 = vpack.c.b16 %v505, %v504
        %v569 = vpack.c.b16 %v507, %v506
        %v570 = vpack.c.b16 %v509, %v508
        %v571 = vpack.c.b16 %v511, %v510
        %v572 = vpack.c.b16 %v513, %v512
        %v573 = vpack.c.b16 %v515, %v514
        %v574 = vpack.c.b16 %v517, %v516
        %v575 = vpack.c.b16 %v519, %v518
        %v576 = vpack.c.b16 %v521, %v520
        %v577 = vpack.c.b16 %v523, %v522
        %v578 = vpack.c.b16 %v525, %v524
        %v579 = vpack.c.b16 %v527, %v526
        %v580 = vpack.c.b16 %v529, %v528
        %v581 = vpack.c.b16 %v531, %v530
        %v582 = vpack.c.b16 %v533, %v532
        %v583 = vpack.c.b16 %v535, %v534
        %v584 = vpack.c.b16 %v537, %v536
        %v585 = vpack.c.b16 %v539, %v538
        %v586 = vpack.c.b16 %v541, %v540
        %v587 = vpack.c.b16 %v543, %v542
        %v588 = vpack.c.b16 %v545, %v544
        %v589 = vpack.c.b16 %v547, %v546
        %v590 = vpack.c.b16 %v549, %v548
        %v591 = vpack.c.b16 %v551, %v550
        %v592 = vpack.c.b16 %v553, %v552
        %v593 = vpack.c.b16 %v555, %v554
        %v594 = vpack.c.b16 %v557, %v556
        %v595 = vpack.c.b16 %v559, %v558
        %v596 = vpack.c.b16 %v561, %v560
        %v597 = vpack.c.b16 %v563, %v562
        %v598 = vpack.c.b16 %v565, %v564
        %v599 = vpack.c.b16 %v567, %v566
        %632 = vmatpush.bf16.msra.mxu0 %v575
        %633 = vmatpush.bf16.msra.mxu0 %v574
        %634 = vmatpush.bf16.msra.mxu0 %v573
        %635 = vmatpush.bf16.msra.mxu0 %v572
        %636 = vmatpush.bf16.msra.mxu0 %v571
        %637 = vmatpush.bf16.msra.mxu0 %v570
        %638 = vmatpush.bf16.msra.mxu0 %v569
        %639 = vmatpush.bf16.msra.mxu0 %v568
        %640 = vmatmul.bf16.gmra.mxu0 %v432
        %v641 = vpop.f32.mrf.mxu0
        %v642 = vadd.f32 0.0, %v641
        %v643 = vpop.f32.mrf.mxu0
        %v644 = vadd.f32 0.0, %v643
        %645 = vdwg.mxu0
        %646 = vmatpush.bf16.msra.mxu0 %v583
        %647 = vmatpush.bf16.msra.mxu0 %v582
        %648 = vmatpush.bf16.msra.mxu0 %v581
        %649 = vmatpush.bf16.msra.mxu0 %v580
        %650 = vmatpush.bf16.msra.mxu0 %v579
        %651 = vmatpush.bf16.msra.mxu0 %v578
        %652 = vmatpush.bf16.msra.mxu0 %v577
        %653 = vmatpush.bf16.msra.mxu0 %v576
        %654 = vmatmul.bf16.gmra.mxu0 %v433
        %v655 = vpop.f32.mrf.mxu0
        %v656 = vadd.f32 %v642, %v655
        %v657 = vpop.f32.mrf.mxu0
        %v658 = vadd.f32 %v644, %v657
        %659 = vdwg.mxu0
        %660 = vmatpush.bf16.msra.mxu0 %v591
        %661 = vmatpush.bf16.msra.mxu0 %v590
        %662 = vmatpush.bf16.msra.mxu0 %v589
        %663 = vmatpush.bf16.msra.mxu0 %v588
        %664 = vmatpush.bf16.msra.mxu0 %v587
        %665 = vmatpush.bf16.msra.mxu0 %v586
        %666 = vmatpush.bf16.msra.mxu0 %v585
        %667 = vmatpush.bf16.msra.mxu0 %v584
        %668 = vmatmul.bf16.gmra.mxu0 %v434
        %v669 = vpop.f32.mrf.mxu0
        %v670 = vadd.f32 %v656, %v669
        %v671 = vpop.f32.mrf.mxu0
        %v672 = vadd.f32 %v658, %v671
        %673 = vdwg.mxu0
        %674 = vmatpush.bf16.msra.mxu0 %v599
        %675 = vmatpush.bf16.msra.mxu0 %v598
        %676 = vmatpush.bf16.msra.mxu0 %v597
        %677 = vmatpush.bf16.msra.mxu0 %v596
        %678 = vmatpush.bf16.msra.mxu0 %v595
        %679 = vmatpush.bf16.msra.mxu0 %v594
        %680 = vmatpush.bf16.msra.mxu0 %v593
        %681 = vmatpush.bf16.msra.mxu0 %v592
        %682 = vmatmul.bf16.gmra.mxu0 %v435
        %v683 = vpop.f32.mrf.mxu0
        %v684 = vadd.f32 %v670, %v683
        %v685 = vpop.f32.mrf.mxu0
        %v686 = vadd.f32 %v672, %v685
        %687 = vdwg.mxu0
        %v688 = vadd.f32 %v350, %v684
        %v689 = vadd.f32 %v351, %v686
        %690 = vst [vmem:[#allocation2] sm:$0xff] %v688
        %691 = vst [vmem:[#allocation2 + $0x8] sm:$0xff] %v689
        %p692 = scmp.eq.s32.totalorder %s27, 3
        // Predicated region
        $region72: #{layer_decoder_forward.19} parent=54 // pred_check
          %p693 = pneg %p692
        $region73: #{layer_decoder_forward.19} parent=54 // pred_check_branch
          %695 = sbr.rel (%p693) target = $region75
        $region74: #{layer_decoder_forward.19} parent=54 // pred_region
          %v696 = vld [vmem:[#allocation2] sm:$0xff]
          %v697 = vld [vmem:[#allocation2 + $0x8] sm:$0xff]
          %v698 = vld [vmem:[#allocation7] sm:$0x1]
          %v700 = vperm.slane %v698, 0
          %v702 = vadd.f32 %v696, %v700
          %v703 = vadd.f32 %v697, %v700
          %v704 = vld [vmem:[%s341] sm:$0xff]
          %v705 = vld [vmem:[%s341 + $0x8] sm:$0xff]
          %v706 = vadd.f32 %v702, %v704
          %v707 = vadd.f32 %v703, %v705
          %708 = vst [vmem:[#allocation9] sm:$0xff] %v706
          %709 = vst [vmem:[#allocation9 + $0x8] sm:$0xff] %v707
        $region75: #{layer_decoder_forward.19} parent=54 // pred_fallthru
          _
        // Predicated region
        $region76: #{layer_decoder_forward.19} parent=54 // pred_check
          %p710 = pneg %p169
        $region77: #{layer_decoder_forward.19} parent=54 // pred_check_branch
          %712 = sbr.rel (%p710) target = $region79
        $region78: #{layer_decoder_forward.19} parent=54 // pred_region
          %s713 = smul.u32 2, %s25
          %715 = vsyncadd [#allocation6], 0
          %s716 = sadd.s32 %s26, %s713
          %s717 = smul.addr %s716, 8
          %s718 = scalar_lea.hbm %s4, %s717
          %s719 = sshll.u32 [#allocation9], 4
          %s720 = int_to_ptr.vmem [resolvable:$true] %s719
          %s721 = sshll.u32 %s718, 4
          %s722 = int_to_ptr.hbm [resolvable:$true] %s721
          %727 = dma.vmem_to_hbm [thread:$0]  %s720, 256, %s722, [#allocation6], 128, 128, 8
        $region79: #{layer_decoder_forward.19} parent=54 // pred_fallthru
          _
        // Predicated region
        $region80: #{layer_decoder_forward.19} parent=54 // pred_check
          %p728 = pneg %p169
        $region81: #{layer_decoder_forward.19} parent=54 // pred_check_branch
          %730 = sbr.rel (%p728) target = $region83
        $region82: #{layer_decoder_forward.19} parent=54 // pred_region
          %732 = dma.done [#allocation6], 256
        $region83: #{layer_decoder_forward.19} parent=54 // pred_fallthru
          _
      $region55: #{layer_decoder_forward.19} parent=5 // pred_fallthru
        _
      %p733 = scmp.le.s32.totalorder 2, %s15
      // Predicated region
      $region84: #{layer_decoder_forward.19} parent=5 // pred_check
        %p734 = pneg %p733
      $region85: #{layer_decoder_forward.19} parent=5 // pred_check_branch
        %736 = sbr.rel (%p734) target = $region87
      $region86: #{layer_decoder_forward.19} parent=5 // pred_region
        %s737 = ssub.s32 %s15, 2
      $region87: #{layer_decoder_forward.19} parent=5 // pred_fallthru
        _
    $region6: #{layer_decoder_forward.19} parent=1 // loop_footer
      %s19 = sadd.s32 1, %s15
    $region7: #{layer_decoder_forward.19} parent=1 // loop_footer_branch
      %14 = sbr.rel target = $region3
    $region8: #{layer_decoder_forward.19} parent=1 // loop_exit
      _
    %738 = vsyncpa [#allocation5], 1
    %s739 = scalar_lea.sflag [#allocation5], 1
    %740 = vsyncpa %s739, 1
    %741 = vsyncpa [#allocation8], 1
    %742 = vsyncpa [#allocation6], 1
    %s743 = scalar_lea.sflag [#allocation6], 1
    %744 = vsyncpa %s743, 1

</llo_original>
